<compile_context>
chip_gen: v6e
topology: v6e:2x2x1
jax: 0.10.0
libtpu: 0.0.40
codegen_flags: <defaults>
</compile_context>

<pallas_src>
import functools

import jax
import jax.numpy as jnp
from jax import lax
from jax.experimental import pallas as pl
from jax.experimental.pallas import tpu as pltpu

# ----------------------------- model configuration ---------------------------
BATCH_SIZE = 2
N_GRAPHS = 4
NODES_PER_GRAPH = 4
NUM_NODE_FEATURES = 4
CONV_HIDDEN = [8, 8]
GAT_HEADS = 2

NUM_GRAPHS_TOTAL = BATCH_SIZE * N_GRAPHS            # graphs per siamese branch
NUM_NODES = NUM_GRAPHS_TOTAL * NODES_PER_GRAPH      # nodes per siamese branch


# ----------------------------- fused Pallas kernel ----------------------------
def _fused_forward_kernel(x_ref, maskb_ref, poolT_ref, *rest, cfgs):
    """Both siamese branches: all GAT layers + ReLU + head-mean + mean-pool.

    Single invocation (grid=()); node rows of both branches are stacked, the
    additive mask bias is block-diagonal so cross-branch attention is zeroed,
    and the pooling matrix is block-diagonal so each graph pools its own nodes.
    Everything (activations, mask, params) is VMEM/register resident.
    """
    param_refs = rest[:-1]
    o_ref = rest[-1]

    x = x_ref[...]                        # (2N, C_in)  stacked node features
    maskb = maskb_ref[...]                # (2N, 2N)    0 on edges j->i, -1e30 otherwise

    for li, (_, _, heads) in enumerate(cfgs):
        w_ref, asrcT_ref, adst_ref, bias_ref, hmask_ref = param_refs[5 * li:5 * li + 5]

        xp = jnp.dot(x, w_ref[...], preferred_element_type=jnp.float32)         # (2N, H*F)
        a_dst = jnp.dot(xp, adst_ref[...], preferred_element_type=jnp.float32)  # (2N, H)
        # a_srcT[h, j] = att_src[h] . xp_head_h[j]   (NT contraction -> no transpose)
        a_srcT = lax.dot_general(asrcT_ref[...], xp,
                                 (((1,), (1,)), ((), ())),
                                 preferred_element_type=jnp.float32)            # (H, 2N)
        hmask = hmask_ref[...]                                                  # (H, H*F)

        out = jnp.zeros_like(xp)                                                # (2N, H*F)
        for h in range(heads):                    # heads is small & static
            e = a_dst[:, h:h + 1] + a_srcT[h:h + 1, :]   # e[i,j] = a_dst[i] + a_src[j]
            e = jnp.maximum(e, 0.2 * e)                  # LeakyReLU(0.2)
            e = e + maskb                                # additive non-edge / cross-branch mask
            e = e - jnp.max(e, axis=1, keepdims=True)    # softmax over incoming edges j
            p = jnp.exp(e)                               # masked entries underflow to 0
            alpha = p / jnp.sum(p, axis=1, keepdims=True)
            vals = xp * hmask[h:h + 1, :]                # head-h columns, zeros elsewhere
            out = out + jnp.dot(alpha, vals, preferred_element_type=jnp.float32)

        # concat(heads) is already realized column-wise in `out`; + bias; ReLU
        x = jnp.maximum(out + bias_ref[...], 0.0)

    # readout: mean over features then global_mean_pool, fused as one TN matmul:
    #   tmp[f, g] = sum_n x[n, f] * pool[g, n];  o[0, g] = mean_f tmp[f, g]
    tmp = lax.dot_general(x, poolT_ref[...], (((0,), (0,)), ((), ())),
                          preferred_element_type=jnp.float32)                   # (F_last, 2G)
    o_ref[...] = jnp.mean(tmp, axis=0, keepdims=True)                           # (1, 2G)


def fused_forward(x_all, maskb_all, poolT_all, params, cfgs):
    """x_all: (2N, C_in); maskb_all: (2N, 2N); poolT_all: (2N, 2G)."""
    flat_params = [arr for layer in params for arr in layer]
    n_inputs = 3 + len(flat_params)
    g2 = poolT_all.shape[1]

    kern = functools.partial(_fused_forward_kernel, cfgs=tuple(cfgs))
    return pl.pallas_call(
        kern,
        out_shape=jax.ShapeDtypeStruct((1, g2), jnp.float32),
        in_specs=[pl.BlockSpec(memory_space=pltpu.MemorySpace.VMEM)
                  for _ in range(n_inputs)],
        out_specs=pl.BlockSpec(memory_space=pltpu.MemorySpace.VMEM),
    )(x_all, maskb_all, poolT_all, *flat_params)


# ----------------------------- parameters & graph glue ------------------------
def build_layer_cfgs():
    cfgs = []
    in_c = NUM_NODE_FEATURES
    for i, out_c in enumerate(CONV_HIDDEN):
        cfgs.append((in_c, out_c, GAT_HEADS))
        in_c = out_c * GAT_HEADS
        if i == len(CONV_HIDDEN) - 1:
            cfgs.append((in_c, 1, GAT_HEADS))     # final GATConv(out*heads, 1, heads)
    return cfgs


def init_params(key, cfgs):
    params = []
    for (fin, fout, heads) in cfgs:
        key, k1, k2, k3 = jax.random.split(key, 4)
        scale = 1.0 / jnp.sqrt(jnp.float32(fin))
        w = jax.random.normal(k1, (fin, heads * fout), jnp.float32) * scale
        att_src = jax.random.normal(k2, (heads, fout), jnp.float32) * 0.1
        att_dst = jax.random.normal(k3, (heads, fout), jnp.float32) * 0.1
        # block-diagonal attention matrices so per-head logits become matmuls
        a_srcT = jnp.zeros((heads, heads * fout), jnp.float32)
        a_dst = jnp.zeros((heads * fout, heads), jnp.float32)
        hmask = jnp.zeros((heads, heads * fout), jnp.float32)
        for h in range(heads):
            a_srcT = a_srcT.at[h, h * fout:(h + 1) * fout].set(att_src[h])
            a_dst = a_dst.at[h * fout:(h + 1) * fout, h].set(att_dst[h])
            hmask = hmask.at[h, h * fout:(h + 1) * fout].set(1.0)
        bias = jnp.zeros((1, heads * fout), jnp.float32)
        params.append((w, a_srcT, a_dst, bias, hmask))
    return params


def make_edge_index():
    # bidirectional ring inside each small graph
    src, dst = [], []
    for g in range(NUM_GRAPHS_TOTAL):
        base = g * NODES_PER_GRAPH
        for i in range(NODES_PER_GRAPH):
            a = base + i
            b = base + (i + 1) % NODES_PER_GRAPH
            src += [a, b]
            dst += [b, a]
    return jnp.array([src, dst], dtype=jnp.int32)


def build_adj(edge_index, n):
    adj = jnp.zeros((n, n), jnp.float32)
    adj = adj.at[edge_index[1], edge_index[0]].set(1.0)     # edge j->i stored at [i, j]
    adj = jnp.maximum(adj, jnp.eye(n, dtype=jnp.float32))   # add self loops
    return adj


def build_mask_bias(adj):
    # additive softmax mask: 0 where edge exists, -1e30 where it does not
    return jnp.where(adj > 0.0, 0.0, -1e30).astype(jnp.float32)


def build_pool(batch, num_graphs):
    onehot = (batch[None, :] == jnp.arange(num_graphs)[:, None]).astype(jnp.float32)
    counts = jnp.sum(onehot, axis=1, keepdims=True)
    return onehot / jnp.maximum(counts, 1.0)


def build_pair_inputs(x1, maskb1, pool1, x2, maskb2, pool2):
    """Stack the two branches: block-diagonal mask & pooling (no cross-branch edges)."""
    n = x1.shape[0]
    g = pool1.shape[0]
    x_all = jnp.concatenate([x1, x2], axis=0)                       # (2N, C_in)
    neg = jnp.full((n, n), -1e30, jnp.float32)
    maskb_all = jnp.block([[maskb1, neg], [neg, maskb2]])           # (2N, 2N)
    zg = jnp.zeros((n, g), jnp.float32)
    poolT_all = jnp.block([[pool1.T, zg], [zg, pool2.T]])           # (2N, 2G)
    return x_all, maskb_all, poolT_all


# ----------------------------- forward & Spearman ------------------------------
def spearman_pvalue(out1, out2):
    # scipy.stats.spearmanr(out1, out2): rows = observations, columns = variables.
    data = jnp.concatenate([out1, out2], axis=1)             # (n_graphs, 2*batch_size)
    n = data.shape[0]
    ranks = (jnp.argsort(jnp.argsort(data, axis=0), axis=0) + 1).astype(jnp.float32)
    # TODO(synk): scipy uses average ranks for ties; tie handling omitted (float inputs).
    rho = jnp.corrcoef(ranks, rowvar=False)
    dof = n - 2
    rho_c = jnp.clip(rho, -1.0 + 1e-7, 1.0 - 1e-7)
    t2 = rho_c * rho_c * dof / (1.0 - rho_c * rho_c)
    xbeta = dof / (dof + t2)
    p = jax.scipy.special.betainc(dof / 2.0, 0.5, xbeta)     # 2 * StudentT.sf(|t|, dof)
    p = jnp.where(jnp.abs(rho) >= 1.0 - 1e-7, 0.0, p)
    return p


def forward(x1, maskb1, pool1, x2, maskb2, pool2, params, cfgs):
    g = pool1.shape[0]
    x_all, maskb_all, poolT_all = build_pair_inputs(x1, maskb1, pool1, x2, maskb2, pool2)
    res = fused_forward(x_all, maskb_all, poolT_all, params, cfgs)   # (1, 2G)
    out1 = res[0, :g].reshape(BATCH_SIZE, N_GRAPHS).T                # (n_graphs, batch)
    out2 = res[0, g:].reshape(BATCH_SIZE, N_GRAPHS).T
    return spearman_pvalue(out1, out2)


# ----------------------------- main --------------------------------------------
if __name__ == "__main__":
    key = jax.random.PRNGKey(0)
    kp, kx1, kx2 = jax.random.split(key, 3)

    cfgs = build_layer_cfgs()
    params = init_params(kp, cfgs)

    x1 = jax.random.normal(kx1, (NUM_NODES, NUM_NODE_FEATURES), jnp.float32)
    x2 = jax.random.normal(kx2, (NUM_NODES, NUM_NODE_FEATURES), jnp.float32)
    edge_index = make_edge_index()
    batch = jnp.arange(NUM_NODES, dtype=jnp.int32) // NODES_PER_GRAPH
    adj = build_adj(edge_index, NUM_NODES)
    maskb = build_mask_bias(adj)
    pool = build_pool(batch, NUM_GRAPHS_TOTAL)

    @jax.jit
    def run(x1_, x2_, maskb_, pool_, params_):
        return forward(x1_, maskb_, pool_, x2_, maskb_, pool_, params_, cfgs)

    p_value = run(x1, x2, maskb, pool, params)
    p_value = jax.block_until_ready(p_value)

    assert p_value.shape == (2 * BATCH_SIZE, 2 * BATCH_SIZE)
    assert bool(jnp.all(jnp.isfinite(p_value)))
    print("KERNEL_OK")
</pallas_src>

<mosaic_0001>
module attributes {stable_mosaic.version = 11 : i64} {
  func.func @_fused_forward_kernel(%arg0: memref<64x4xf32, #tpu.memory_space<vmem>>, %arg1: memref<64x64xf32, #tpu.memory_space<vmem>>, %arg2: memref<64x16xf32, #tpu.memory_space<vmem>>, %arg3: memref<4x16xf32, #tpu.memory_space<vmem>>, %arg4: memref<2x16xf32, #tpu.memory_space<vmem>>, %arg5: memref<16x2xf32, #tpu.memory_space<vmem>>, %arg6: memref<1x16xf32, #tpu.memory_space<vmem>>, %arg7: memref<2x16xf32, #tpu.memory_space<vmem>>, %arg8: memref<16x16xf32, #tpu.memory_space<vmem>>, %arg9: memref<2x16xf32, #tpu.memory_space<vmem>>, %arg10: memref<16x2xf32, #tpu.memory_space<vmem>>, %arg11: memref<1x16xf32, #tpu.memory_space<vmem>>, %arg12: memref<2x16xf32, #tpu.memory_space<vmem>>, %arg13: memref<16x2xf32, #tpu.memory_space<vmem>>, %arg14: memref<2x2xf32, #tpu.memory_space<vmem>>, %arg15: memref<2x2xf32, #tpu.memory_space<vmem>>, %arg16: memref<1x2xf32, #tpu.memory_space<vmem>>, %arg17: memref<2x2xf32, #tpu.memory_space<vmem>>, %arg18: memref<1x16xf32, #tpu.memory_space<vmem>>) attributes {dimension_semantics = [], scalar_prefetch = 0 : i64, scratch_operands = 0 : i64, tpu.core_type = #tpu.core_type<tc>} {
    %c0 = arith.constant 0 : index
    %c0_0 = arith.constant 0 : index
    %0 = vector.load %arg0[%c0, %c0_0] : memref<64x4xf32, #tpu.memory_space<vmem>>, vector<64x4xf32>
    %c0_1 = arith.constant 0 : index
    %c0_2 = arith.constant 0 : index
    %1 = vector.load %arg1[%c0_1, %c0_2] : memref<64x64xf32, #tpu.memory_space<vmem>>, vector<64x64xf32>
    %c0_3 = arith.constant 0 : index
    %c0_4 = arith.constant 0 : index
    %2 = vector.load %arg3[%c0_3, %c0_4] : memref<4x16xf32, #tpu.memory_space<vmem>>, vector<4x16xf32>
    %cst = arith.constant dense<0.000000e+00> : vector<64x16xf32>
    %3 = tpu.matmul %0, %2, %cst {dimension_numbers = #tpu.dot_dimension_numbers<[1], [0], [0], [1], [0, 0, 1, 1], [], []>} : vector<64x4xf32>, vector<4x16xf32>, vector<64x16xf32> -> vector<64x16xf32>
    %c0_5 = arith.constant 0 : index
    %c0_6 = arith.constant 0 : index
    %4 = vector.load %arg5[%c0_5, %c0_6] : memref<16x2xf32, #tpu.memory_space<vmem>>, vector<16x2xf32>
    %cst_7 = arith.constant dense<0.000000e+00> : vector<64x2xf32>
    %5 = tpu.matmul %3, %4, %cst_7 {dimension_numbers = #tpu.dot_dimension_numbers<[1], [0], [0], [1], [0, 0, 1, 1], [], []>} : vector<64x16xf32>, vector<16x2xf32>, vector<64x2xf32> -> vector<64x2xf32>
    %c0_8 = arith.constant 0 : index
    %c0_9 = arith.constant 0 : index
    %6 = vector.load %arg4[%c0_8, %c0_9] : memref<2x16xf32, #tpu.memory_space<vmem>>, vector<2x16xf32>
    %cst_10 = arith.constant dense<0.000000e+00> : vector<2x64xf32>
    %7 = tpu.matmul %6, %3, %cst_10 {dimension_numbers = #tpu.dot_dimension_numbers<[1], [1], [0], [0], [0, 0, 1, 0], [], []>} : vector<2x16xf32>, vector<64x16xf32>, vector<2x64xf32> -> vector<2x64xf32>
    %c0_11 = arith.constant 0 : index
    %c0_12 = arith.constant 0 : index
    %8 = vector.load %arg7[%c0_11, %c0_12] : memref<2x16xf32, #tpu.memory_space<vmem>>, vector<2x16xf32>
    %cst_13 = arith.constant 0.000000e+00 : f32
    %9 = vector.broadcast %cst_13 : f32 to vector<64x16xf32>
    %10 = vector.extract_strided_slice %5 {offsets = [0, 0], sizes = [64, 1], strides = [1, 1]} : vector<64x2xf32> to vector<64x1xf32>
    %11 = vector.extract_strided_slice %7 {offsets = [0, 0], sizes = [1, 64], strides = [1, 1]} : vector<2x64xf32> to vector<1x64xf32>
    %12 = vector.broadcast %10 : vector<64x1xf32> to vector<64x64xf32>
    %13 = vector.broadcast %11 : vector<1x64xf32> to vector<64x64xf32>
    %14 = arith.addf %12, %13 : vector<64x64xf32>
    %cst_14 = arith.constant 2.000000e-01 : f32
    %15 = vector.broadcast %cst_14 : f32 to vector<64x64xf32>
    %16 = arith.mulf %15, %14 : vector<64x64xf32>
    %17 = arith.maximumf %14, %16 : vector<64x64xf32>
    %18 = arith.addf %17, %1 : vector<64x64xf32>
    %cst_15 = arith.constant dense<0xFF800000> : vector<64xf32>
    %19 = vector.multi_reduction <maximumf>, %18, %cst_15 [1] : vector<64x64xf32> to vector<64xf32>
    %20 = vector.shape_cast %19 : vector<64xf32> to vector<64x1xf32>
    %21 = vector.broadcast %20 : vector<64x1xf32> to vector<64x64xf32>
    %22 = arith.subf %18, %21 : vector<64x64xf32>
    %23 = math.exp %22 : vector<64x64xf32>
    %cst_16 = arith.constant dense<0.000000e+00> : vector<64xf32>
    %24 = vector.multi_reduction <add>, %23, %cst_16 [1] : vector<64x64xf32> to vector<64xf32>
    %25 = vector.shape_cast %24 : vector<64xf32> to vector<64x1xf32>
    %26 = vector.broadcast %25 : vector<64x1xf32> to vector<64x64xf32>
    %27 = arith.divf %23, %26 : vector<64x64xf32>
    %28 = vector.extract_strided_slice %8 {offsets = [0, 0], sizes = [1, 16], strides = [1, 1]} : vector<2x16xf32> to vector<1x16xf32>
    %29 = vector.broadcast %28 : vector<1x16xf32> to vector<64x16xf32>
    %30 = arith.mulf %3, %29 : vector<64x16xf32>
    %cst_17 = arith.constant dense<0.000000e+00> : vector<64x16xf32>
    %31 = tpu.matmul %27, %30, %cst_17 {dimension_numbers = #tpu.dot_dimension_numbers<[1], [0], [0], [1], [0, 0, 1, 1], [], []>} : vector<64x64xf32>, vector<64x16xf32>, vector<64x16xf32> -> vector<64x16xf32>
    %32 = arith.addf %9, %31 : vector<64x16xf32>
    %33 = vector.extract_strided_slice %5 {offsets = [0, 1], sizes = [64, 1], strides = [1, 1]} : vector<64x2xf32> to vector<64x1xf32>
    %34 = vector.extract_strided_slice %7 {offsets = [1, 0], sizes = [1, 64], strides = [1, 1]} : vector<2x64xf32> to vector<1x64xf32>
    %35 = vector.broadcast %33 : vector<64x1xf32> to vector<64x64xf32>
    %36 = vector.broadcast %34 : vector<1x64xf32> to vector<64x64xf32>
    %37 = arith.addf %35, %36 : vector<64x64xf32>
    %cst_18 = arith.constant 2.000000e-01 : f32
    %38 = vector.broadcast %cst_18 : f32 to vector<64x64xf32>
    %39 = arith.mulf %38, %37 : vector<64x64xf32>
    %40 = arith.maximumf %37, %39 : vector<64x64xf32>
    %41 = arith.addf %40, %1 : vector<64x64xf32>
    %cst_19 = arith.constant dense<0xFF800000> : vector<64xf32>
    %42 = vector.multi_reduction <maximumf>, %41, %cst_19 [1] : vector<64x64xf32> to vector<64xf32>
    %43 = vector.shape_cast %42 : vector<64xf32> to vector<64x1xf32>
    %44 = vector.broadcast %43 : vector<64x1xf32> to vector<64x64xf32>
    %45 = arith.subf %41, %44 : vector<64x64xf32>
    %46 = math.exp %45 : vector<64x64xf32>
    %cst_20 = arith.constant dense<0.000000e+00> : vector<64xf32>
    %47 = vector.multi_reduction <add>, %46, %cst_20 [1] : vector<64x64xf32> to vector<64xf32>
    %48 = vector.shape_cast %47 : vector<64xf32> to vector<64x1xf32>
    %49 = vector.broadcast %48 : vector<64x1xf32> to vector<64x64xf32>
    %50 = arith.divf %46, %49 : vector<64x64xf32>
    %51 = vector.extract_strided_slice %8 {offsets = [1, 0], sizes = [1, 16], strides = [1, 1]} : vector<2x16xf32> to vector<1x16xf32>
    %52 = vector.broadcast %51 : vector<1x16xf32> to vector<64x16xf32>
    %53 = arith.mulf %3, %52 : vector<64x16xf32>
    %cst_21 = arith.constant dense<0.000000e+00> : vector<64x16xf32>
    %54 = tpu.matmul %50, %53, %cst_21 {dimension_numbers = #tpu.dot_dimension_numbers<[1], [0], [0], [1], [0, 0, 1, 1], [], []>} : vector<64x64xf32>, vector<64x16xf32>, vector<64x16xf32> -> vector<64x16xf32>
    %55 = arith.addf %32, %54 : vector<64x16xf32>
    %c0_22 = arith.constant 0 : index
    %c0_23 = arith.constant 0 : index
    %56 = vector.load %arg6[%c0_22, %c0_23] : memref<1x16xf32, #tpu.memory_space<vmem>>, vector<1x16xf32>
    %57 = vector.broadcast %56 : vector<1x16xf32> to vector<64x16xf32>
    %58 = arith.addf %55, %57 : vector<64x16xf32>
    %cst_24 = arith.constant 0.000000e+00 : f32
    %59 = vector.broadcast %cst_24 : f32 to vector<64x16xf32>
    %60 = arith.maximumf %58, %59 : vector<64x16xf32>
    %c0_25 = arith.constant 0 : index
    %c0_26 = arith.constant 0 : index
    %61 = vector.load %arg8[%c0_25, %c0_26] : memref<16x16xf32, #tpu.memory_space<vmem>>, vector<16x16xf32>
    %cst_27 = arith.constant dense<0.000000e+00> : vector<64x16xf32>
    %62 = tpu.matmul %60, %61, %cst_27 {dimension_numbers = #tpu.dot_dimension_numbers<[1], [0], [0], [1], [0, 0, 1, 1], [], []>} : vector<64x16xf32>, vector<16x16xf32>, vector<64x16xf32> -> vector<64x16xf32>
    %c0_28 = arith.constant 0 : index
    %c0_29 = arith.constant 0 : index
    %63 = vector.load %arg10[%c0_28, %c0_29] : memref<16x2xf32, #tpu.memory_space<vmem>>, vector<16x2xf32>
    %cst_30 = arith.constant dense<0.000000e+00> : vector<64x2xf32>
    %64 = tpu.matmul %62, %63, %cst_30 {dimension_numbers = #tpu.dot_dimension_numbers<[1], [0], [0], [1], [0, 0, 1, 1], [], []>} : vector<64x16xf32>, vector<16x2xf32>, vector<64x2xf32> -> vector<64x2xf32>
    %c0_31 = arith.constant 0 : index
    %c0_32 = arith.constant 0 : index
    %65 = vector.load %arg9[%c0_31, %c0_32] : memref<2x16xf32, #tpu.memory_space<vmem>>, vector<2x16xf32>
    %cst_33 = arith.constant dense<0.000000e+00> : vector<2x64xf32>
    %66 = tpu.matmul %65, %62, %cst_33 {dimension_numbers = #tpu.dot_dimension_numbers<[1], [1], [0], [0], [0, 0, 1, 0], [], []>} : vector<2x16xf32>, vector<64x16xf32>, vector<2x64xf32> -> vector<2x64xf32>
    %c0_34 = arith.constant 0 : index
    %c0_35 = arith.constant 0 : index
    %67 = vector.load %arg12[%c0_34, %c0_35] : memref<2x16xf32, #tpu.memory_space<vmem>>, vector<2x16xf32>
    %cst_36 = arith.constant 0.000000e+00 : f32
    %68 = vector.broadcast %cst_36 : f32 to vector<64x16xf32>
    %69 = vector.extract_strided_slice %64 {offsets = [0, 0], sizes = [64, 1], strides = [1, 1]} : vector<64x2xf32> to vector<64x1xf32>
    %70 = vector.extract_strided_slice %66 {offsets = [0, 0], sizes = [1, 64], strides = [1, 1]} : vector<2x64xf32> to vector<1x64xf32>
    %71 = vector.broadcast %69 : vector<64x1xf32> to vector<64x64xf32>
    %72 = vector.broadcast %70 : vector<1x64xf32> to vector<64x64xf32>
    %73 = arith.addf %71, %72 : vector<64x64xf32>
    %cst_37 = arith.constant 2.000000e-01 : f32
    %74 = vector.broadcast %cst_37 : f32 to vector<64x64xf32>
    %75 = arith.mulf %74, %73 : vector<64x64xf32>
    %76 = arith.maximumf %73, %75 : vector<64x64xf32>
    %77 = arith.addf %76, %1 : vector<64x64xf32>
    %cst_38 = arith.constant dense<0xFF800000> : vector<64xf32>
    %78 = vector.multi_reduction <maximumf>, %77, %cst_38 [1] : vector<64x64xf32> to vector<64xf32>
    %79 = vector.shape_cast %78 : vector<64xf32> to vector<64x1xf32>
    %80 = vector.broadcast %79 : vector<64x1xf32> to vector<64x64xf32>
    %81 = arith.subf %77, %80 : vector<64x64xf32>
    %82 = math.exp %81 : vector<64x64xf32>
    %cst_39 = arith.constant dense<0.000000e+00> : vector<64xf32>
    %83 = vector.multi_reduction <add>, %82, %cst_39 [1] : vector<64x64xf32> to vector<64xf32>
    %84 = vector.shape_cast %83 : vector<64xf32> to vector<64x1xf32>
    %85 = vector.broadcast %84 : vector<64x1xf32> to vector<64x64xf32>
    %86 = arith.divf %82, %85 : vector<64x64xf32>
    %87 = vector.extract_strided_slice %67 {offsets = [0, 0], sizes = [1, 16], strides = [1, 1]} : vector<2x16xf32> to vector<1x16xf32>
    %88 = vector.broadcast %87 : vector<1x16xf32> to vector<64x16xf32>
    %89 = arith.mulf %62, %88 : vector<64x16xf32>
    %cst_40 = arith.constant dense<0.000000e+00> : vector<64x16xf32>
    %90 = tpu.matmul %86, %89, %cst_40 {dimension_numbers = #tpu.dot_dimension_numbers<[1], [0], [0], [1], [0, 0, 1, 1], [], []>} : vector<64x64xf32>, vector<64x16xf32>, vector<64x16xf32> -> vector<64x16xf32>
    %91 = arith.addf %68, %90 : vector<64x16xf32>
    %92 = vector.extract_strided_slice %64 {offsets = [0, 1], sizes = [64, 1], strides = [1, 1]} : vector<64x2xf32> to vector<64x1xf32>
    %93 = vector.extract_strided_slice %66 {offsets = [1, 0], sizes = [1, 64], strides = [1, 1]} : vector<2x64xf32> to vector<1x64xf32>
    %94 = vector.broadcast %92 : vector<64x1xf32> to vector<64x64xf32>
    %95 = vector.broadcast %93 : vector<1x64xf32> to vector<64x64xf32>
    %96 = arith.addf %94, %95 : vector<64x64xf32>
    %cst_41 = arith.constant 2.000000e-01 : f32
    %97 = vector.broadcast %cst_41 : f32 to vector<64x64xf32>
    %98 = arith.mulf %97, %96 : vector<64x64xf32>
    %99 = arith.maximumf %96, %98 : vector<64x64xf32>
    %100 = arith.addf %99, %1 : vector<64x64xf32>
    %cst_42 = arith.constant dense<0xFF800000> : vector<64xf32>
    %101 = vector.multi_reduction <maximumf>, %100, %cst_42 [1] : vector<64x64xf32> to vector<64xf32>
    %102 = vector.shape_cast %101 : vector<64xf32> to vector<64x1xf32>
    %103 = vector.broadcast %102 : vector<64x1xf32> to vector<64x64xf32>
    %104 = arith.subf %100, %103 : vector<64x64xf32>
    %105 = math.exp %104 : vector<64x64xf32>
    %cst_43 = arith.constant dense<0.000000e+00> : vector<64xf32>
    %106 = vector.multi_reduction <add>, %105, %cst_43 [1] : vector<64x64xf32> to vector<64xf32>
    %107 = vector.shape_cast %106 : vector<64xf32> to vector<64x1xf32>
    %108 = vector.broadcast %107 : vector<64x1xf32> to vector<64x64xf32>
    %109 = arith.divf %105, %108 : vector<64x64xf32>
    %110 = vector.extract_strided_slice %67 {offsets = [1, 0], sizes = [1, 16], strides = [1, 1]} : vector<2x16xf32> to vector<1x16xf32>
    %111 = vector.broadcast %110 : vector<1x16xf32> to vector<64x16xf32>
    %112 = arith.mulf %62, %111 : vector<64x16xf32>
    %cst_44 = arith.constant dense<0.000000e+00> : vector<64x16xf32>
    %113 = tpu.matmul %109, %112, %cst_44 {dimension_numbers = #tpu.dot_dimension_numbers<[1], [0], [0], [1], [0, 0, 1, 1], [], []>} : vector<64x64xf32>, vector<64x16xf32>, vector<64x16xf32> -> vector<64x16xf32>
    %114 = arith.addf %91, %113 : vector<64x16xf32>
    %c0_45 = arith.constant 0 : index
    %c0_46 = arith.constant 0 : index
    %115 = vector.load %arg11[%c0_45, %c0_46] : memref<1x16xf32, #tpu.memory_space<vmem>>, vector<1x16xf32>
    %116 = vector.broadcast %115 : vector<1x16xf32> to vector<64x16xf32>
    %117 = arith.addf %114, %116 : vector<64x16xf32>
    %cst_47 = arith.constant 0.000000e+00 : f32
    %118 = vector.broadcast %cst_47 : f32 to vector<64x16xf32>
    %119 = arith.maximumf %117, %118 : vector<64x16xf32>
    %c0_48 = arith.constant 0 : index
    %c0_49 = arith.constant 0 : index
    %120 = vector.load %arg13[%c0_48, %c0_49] : memref<16x2xf32, #tpu.memory_space<vmem>>, vector<16x2xf32>
    %cst_50 = arith.constant dense<0.000000e+00> : vector<64x2xf32>
    %121 = tpu.matmul %119, %120, %cst_50 {dimension_numbers = #tpu.dot_dimension_numbers<[1], [0], [0], [1], [0, 0, 1, 1], [], []>} : vector<64x16xf32>, vector<16x2xf32>, vector<64x2xf32> -> vector<64x2xf32>
    %c0_51 = arith.constant 0 : index
    %c0_52 = arith.constant 0 : index
    %122 = vector.load %arg15[%c0_51, %c0_52] : memref<2x2xf32, #tpu.memory_space<vmem>>, vector<2x2xf32>
    %cst_53 = arith.constant dense<0.000000e+00> : vector<64x2xf32>
    %123 = tpu.matmul %121, %122, %cst_53 {dimension_numbers = #tpu.dot_dimension_numbers<[1], [0], [0], [1], [0, 0, 1, 1], [], []>} : vector<64x2xf32>, vector<2x2xf32>, vector<64x2xf32> -> vector<64x2xf32>
    %c0_54 = arith.constant 0 : index
    %c0_55 = arith.constant 0 : index
    %124 = vector.load %arg14[%c0_54, %c0_55] : memref<2x2xf32, #tpu.memory_space<vmem>>, vector<2x2xf32>
    %cst_56 = arith.constant dense<0.000000e+00> : vector<2x64xf32>
    %125 = tpu.matmul %124, %121, %cst_56 {dimension_numbers = #tpu.dot_dimension_numbers<[1], [1], [0], [0], [0, 0, 1, 0], [], []>} : vector<2x2xf32>, vector<64x2xf32>, vector<2x64xf32> -> vector<2x64xf32>
    %c0_57 = arith.constant 0 : index
    %c0_58 = arith.constant 0 : index
    %126 = vector.load %arg17[%c0_57, %c0_58] : memref<2x2xf32, #tpu.memory_space<vmem>>, vector<2x2xf32>
    %cst_59 = arith.constant 0.000000e+00 : f32
    %127 = vector.broadcast %cst_59 : f32 to vector<64x2xf32>
    %128 = vector.extract_strided_slice %123 {offsets = [0, 0], sizes = [64, 1], strides = [1, 1]} : vector<64x2xf32> to vector<64x1xf32>
    %129 = vector.extract_strided_slice %125 {offsets = [0, 0], sizes = [1, 64], strides = [1, 1]} : vector<2x64xf32> to vector<1x64xf32>
    %130 = vector.broadcast %128 : vector<64x1xf32> to vector<64x64xf32>
    %131 = vector.broadcast %129 : vector<1x64xf32> to vector<64x64xf32>
    %132 = arith.addf %130, %131 : vector<64x64xf32>
    %cst_60 = arith.constant 2.000000e-01 : f32
    %133 = vector.broadcast %cst_60 : f32 to vector<64x64xf32>
    %134 = arith.mulf %133, %132 : vector<64x64xf32>
    %135 = arith.maximumf %132, %134 : vector<64x64xf32>
    %136 = arith.addf %135, %1 : vector<64x64xf32>
    %cst_61 = arith.constant dense<0xFF800000> : vector<64xf32>
    %137 = vector.multi_reduction <maximumf>, %136, %cst_61 [1] : vector<64x64xf32> to vector<64xf32>
    %138 = vector.shape_cast %137 : vector<64xf32> to vector<64x1xf32>
    %139 = vector.broadcast %138 : vector<64x1xf32> to vector<64x64xf32>
    %140 = arith.subf %136, %139 : vector<64x64xf32>
    %141 = math.exp %140 : vector<64x64xf32>
    %cst_62 = arith.constant dense<0.000000e+00> : vector<64xf32>
    %142 = vector.multi_reduction <add>, %141, %cst_62 [1] : vector<64x64xf32> to vector<64xf32>
    %143 = vector.shape_cast %142 : vector<64xf32> to vector<64x1xf32>
    %144 = vector.broadcast %143 : vector<64x1xf32> to vector<64x64xf32>
    %145 = arith.divf %141, %144 : vector<64x64xf32>
    %146 = vector.extract_strided_slice %126 {offsets = [0, 0], sizes = [1, 2], strides = [1, 1]} : vector<2x2xf32> to vector<1x2xf32>
    %147 = vector.broadcast %146 : vector<1x2xf32> to vector<64x2xf32>
    %148 = arith.mulf %121, %147 : vector<64x2xf32>
    %cst_63 = arith.constant dense<0.000000e+00> : vector<64x2xf32>
    %149 = tpu.matmul %145, %148, %cst_63 {dimension_numbers = #tpu.dot_dimension_numbers<[1], [0], [0], [1], [0, 0, 1, 1], [], []>} : vector<64x64xf32>, vector<64x2xf32>, vector<64x2xf32> -> vector<64x2xf32>
    %150 = arith.addf %127, %149 : vector<64x2xf32>
    %151 = vector.extract_strided_slice %123 {offsets = [0, 1], sizes = [64, 1], strides = [1, 1]} : vector<64x2xf32> to vector<64x1xf32>
    %152 = vector.extract_strided_slice %125 {offsets = [1, 0], sizes = [1, 64], strides = [1, 1]} : vector<2x64xf32> to vector<1x64xf32>
    %153 = vector.broadcast %151 : vector<64x1xf32> to vector<64x64xf32>
    %154 = vector.broadcast %152 : vector<1x64xf32> to vector<64x64xf32>
    %155 = arith.addf %153, %154 : vector<64x64xf32>
    %cst_64 = arith.constant 2.000000e-01 : f32
    %156 = vector.broadcast %cst_64 : f32 to vector<64x64xf32>
    %157 = arith.mulf %156, %155 : vector<64x64xf32>
    %158 = arith.maximumf %155, %157 : vector<64x64xf32>
    %159 = arith.addf %158, %1 : vector<64x64xf32>
    %cst_65 = arith.constant dense<0xFF800000> : vector<64xf32>
    %160 = vector.multi_reduction <maximumf>, %159, %cst_65 [1] : vector<64x64xf32> to vector<64xf32>
    %161 = vector.shape_cast %160 : vector<64xf32> to vector<64x1xf32>
    %162 = vector.broadcast %161 : vector<64x1xf32> to vector<64x64xf32>
    %163 = arith.subf %159, %162 : vector<64x64xf32>
    %164 = math.exp %163 : vector<64x64xf32>
    %cst_66 = arith.constant dense<0.000000e+00> : vector<64xf32>
    %165 = vector.multi_reduction <add>, %164, %cst_66 [1] : vector<64x64xf32> to vector<64xf32>
    %166 = vector.shape_cast %165 : vector<64xf32> to vector<64x1xf32>
    %167 = vector.broadcast %166 : vector<64x1xf32> to vector<64x64xf32>
    %168 = arith.divf %164, %167 : vector<64x64xf32>
    %169 = vector.extract_strided_slice %126 {offsets = [1, 0], sizes = [1, 2], strides = [1, 1]} : vector<2x2xf32> to vector<1x2xf32>
    %170 = vector.broadcast %169 : vector<1x2xf32> to vector<64x2xf32>
    %171 = arith.mulf %121, %170 : vector<64x2xf32>
    %cst_67 = arith.constant dense<0.000000e+00> : vector<64x2xf32>
    %172 = tpu.matmul %168, %171, %cst_67 {dimension_numbers = #tpu.dot_dimension_numbers<[1], [0], [0], [1], [0, 0, 1, 1], [], []>} : vector<64x64xf32>, vector<64x2xf32>, vector<64x2xf32> -> vector<64x2xf32>
    %173 = arith.addf %150, %172 : vector<64x2xf32>
    %c0_68 = arith.constant 0 : index
    %c0_69 = arith.constant 0 : index
    %174 = vector.load %arg16[%c0_68, %c0_69] : memref<1x2xf32, #tpu.memory_space<vmem>>, vector<1x2xf32>
    %175 = vector.broadcast %174 : vector<1x2xf32> to vector<64x2xf32>
    %176 = arith.addf %173, %175 : vector<64x2xf32>
    %cst_70 = arith.constant 0.000000e+00 : f32
    %177 = vector.broadcast %cst_70 : f32 to vector<64x2xf32>
    %178 = arith.maximumf %176, %177 : vector<64x2xf32>
    %c0_71 = arith.constant 0 : index
    %c0_72 = arith.constant 0 : index
    %179 = vector.load %arg2[%c0_71, %c0_72] : memref<64x16xf32, #tpu.memory_space<vmem>>, vector<64x16xf32>
    %cst_73 = arith.constant dense<0.000000e+00> : vector<2x16xf32>
    %180 = tpu.matmul %178, %179, %cst_73 {dimension_numbers = #tpu.dot_dimension_numbers<[0], [0], [1], [1], [0, 1, 1, 1], [], []>} : vector<64x2xf32>, vector<64x16xf32>, vector<2x16xf32> -> vector<2x16xf32>
    %cst_74 = arith.constant dense<0.000000e+00> : vector<16xf32>
    %181 = vector.multi_reduction <add>, %180, %cst_74 [0] : vector<2x16xf32> to vector<16xf32>
    %182 = vector.shape_cast %181 : vector<16xf32> to vector<1x16xf32>
    %cst_75 = arith.constant 2.000000e+00 : f32
    %183 = vector.broadcast %cst_75 : f32 to vector<1x16xf32>
    %184 = arith.divf %182, %183 : vector<1x16xf32>
    %c0_76 = arith.constant 0 : index
    %c0_77 = arith.constant 0 : index
    %185 = vector.load %arg18[%c0_76, %c0_77] : memref<1x16xf32, #tpu.memory_space<vmem>>, vector<1x16xf32>
    tpu.vector_store %arg18[%c0_76, %c0_77], %184 {strides = array<i32>} : memref<1x16xf32, #tpu.memory_space<vmem>>, vector<1x16xf32>,
    return
  }
}

</mosaic_0001>

<llo_original>
// kernel: squeeze.2
$region0: #{squeeze.2}
  %s0 = inlined_call_operand.vmem [shape: f32[8], index: 0, kind: input, shape index: {}]
  %s1 = inlined_call_operand.vmem [shape: f32[2,4], index: 1, kind: output, shape index: {}]
  $region1: #{squeeze.2} parent=0
    #allocation0 [shape = 'u8[4096]{0}', space=vmem, size = 0x1000, scoped, tag = 'scoped mem for output reshape']
    #allocation1 [shape = 'u8[4096]{0}', space=vmem, size = 0x1000, scoped, tag = 'scoped mem for input reshape']
    %s3 = sshll.u32 1, 1
    %s4 = ssub.s32 %s3, 1
    %v5 = vld [vmem:[%s0] sm:%s4]
    %6 = vst [vmem:[#allocation1] sm:%s4] %v5
    %v7 = vld [vmem:[#allocation1] sm:$0x1]
    %vm8 = vcmask 31744
    %9 = vst.msk [vmem:[#allocation0] sm:$0x1] %vm8, %v7
    %v10 = vld [vmem:[#allocation1] sm:$0x1]
    %11 = vrot.lane.b32.xlu0 %v10, 124
    %v12 = vpop.permute.xlu0 %11
    %vm13 = vcmask 31744
    %s14 = scalar_lea.vmem [#allocation0], 1
    %15 = vst.msk [vmem:[%s14] sm:$0x1] %vm13, %v12
    %s17 = sshll.u32 1, 2
    %s18 = ssub.s32 %s17, 1
    %v20 = vld [vmem:[#allocation0] sm:%s18]
    %s21 = sshll.u32 1, 2
    %s22 = ssub.s32 %s21, 1
    %23 = vst [vmem:[%s1] sm:%s22] %v20

// kernel: run.1
$region0: #{run.1}
  #allocation0 [shape = 'u32[]', space=smem, size = 0x4, offset = 0x4, fixed_abs, tag = 'smem constant byte address 0x4 - core index']
  #allocation1 [shape = 'u32[144,128]{1,0:T(1,128)}', space=vmem, size = 0x12000, scoped, tag = 'internal scratch']
  %s0 = inlined_call_operand.vmem [shape: f32[64,4], index: 0, kind: input, shape index: {}]
  %s1 = inlined_call_operand.vmem [shape: f32[64,64], index: 1, kind: input, shape index: {}]
  %s2 = inlined_call_operand.vmem [shape: f32[64,16], index: 2, kind: input, shape index: {}]
  %s3 = inlined_call_operand.vmem [shape: f32[4,16], index: 3, kind: input, shape index: {}]
  %s4 = inlined_call_operand.vmem [shape: f32[2,16], index: 4, kind: input, shape index: {}]
  %s5 = inlined_call_operand.vmem [shape: f32[16,2], index: 5, kind: input, shape index: {}]
  %s6 = inlined_call_operand.vmem [shape: f32[1,16], index: 6, kind: input, shape index: {}]
  %s7 = inlined_call_operand.vmem [shape: f32[2,16], index: 7, kind: input, shape index: {}]
  %s8 = inlined_call_operand.vmem [shape: f32[16,16], index: 8, kind: input, shape index: {}]
  %s9 = inlined_call_operand.vmem [shape: f32[2,16], index: 9, kind: input, shape index: {}]
  %s10 = inlined_call_operand.vmem [shape: f32[16,2], index: 10, kind: input, shape index: {}]
  %s11 = inlined_call_operand.vmem [shape: f32[1,16], index: 11, kind: input, shape index: {}]
  %s12 = inlined_call_operand.vmem [shape: f32[2,16], index: 12, kind: input, shape index: {}]
  %s13 = inlined_call_operand.vmem [shape: f32[16,2], index: 13, kind: input, shape index: {}]
  %s14 = inlined_call_operand.vmem [shape: f32[2,2], index: 14, kind: input, shape index: {}]
  %s15 = inlined_call_operand.vmem [shape: f32[2,2], index: 15, kind: input, shape index: {}]
  %s16 = inlined_call_operand.vmem [shape: f32[1,2], index: 16, kind: input, shape index: {}]
  %s17 = inlined_call_operand.vmem [shape: f32[2,2], index: 17, kind: input, shape index: {}]
  %s18 = inlined_call_operand.vmem [shape: f32[1,16], index: 18, kind: output, shape index: {}]
  %s19 = sld [smem:[#allocation0]]
  $region82: #{run.1} parent=0
    _
  %s21 = ssub.s32 1, %s19
  %s22 = scalar_select 0, %s21, %s19
  // Predicated region
  $region2: #{run.1} parent=0 // pred_check
    _
  $region3: #{run.1} parent=0 // pred_check_branch
    %24 = sbr.rel (0) target = $region5
  $region4: #{run.1} parent=0 // pred_region
    _
  $region5: #{run.1} parent=0 // pred_fallthru
    _
  // Predicated region
  $region6: #{run.1} parent=0 // pred_check
    _
  $region7: #{run.1} parent=0 // pred_check_branch
    %26 = sbr.rel (0) target = $region9
  $region8: #{run.1} parent=0 // pred_region
    _
  $region9: #{run.1} parent=0 // pred_fallthru
    _
  // Predicated region
  $region10: #{run.1} parent=0 // pred_check
    _
  $region11: #{run.1} parent=0 // pred_check_branch
    %28 = sbr.rel (0) target = $region13
  $region12: #{run.1} parent=0 // pred_region
    _
  $region13: #{run.1} parent=0 // pred_fallthru
    _
  // Predicated region
  $region14: #{run.1} parent=0 // pred_check
    _
  $region15: #{run.1} parent=0 // pred_check_branch
    %30 = sbr.rel (0) target = $region17
  $region16: #{run.1} parent=0 // pred_region
    _
  $region17: #{run.1} parent=0 // pred_fallthru
    _
  // Predicated region
  $region18: #{run.1} parent=0 // pred_check
    _
  $region19: #{run.1} parent=0 // pred_check_branch
    %32 = sbr.rel (0) target = $region21
  $region20: #{run.1} parent=0 // pred_region
    _
  $region21: #{run.1} parent=0 // pred_fallthru
    _
  // Predicated region
  $region22: #{run.1} parent=0 // pred_check
    _
  $region23: #{run.1} parent=0 // pred_check_branch
    %34 = sbr.rel (0) target = $region25
  $region24: #{run.1} parent=0 // pred_region
    _
  $region25: #{run.1} parent=0 // pred_fallthru
    _
  // Predicated region
  $region26: #{run.1} parent=0 // pred_check
    _
  $region27: #{run.1} parent=0 // pred_check_branch
    %36 = sbr.rel (0) target = $region29
  $region28: #{run.1} parent=0 // pred_region
    _
  $region29: #{run.1} parent=0 // pred_fallthru
    _
  // Predicated region
  $region30: #{run.1} parent=0 // pred_check
    _
  $region31: #{run.1} parent=0 // pred_check_branch
    %38 = sbr.rel (0) target = $region33
  $region32: #{run.1} parent=0 // pred_region
    _
  $region33: #{run.1} parent=0 // pred_fallthru
    _
  // Predicated region
  $region34: #{run.1} parent=0 // pred_check
    _
  $region35: #{run.1} parent=0 // pred_check_branch
    %40 = sbr.rel (0) target = $region37
  $region36: #{run.1} parent=0 // pred_region
    _
  $region37: #{run.1} parent=0 // pred_fallthru
    _
  // Predicated region
  $region38: #{run.1} parent=0 // pred_check
    _
  $region39: #{run.1} parent=0 // pred_check_branch
    %42 = sbr.rel (0) target = $region41
  $region40: #{run.1} parent=0 // pred_region
    _
  $region41: #{run.1} parent=0 // pred_fallthru
    _
  // Predicated region
  $region42: #{run.1} parent=0 // pred_check
    _
  $region43: #{run.1} parent=0 // pred_check_branch
    %44 = sbr.rel (0) target = $region45
  $region44: #{run.1} parent=0 // pred_region
    _
  $region45: #{run.1} parent=0 // pred_fallthru
    _
  // Predicated region
  $region46: #{run.1} parent=0 // pred_check
    _
  $region47: #{run.1} parent=0 // pred_check_branch
    %46 = sbr.rel (0) target = $region49
  $region48: #{run.1} parent=0 // pred_region
    _
  $region49: #{run.1} parent=0 // pred_fallthru
    _
  // Predicated region
  $region50: #{run.1} parent=0 // pred_check
    _
  $region51: #{run.1} parent=0 // pred_check_branch
    %48 = sbr.rel (0) target = $region53
  $region52: #{run.1} parent=0 // pred_region
    _
  $region53: #{run.1} parent=0 // pred_fallthru
    _
  // Predicated region
  $region54: #{run.1} parent=0 // pred_check
    _
  $region55: #{run.1} parent=0 // pred_check_branch
    %50 = sbr.rel (0) target = $region57
  $region56: #{run.1} parent=0 // pred_region
    _
  $region57: #{run.1} parent=0 // pred_fallthru
    _
  // Predicated region
  $region58: #{run.1} parent=0 // pred_check
    _
  $region59: #{run.1} parent=0 // pred_check_branch
    %52 = sbr.rel (0) target = $region61
  $region60: #{run.1} parent=0 // pred_region
    _
  $region61: #{run.1} parent=0 // pred_fallthru
    _
  // Predicated region
  $region62: #{run.1} parent=0 // pred_check
    _
  $region63: #{run.1} parent=0 // pred_check_branch
    %54 = sbr.rel (0) target = $region65
  $region64: #{run.1} parent=0 // pred_region
    _
  $region65: #{run.1} parent=0 // pred_fallthru
    _
  // Predicated region
  $region66: #{run.1} parent=0 // pred_check
    _
  $region67: #{run.1} parent=0 // pred_check_branch
    %56 = sbr.rel (0) target = $region69
  $region68: #{run.1} parent=0 // pred_region
    _
  $region69: #{run.1} parent=0 // pred_fallthru
    _
  // Predicated region
  $region70: #{run.1} parent=0 // pred_check
    _
  $region71: #{run.1} parent=0 // pred_check_branch
    %58 = sbr.rel (0) target = $region73
  $region72: #{run.1} parent=0 // pred_region
    _
  $region73: #{run.1} parent=0 // pred_fallthru
    _
  %v59 = vld [vmem:[%s0] sm:$0xff]
  %v60 = vld [vmem:[%s0 + $0x8] sm:$0xff]
  %v61 = vld [vmem:[%s0 + $0x10] sm:$0xff]
  %v62 = vld [vmem:[%s0 + $0x18] sm:$0xff]
  %v63 = vld [vmem:[%s0 + $0x20] sm:$0xff]
  %v64 = vld [vmem:[%s0 + $0x28] sm:$0xff]
  %v65 = vld [vmem:[%s0 + $0x30] sm:$0xff]
  %v66 = vld [vmem:[%s0 + $0x38] sm:$0xff]
  %v67 = vld [vmem:[%s1] sm:$0xff]
  %v68 = vld [vmem:[%s1 + $0x8] sm:$0xff]
  %v69 = vld [vmem:[%s1 + $0x10] sm:$0xff]
  %v70 = vld [vmem:[%s1 + $0x18] sm:$0xff]
  %v71 = vld [vmem:[%s1 + $0x20] sm:$0xff]
  %v72 = vld [vmem:[%s1 + $0x28] sm:$0xff]
  %v73 = vld [vmem:[%s1 + $0x30] sm:$0xff]
  %v74 = vld [vmem:[%s1 + $0x38] sm:$0xff]
  %v75 = vld [vmem:[%s3] sm:$0xf]
  %vm76 = vcmask 31744
  %v78 = vsel %vm76, %v59, 0
  %v81 = vsel %vm76, %v60, 0
  %v84 = vsel %vm76, %v61, 0
  %v87 = vsel %vm76, %v62, 0
  %v90 = vsel %vm76, %v63, 0
  %v93 = vsel %vm76, %v64, 0
  %v96 = vsel %vm76, %v65, 0
  %v99 = vsel %vm76, %v66, 0
  %vm101 = vcmask 1043456
  %v103 = vsel %vm101, %v75, 0
  %105 = vmatprep.subr.mxu0 0.0
  %106 = vmatpush1.msra.mxu0 0.0
  %107 = vmatprep.subr.mxu0 0.0
  %108 = vmatpush1.msra.mxu0 0.0
  %109 = vmatprep.subr.mxu0 0.0
  %110 = vmatpush1.msra.mxu0 0.0
  %111 = vmatprep.subr.mxu0 0.0
  %112 = vmatpush1.msra.mxu0 0.0
  %113 = vmatprep.subr.mxu0 0.0
  %114 = vmatpush1.msra.mxu0 0.0
  %115 = vmatprep.subr.mxu0 0.0
  %116 = vmatpush1.msra.mxu0 0.0
  %117 = vmatprep.subr.mxu0 0.0
  %118 = vmatpush1.msra.mxu0 0.0
  %119 = vmatprep.subr.mxu0 0.0
  %120 = vmatpush1.msra.mxu0 0.0
  %121 = vmatprep.subr.mxu0 0.0
  %122 = vmatpush1.msra.mxu0 0.0
  %123 = vmatprep.subr.mxu0 0.0
  %124 = vmatpush1.msra.mxu0 0.0
  %125 = vmatprep.subr.mxu0 0.0
  %126 = vmatpush1.msra.mxu0 0.0
  %127 = vmatprep.subr.mxu0 0.0
  %128 = vmatpush1.msra.mxu0 0.0
  %129 = vmatprep.subr.mxu0 0.0
  %130 = vmatpush1.msra.mxu0 0.0
  %131 = vmatprep.subr.mxu0 0.0
  %132 = vmatpush1.msra.mxu0 0.0
  %133 = vmatprep.subr.mxu0 0.0
  %134 = vmatpush1.msra.mxu0 0.0
  %135 = vmatprep.subr.mxu0 0.0
  %136 = vmatpush1.msra.mxu0 %v103
  %137 = vmatprep.subr.mxu0 0.0
  %138 = vmatpush2.msra.mxu0 0.0
  %139 = vmatprep.subr.mxu0 0.0
  %140 = vmatpush2.msra.mxu0 0.0
  %141 = vmatprep.subr.mxu0 0.0
  %142 = vmatpush2.msra.mxu0 0.0
  %143 = vmatprep.subr.mxu0 0.0
  %144 = vmatpush2.msra.mxu0 0.0
  %145 = vmatprep.subr.mxu0 0.0
  %146 = vmatpush2.msra.mxu0 0.0
  %147 = vmatprep.subr.mxu0 0.0
  %148 = vmatpush2.msra.mxu0 0.0
  %149 = vmatprep.subr.mxu0 0.0
  %150 = vmatpush2.msra.mxu0 0.0
  %151 = vmatprep.subr.mxu0 0.0
  %152 = vmatpush2.msra.mxu0 0.0
  %153 = vmatprep.subr.mxu0 0.0
  %154 = vmatpush2.msra.mxu0 0.0
  %155 = vmatprep.subr.mxu0 0.0
  %156 = vmatpush2.msra.mxu0 0.0
  %157 = vmatprep.subr.mxu0 0.0
  %158 = vmatpush2.msra.mxu0 0.0
  %159 = vmatprep.subr.mxu0 0.0
  %160 = vmatpush2.msra.mxu0 0.0
  %161 = vmatprep.subr.mxu0 0.0
  %162 = vmatpush2.msra.mxu0 0.0
  %163 = vmatprep.subr.mxu0 0.0
  %164 = vmatpush2.msra.mxu0 0.0
  %165 = vmatprep.subr.mxu0 0.0
  %166 = vmatpush2.msra.mxu0 0.0
  %167 = vmatprep.subr.mxu0 0.0
  %168 = vmatpush2.msra.mxu0 0.0
  %169 = vmatprep.mubr.f32.mxu0 0.0
  %170 = vmatmul.mubr.f32.gmra.mxu0 %v78
  %v171 = vpop.f32.mrf.mxu0
  %v172 = vadd.f32 0.0, %v171
  %v173 = vpop.f32.mrf.mxu0
  %174 = vmatprep.mubr.f32.mxu0 0.0
  %175 = vmatmul.mubr.f32.gmra.mxu0 %v81
  %v176 = vpop.f32.mrf.mxu0
  %v177 = vadd.f32 0.0, %v176
  %v178 = vpop.f32.mrf.mxu0
  %179 = vmatprep.mubr.f32.mxu0 0.0
  %180 = vmatmul.mubr.f32.gmra.mxu0 %v84
  %v181 = vpop.f32.mrf.mxu0
  %v182 = vadd.f32 0.0, %v181
  %v183 = vpop.f32.mrf.mxu0
  %184 = vmatprep.mubr.f32.mxu0 0.0
  %185 = vmatmul.mubr.f32.gmra.mxu0 %v87
  %v186 = vpop.f32.mrf.mxu0
  %v187 = vadd.f32 0.0, %v186
  %v188 = vpop.f32.mrf.mxu0
  %189 = vmatprep.mubr.f32.mxu0 0.0
  %190 = vmatmul.mubr.f32.gmra.mxu0 %v90
  %v191 = vpop.f32.mrf.mxu0
  %v192 = vadd.f32 0.0, %v191
  %v193 = vpop.f32.mrf.mxu0
  %194 = vmatprep.mubr.f32.mxu0 0.0
  %195 = vmatmul.mubr.f32.gmra.mxu0 %v93
  %v196 = vpop.f32.mrf.mxu0
  %v197 = vadd.f32 0.0, %v196
  %v198 = vpop.f32.mrf.mxu0
  %199 = vmatprep.mubr.f32.mxu0 0.0
  %200 = vmatmul.mubr.f32.gmra.mxu0 %v96
  %v201 = vpop.f32.mrf.mxu0
  %v202 = vadd.f32 0.0, %v201
  %v203 = vpop.f32.mrf.mxu0
  %204 = vmatprep.mubr.f32.mxu0 0.0
  %205 = vmatmul.mubr.f32.gmra.mxu0 %v99
  %v206 = vpop.f32.mrf.mxu0
  %v207 = vadd.f32 0.0, %v206
  %v208 = vpop.f32.mrf.mxu0
  %209 = vdwg.mxu0
  %v210 = vld [vmem:[%s5] sm:$0xff]
  %v211 = vld [vmem:[%s5 + $0x8] sm:$0xff]
  %vm212 = vcmask 130048
  %v214 = vsel %vm212, %v172, 0
  %v217 = vsel %vm212, %v177, 0
  %v220 = vsel %vm212, %v182, 0
  %v223 = vsel %vm212, %v187, 0
  %v226 = vsel %vm212, %v192, 0
  %v229 = vsel %vm212, %v197, 0
  %v232 = vsel %vm212, %v202, 0
  %v235 = vsel %vm212, %v207, 0
  %237 = vmatprep.subr.mxu0 0.0
  %238 = vmatpush1.msra.mxu0 0.0
  %239 = vmatprep.subr.mxu0 0.0
  %240 = vmatpush1.msra.mxu0 0.0
  %241 = vmatprep.subr.mxu0 0.0
  %242 = vmatpush1.msra.mxu0 0.0
  %243 = vmatprep.subr.mxu0 0.0
  %244 = vmatpush1.msra.mxu0 0.0
  %245 = vmatprep.subr.mxu0 0.0
  %246 = vmatpush1.msra.mxu0 0.0
  %247 = vmatprep.subr.mxu0 0.0
  %248 = vmatpush1.msra.mxu0 0.0
  %249 = vmatprep.subr.mxu0 0.0
  %250 = vmatpush1.msra.mxu0 0.0
  %251 = vmatprep.subr.mxu0 0.0
  %252 = vmatpush1.msra.mxu0 0.0
  %253 = vmatprep.subr.mxu0 0.0
  %254 = vmatpush1.msra.mxu0 0.0
  %255 = vmatprep.subr.mxu0 0.0
  %256 = vmatpush1.msra.mxu0 0.0
  %257 = vmatprep.subr.mxu0 0.0
  %258 = vmatpush1.msra.mxu0 0.0
  %259 = vmatprep.subr.mxu0 0.0
  %260 = vmatpush1.msra.mxu0 0.0
  %261 = vmatprep.subr.mxu0 0.0
  %262 = vmatpush1.msra.mxu0 0.0
  %263 = vmatprep.subr.mxu0 0.0
  %264 = vmatpush1.msra.mxu0 0.0
  %265 = vmatprep.subr.mxu0 0.0
  %266 = vmatpush1.msra.mxu0 %v211
  %267 = vmatprep.subr.mxu0 0.0
  %268 = vmatpush1.msra.mxu0 %v210
  %269 = vmatprep.subr.mxu0 0.0
  %270 = vmatpush2.msra.mxu0 0.0
  %271 = vmatprep.subr.mxu0 0.0
  %272 = vmatpush2.msra.mxu0 0.0
  %273 = vmatprep.subr.mxu0 0.0
  %274 = vmatpush2.msra.mxu0 0.0
  %275 = vmatprep.subr.mxu0 0.0
  %276 = vmatpush2.msra.mxu0 0.0
  %277 = vmatprep.subr.mxu0 0.0
  %278 = vmatpush2.msra.mxu0 0.0
  %279 = vmatprep.subr.mxu0 0.0
  %280 = vmatpush2.msra.mxu0 0.0
  %281 = vmatprep.subr.mxu0 0.0
  %282 = vmatpush2.msra.mxu0 0.0
  %283 = vmatprep.subr.mxu0 0.0
  %284 = vmatpush2.msra.mxu0 0.0
  %285 = vmatprep.subr.mxu0 0.0
  %286 = vmatpush2.msra.mxu0 0.0
  %287 = vmatprep.subr.mxu0 0.0
  %288 = vmatpush2.msra.mxu0 0.0
  %289 = vmatprep.subr.mxu0 0.0
  %290 = vmatpush2.msra.mxu0 0.0
  %291 = vmatprep.subr.mxu0 0.0
  %292 = vmatpush2.msra.mxu0 0.0
  %293 = vmatprep.subr.mxu0 0.0
  %294 = vmatpush2.msra.mxu0 0.0
  %295 = vmatprep.subr.mxu0 0.0
  %296 = vmatpush2.msra.mxu0 0.0
  %297 = vmatprep.subr.mxu0 0.0
  %298 = vmatpush2.msra.mxu0 0.0
  %299 = vmatprep.subr.mxu0 0.0
  %300 = vmatpush2.msra.mxu0 0.0
  %301 = vmatprep.mubr.f32.mxu0 0.0
  %302 = vmatmul.mubr.f32.gmra.mxu0 %v214
  %v303 = vpop.f32.mrf.mxu0
  %v304 = vadd.f32 0.0, %v303
  %v305 = vpop.f32.mrf.mxu0
  %306 = vmatprep.mubr.f32.mxu0 0.0
  %307 = vmatmul.mubr.f32.gmra.mxu0 %v217
  %v308 = vpop.f32.mrf.mxu0
  %v309 = vadd.f32 0.0, %v308
  %v310 = vpop.f32.mrf.mxu0
  %311 = vmatprep.mubr.f32.mxu0 0.0
  %312 = vmatmul.mubr.f32.gmra.mxu0 %v220
  %v313 = vpop.f32.mrf.mxu0
  %v314 = vadd.f32 0.0, %v313
  %v315 = vpop.f32.mrf.mxu0
  %316 = vmatprep.mubr.f32.mxu0 0.0
  %317 = vmatmul.mubr.f32.gmra.mxu0 %v223
  %v318 = vpop.f32.mrf.mxu0
  %v319 = vadd.f32 0.0, %v318
  %v320 = vpop.f32.mrf.mxu0
  %321 = vmatprep.mubr.f32.mxu0 0.0
  %322 = vmatmul.mubr.f32.gmra.mxu0 %v226
  %v323 = vpop.f32.mrf.mxu0
  %v324 = vadd.f32 0.0, %v323
  %v325 = vpop.f32.mrf.mxu0
  %326 = vmatprep.mubr.f32.mxu0 0.0
  %327 = vmatmul.mubr.f32.gmra.mxu0 %v229
  %v328 = vpop.f32.mrf.mxu0
  %v329 = vadd.f32 0.0, %v328
  %v330 = vpop.f32.mrf.mxu0
  %331 = vmatprep.mubr.f32.mxu0 0.0
  %332 = vmatmul.mubr.f32.gmra.mxu0 %v232
  %v333 = vpop.f32.mrf.mxu0
  %v334 = vadd.f32 0.0, %v333
  %v335 = vpop.f32.mrf.mxu0
  %336 = vmatprep.mubr.f32.mxu0 0.0
  %337 = vmatmul.mubr.f32.gmra.mxu0 %v235
  %v338 = vpop.f32.mrf.mxu0
  %v339 = vadd.f32 0.0, %v338
  %v340 = vpop.f32.mrf.mxu0
  %341 = vdwg.mxu0
  %v342 = vld [vmem:[%s4] sm:$0x3]
  %v344 = vsel %vm212, %v342, 0
  %346 = vmatprep.subr.mxu0 0.0
  %347 = vmatpush1.xpose.msra.mxu0 0.0
  %348 = vmatprep.subr.mxu0 0.0
  %349 = vmatpush1.xpose.msra.mxu0 0.0
  %350 = vmatprep.subr.mxu0 0.0
  %351 = vmatpush1.xpose.msra.mxu0 0.0
  %352 = vmatprep.subr.mxu0 0.0
  %353 = vmatpush1.xpose.msra.mxu0 0.0
  %354 = vmatprep.subr.mxu0 0.0
  %355 = vmatpush1.xpose.msra.mxu0 0.0
  %356 = vmatprep.subr.mxu0 0.0
  %357 = vmatpush1.xpose.msra.mxu0 0.0
  %358 = vmatprep.subr.mxu0 0.0
  %359 = vmatpush1.xpose.msra.mxu0 0.0
  %360 = vmatprep.subr.mxu0 0.0
  %361 = vmatpush1.xpose.msra.mxu0 0.0
  %362 = vmatprep.subr.mxu0 0.0
  %363 = vmatpush1.xpose.msra.mxu0 %v235
  %364 = vmatprep.subr.mxu0 0.0
  %365 = vmatpush1.xpose.msra.mxu0 %v232
  %366 = vmatprep.subr.mxu0 0.0
  %367 = vmatpush1.xpose.msra.mxu0 %v229
  %368 = vmatprep.subr.mxu0 0.0
  %369 = vmatpush1.xpose.msra.mxu0 %v226
  %370 = vmatprep.subr.mxu0 0.0
  %371 = vmatpush1.xpose.msra.mxu0 %v223
  %372 = vmatprep.subr.mxu0 0.0
  %373 = vmatpush1.xpose.msra.mxu0 %v220
  %374 = vmatprep.subr.mxu0 0.0
  %375 = vmatpush1.xpose.msra.mxu0 %v217
  %376 = vmatprep.subr.mxu0 0.0
  %377 = vmatpush1.xpose.msra.mxu0 %v214
  %378 = vmatprep.subr.mxu0 0.0
  %379 = vmatpush2.xpose.msra.mxu0 0.0
  %380 = vmatprep.subr.mxu0 0.0
  %381 = vmatpush2.xpose.msra.mxu0 0.0
  %382 = vmatprep.subr.mxu0 0.0
  %383 = vmatpush2.xpose.msra.mxu0 0.0
  %384 = vmatprep.subr.mxu0 0.0
  %385 = vmatpush2.xpose.msra.mxu0 0.0
  %386 = vmatprep.subr.mxu0 0.0
  %387 = vmatpush2.xpose.msra.mxu0 0.0
  %388 = vmatprep.subr.mxu0 0.0
  %389 = vmatpush2.xpose.msra.mxu0 0.0
  %390 = vmatprep.subr.mxu0 0.0
  %391 = vmatpush2.xpose.msra.mxu0 0.0
  %392 = vmatprep.subr.mxu0 0.0
  %393 = vmatpush2.xpose.msra.mxu0 0.0
  %394 = vmatprep.subr.mxu0 0.0
  %395 = vmatpush2.xpose.msra.mxu0 0.0
  %396 = vmatprep.subr.mxu0 0.0
  %397 = vmatpush2.xpose.msra.mxu0 0.0
  %398 = vmatprep.subr.mxu0 0.0
  %399 = vmatpush2.xpose.msra.mxu0 0.0
  %400 = vmatprep.subr.mxu0 0.0
  %401 = vmatpush2.xpose.msra.mxu0 0.0
  %402 = vmatprep.subr.mxu0 0.0
  %403 = vmatpush2.xpose.msra.mxu0 0.0
  %404 = vmatprep.subr.mxu0 0.0
  %405 = vmatpush2.xpose.msra.mxu0 0.0
  %406 = vmatprep.subr.mxu0 0.0
  %407 = vmatpush2.xpose.msra.mxu0 0.0
  %408 = vmatprep.subr.mxu0 0.0
  %409 = vmatpush2.xpose.msra.mxu0 0.0
  %410 = vmatprep.mubr.f32.mxu0 0.0
  %411 = vmatmul.mubr.f32.gmra.mxu0 %v344
  %v412 = vpop.f32.mrf.mxu0
  %v413 = vadd.f32 0.0, %v412
  %v414 = vpop.f32.mrf.mxu0
  %415 = vdwg.mxu0
  %v416 = vld [vmem:[%s7] sm:$0x3]
  %418 = vset.pattern.permute.xlu0 0
  %419 = vperm.xlu0 %418, %v304
  %v420 = vpop.permute.xlu0 %419
  %423 = vset.pattern.permute.xlu0 0
  %424 = vperm.xlu0 %423, %v309
  %v425 = vpop.permute.xlu0 %424
  %428 = vset.pattern.permute.xlu0 0
  %429 = vperm.xlu0 %428, %v314
  %v430 = vpop.permute.xlu0 %429
  %433 = vset.pattern.permute.xlu0 0
  %434 = vperm.xlu0 %433, %v319
  %v435 = vpop.permute.xlu0 %434
  %438 = vset.pattern.permute.xlu0 0
  %439 = vperm.xlu0 %438, %v324
  %v440 = vpop.permute.xlu0 %439
  %443 = vset.pattern.permute.xlu0 0
  %444 = vperm.xlu0 %443, %v329
  %v445 = vpop.permute.xlu0 %444
  %448 = vset.pattern.permute.xlu0 0
  %449 = vperm.xlu0 %448, %v334
  %v450 = vpop.permute.xlu0 %449
  %453 = vset.pattern.permute.xlu0 0
  %454 = vperm.xlu0 %453, %v339
  %v455 = vpop.permute.xlu0 %454
  %v457 = vlaneseq
  %v458 = vshrl.u32 %v457, 7
  %v459 = vsub.s32 0, %v458
  %v460 = vrot.slane %v413, %v459
  %v461 = vadd.f32 %v420, %v460
  %v462 = vadd.f32 %v425, %v460
  %v463 = vadd.f32 %v430, %v460
  %v464 = vadd.f32 %v435, %v460
  %v465 = vadd.f32 %v440, %v460
  %v466 = vadd.f32 %v445, %v460
  %v467 = vadd.f32 %v450, %v460
  %v468 = vadd.f32 %v455, %v460
  %v469 = vmul.f32 %v461, 0.2
  %v470 = vmul.f32 %v462, 0.2
  %v471 = vmul.f32 %v463, 0.2
  %v472 = vmul.f32 %v464, 0.2
  %v473 = vmul.f32 %v465, 0.2
  %v474 = vmul.f32 %v466, 0.2
  %v475 = vmul.f32 %v467, 0.2
  %v476 = vmul.f32 %v468, 0.2
  %v477 = vmax.f32 %v461, %v469
  %v478 = vmax.f32 %v462, %v470
  %v479 = vmax.f32 %v463, %v471
  %v480 = vmax.f32 %v464, %v472
  %v481 = vmax.f32 %v465, %v473
  %v482 = vmax.f32 %v466, %v474
  %v483 = vmax.f32 %v467, %v475
  %v484 = vmax.f32 %v468, %v476
  %v485 = vadd.f32 %v477, %v67
  %v486 = vadd.f32 %v478, %v68
  %v487 = vadd.f32 %v479, %v69
  %v488 = vadd.f32 %v480, %v70
  %v489 = vadd.f32 %v481, %v71
  %v490 = vadd.f32 %v482, %v72
  %v491 = vadd.f32 %v483, %v73
  %v492 = vadd.f32 %v484, %v74
  %vm493 = vcmask 523264
  %v494 = vsel %vm493, %v485, -inf
  %495 = vmax.xlane.f32.xlu0 %v494
  %v496 = vpop.xlane.xlu0 %495
  %v497 = vsel %vm493, %v486, -inf
  %498 = vmax.xlane.f32.xlu0 %v497
  %v499 = vpop.xlane.xlu0 %498
  %v500 = vsel %vm493, %v487, -inf
  %501 = vmax.xlane.f32.xlu0 %v500
  %v502 = vpop.xlane.xlu0 %501
  %v503 = vsel %vm493, %v488, -inf
  %504 = vmax.xlane.f32.xlu0 %v503
  %v505 = vpop.xlane.xlu0 %504
  %v506 = vsel %vm493, %v489, -inf
  %507 = vmax.xlane.f32.xlu0 %v506
  %v508 = vpop.xlane.xlu0 %507
  %v509 = vsel %vm493, %v490, -inf
  %510 = vmax.xlane.f32.xlu0 %v509
  %v511 = vpop.xlane.xlu0 %510
  %v512 = vsel %vm493, %v491, -inf
  %513 = vmax.xlane.f32.xlu0 %v512
  %v514 = vpop.xlane.xlu0 %513
  %v515 = vsel %vm493, %v492, -inf
  %516 = vmax.xlane.f32.xlu0 %v515
  %v517 = vpop.xlane.xlu0 %516
  %v518 = vsub.f32 %v485, %v496
  %v519 = vsub.f32 %v486, %v499
  %v520 = vsub.f32 %v487, %v502
  %v521 = vsub.f32 %v488, %v505
  %v522 = vsub.f32 %v489, %v508
  %v523 = vsub.f32 %v490, %v511
  %v524 = vsub.f32 %v491, %v514
  %v525 = vsub.f32 %v492, %v517
  %v526 = vmul.f32 %v518, 1.442695
  %v527 = vpow.pop %v526
  %v528 = vmul.f32 %v519, 1.442695
  %v529 = vpow.pop %v528
  %v530 = vmul.f32 %v520, 1.442695
  %v531 = vpow.pop %v530
  %v532 = vmul.f32 %v521, 1.442695
  %v533 = vpow.pop %v532
  %v534 = vmul.f32 %v522, 1.442695
  %v535 = vpow.pop %v534
  %v536 = vmul.f32 %v523, 1.442695
  %v537 = vpow.pop %v536
  %v538 = vmul.f32 %v524, 1.442695
  %v539 = vpow.pop %v538
  %v540 = vmul.f32 %v525, 1.442695
  %v541 = vpow.pop %v540
  %v542 = vsel %vm493, %v527, 0.0
  %543 = vadd.xlane.f32.xlu0 %v542
  %v544 = vpop.xlane.xlu0 %543
  %v545 = vsel %vm493, %v529, 0.0
  %546 = vadd.xlane.f32.xlu0 %v545
  %v547 = vpop.xlane.xlu0 %546
  %v548 = vsel %vm493, %v531, 0.0
  %549 = vadd.xlane.f32.xlu0 %v548
  %v550 = vpop.xlane.xlu0 %549
  %v551 = vsel %vm493, %v533, 0.0
  %552 = vadd.xlane.f32.xlu0 %v551
  %v553 = vpop.xlane.xlu0 %552
  %v554 = vsel %vm493, %v535, 0.0
  %555 = vadd.xlane.f32.xlu0 %v554
  %v556 = vpop.xlane.xlu0 %555
  %v557 = vsel %vm493, %v537, 0.0
  %558 = vadd.xlane.f32.xlu0 %v557
  %v559 = vpop.xlane.xlu0 %558
  %v560 = vsel %vm493, %v539, 0.0
  %561 = vadd.xlane.f32.xlu0 %v560
  %v562 = vpop.xlane.xlu0 %561
  %v563 = vsel %vm493, %v541, 0.0
  %564 = vadd.xlane.f32.xlu0 %v563
  %v565 = vpop.xlane.xlu0 %564
  %v566 = vrcp.pop %v544
  %v567 = vmul.f32 %v527, %v566
  %v568 = vrcp.pop %v547
  %v569 = vmul.f32 %v529, %v568
  %v570 = vrcp.pop %v550
  %v571 = vmul.f32 %v531, %v570
  %v572 = vrcp.pop %v553
  %v573 = vmul.f32 %v533, %v572
  %v574 = vrcp.pop %v556
  %v575 = vmul.f32 %v535, %v574
  %v576 = vrcp.pop %v559
  %v577 = vmul.f32 %v537, %v576
  %v578 = vrcp.pop %v562
  %v579 = vmul.f32 %v539, %v578
  %v580 = vrcp.pop %v565
  %v581 = vmul.f32 %v541, %v580
  %v582 = vlaneseq
  %v583 = vshrl.u32 %v582, 7
  %v584 = vsub.s32 0, %v583
  %v585 = vrot.slane %v416, %v584
  %v586 = vmul.f32 %v172, %v585
  %v587 = vmul.f32 %v177, %v585
  %v588 = vmul.f32 %v182, %v585
  %v589 = vmul.f32 %v187, %v585
  %v590 = vmul.f32 %v192, %v585
  %v591 = vmul.f32 %v197, %v585
  %v592 = vmul.f32 %v202, %v585
  %v593 = vmul.f32 %v207, %v585
  %594 = vset.pattern.permute.xlu0 1
  %595 = vperm.xlu0 %594, %v304
  %v596 = vpop.permute.xlu0 %595
  %598 = vset.pattern.permute.xlu0 1
  %599 = vperm.xlu0 %598, %v309
  %v600 = vpop.permute.xlu0 %599
  %602 = vset.pattern.permute.xlu0 1
  %603 = vperm.xlu0 %602, %v314
  %v604 = vpop.permute.xlu0 %603
  %606 = vset.pattern.permute.xlu0 1
  %607 = vperm.xlu0 %606, %v319
  %v608 = vpop.permute.xlu0 %607
  %610 = vset.pattern.permute.xlu0 1
  %611 = vperm.xlu0 %610, %v324
  %v612 = vpop.permute.xlu0 %611
  %614 = vset.pattern.permute.xlu0 1
  %615 = vperm.xlu0 %614, %v329
  %v616 = vpop.permute.xlu0 %615
  %618 = vset.pattern.permute.xlu0 1
  %619 = vperm.xlu0 %618, %v334
  %v620 = vpop.permute.xlu0 %619
  %622 = vset.pattern.permute.xlu0 1
  %623 = vperm.xlu0 %622, %v339
  %v624 = vpop.permute.xlu0 %623
  %v626 = vlaneseq
  %v627 = vshrl.u32 %v626, 7
  %v628 = vsub.s32 1, %v627
  %v629 = vrot.slane %v413, %v628
  %v630 = vadd.f32 %v596, %v629
  %v631 = vadd.f32 %v600, %v629
  %v632 = vadd.f32 %v604, %v629
  %v633 = vadd.f32 %v608, %v629
  %v634 = vadd.f32 %v612, %v629
  %v635 = vadd.f32 %v616, %v629
  %v636 = vadd.f32 %v620, %v629
  %v637 = vadd.f32 %v624, %v629
  %v638 = vmul.f32 %v630, 0.2
  %v639 = vmul.f32 %v631, 0.2
  %v640 = vmul.f32 %v632, 0.2
  %v641 = vmul.f32 %v633, 0.2
  %v642 = vmul.f32 %v634, 0.2
  %v643 = vmul.f32 %v635, 0.2
  %v644 = vmul.f32 %v636, 0.2
  %v645 = vmul.f32 %v637, 0.2
  %v646 = vmax.f32 %v630, %v638
  %v647 = vmax.f32 %v631, %v639
  %v648 = vmax.f32 %v632, %v640
  %v649 = vmax.f32 %v633, %v641
  %v650 = vmax.f32 %v634, %v642
  %v651 = vmax.f32 %v635, %v643
  %v652 = vmax.f32 %v636, %v644
  %v653 = vmax.f32 %v637, %v645
  %v654 = vadd.f32 %v646, %v67
  %v655 = vadd.f32 %v647, %v68
  %v656 = vadd.f32 %v648, %v69
  %v657 = vadd.f32 %v649, %v70
  %v658 = vadd.f32 %v650, %v71
  %v659 = vadd.f32 %v651, %v72
  %v660 = vadd.f32 %v652, %v73
  %v661 = vadd.f32 %v653, %v74
  %v662 = vsel %vm493, %v654, -inf
  %663 = vmax.xlane.f32.xlu0 %v662
  %v664 = vpop.xlane.xlu0 %663
  %v665 = vsel %vm493, %v655, -inf
  %666 = vmax.xlane.f32.xlu0 %v665
  %v667 = vpop.xlane.xlu0 %666
  %v668 = vsel %vm493, %v656, -inf
  %669 = vmax.xlane.f32.xlu0 %v668
  %v670 = vpop.xlane.xlu0 %669
  %v671 = vsel %vm493, %v657, -inf
  %672 = vmax.xlane.f32.xlu0 %v671
  %v673 = vpop.xlane.xlu0 %672
  %v674 = vsel %vm493, %v658, -inf
  %675 = vmax.xlane.f32.xlu0 %v674
  %v676 = vpop.xlane.xlu0 %675
  %v677 = vsel %vm493, %v659, -inf
  %678 = vmax.xlane.f32.xlu0 %v677
  %v679 = vpop.xlane.xlu0 %678
  %v680 = vsel %vm493, %v660, -inf
  %681 = vmax.xlane.f32.xlu0 %v680
  %v682 = vpop.xlane.xlu0 %681
  %v683 = vsel %vm493, %v661, -inf
  %684 = vmax.xlane.f32.xlu0 %v683
  %v685 = vpop.xlane.xlu0 %684
  %v686 = vsub.f32 %v654, %v664
  %v687 = vsub.f32 %v655, %v667
  %v688 = vsub.f32 %v656, %v670
  %v689 = vsub.f32 %v657, %v673
  %v690 = vsub.f32 %v658, %v676
  %v691 = vsub.f32 %v659, %v679
  %v692 = vsub.f32 %v660, %v682
  %v693 = vsub.f32 %v661, %v685
  %v694 = vmul.f32 %v686, 1.442695
  %v695 = vpow.pop %v694
  %v696 = vmul.f32 %v687, 1.442695
  %v697 = vpow.pop %v696
  %v698 = vmul.f32 %v688, 1.442695
  %v699 = vpow.pop %v698
  %v700 = vmul.f32 %v689, 1.442695
  %v701 = vpow.pop %v700
  %v702 = vmul.f32 %v690, 1.442695
  %v703 = vpow.pop %v702
  %v704 = vmul.f32 %v691, 1.442695
  %v705 = vpow.pop %v704
  %v706 = vmul.f32 %v692, 1.442695
  %v707 = vpow.pop %v706
  %v708 = vmul.f32 %v693, 1.442695
  %v709 = vpow.pop %v708
  %v710 = vsel %vm493, %v695, 0.0
  %711 = vadd.xlane.f32.xlu0 %v710
  %v712 = vpop.xlane.xlu0 %711
  %v713 = vsel %vm493, %v697, 0.0
  %714 = vadd.xlane.f32.xlu0 %v713
  %v715 = vpop.xlane.xlu0 %714
  %v716 = vsel %vm493, %v699, 0.0
  %717 = vadd.xlane.f32.xlu0 %v716
  %v718 = vpop.xlane.xlu0 %717
  %v719 = vsel %vm493, %v701, 0.0
  %720 = vadd.xlane.f32.xlu0 %v719
  %v721 = vpop.xlane.xlu0 %720
  %v722 = vsel %vm493, %v703, 0.0
  %723 = vadd.xlane.f32.xlu0 %v722
  %v724 = vpop.xlane.xlu0 %723
  %v725 = vsel %vm493, %v705, 0.0
  %726 = vadd.xlane.f32.xlu0 %v725
  %v727 = vpop.xlane.xlu0 %726
  %v728 = vsel %vm493, %v707, 0.0
  %729 = vadd.xlane.f32.xlu0 %v728
  %v730 = vpop.xlane.xlu0 %729
  %v731 = vsel %vm493, %v709, 0.0
  %732 = vadd.xlane.f32.xlu0 %v731
  %v733 = vpop.xlane.xlu0 %732
  %v734 = vrcp.pop %v712
  %v735 = vmul.f32 %v695, %v734
  %v736 = vrcp.pop %v715
  %v737 = vmul.f32 %v697, %v736
  %v738 = vrcp.pop %v718
  %v739 = vmul.f32 %v699, %v738
  %v740 = vrcp.pop %v721
  %v741 = vmul.f32 %v701, %v740
  %v742 = vrcp.pop %v724
  %v743 = vmul.f32 %v703, %v742
  %v744 = vrcp.pop %v727
  %v745 = vmul.f32 %v705, %v744
  %v746 = vrcp.pop %v730
  %v747 = vmul.f32 %v707, %v746
  %v748 = vrcp.pop %v733
  %v749 = vmul.f32 %v709, %v748
  %v750 = vlaneseq
  %v751 = vshrl.u32 %v750, 7
  %v752 = vsub.s32 1, %v751
  %v753 = vrot.slane %v416, %v752
  %v754 = vmul.f32 %v172, %v753
  %v755 = vmul.f32 %v177, %v753
  %v756 = vmul.f32 %v182, %v753
  %v757 = vmul.f32 %v187, %v753
  %v758 = vmul.f32 %v192, %v753
  %v759 = vmul.f32 %v197, %v753
  %v760 = vmul.f32 %v202, %v753
  %v761 = vmul.f32 %v207, %v753
  %v763 = vsel %vm493, %v735, 0
  %v766 = vsel %vm493, %v737, 0
  %v769 = vsel %vm493, %v739, 0
  %v772 = vsel %vm493, %v741, 0
  %v775 = vsel %vm493, %v743, 0
  %v778 = vsel %vm493, %v745, 0
  %v781 = vsel %vm493, %v747, 0
  %v784 = vsel %vm493, %v749, 0
  %786 = vmatprep.subr.mxu0 0.0
  %787 = vmatpush1.msra.mxu0 0.0
  %788 = vmatprep.subr.mxu0 0.0
  %789 = vmatpush1.msra.mxu0 0.0
  %790 = vmatprep.subr.mxu0 0.0
  %791 = vmatpush1.msra.mxu0 0.0
  %792 = vmatprep.subr.mxu0 0.0
  %793 = vmatpush1.msra.mxu0 0.0
  %794 = vmatprep.subr.mxu0 0.0
  %795 = vmatpush1.msra.mxu0 0.0
  %796 = vmatprep.subr.mxu0 0.0
  %797 = vmatpush1.msra.mxu0 0.0
  %798 = vmatprep.subr.mxu0 0.0
  %799 = vmatpush1.msra.mxu0 0.0
  %800 = vmatprep.subr.mxu0 0.0
  %801 = vmatpush1.msra.mxu0 0.0
  %802 = vmatprep.subr.mxu0 0.0
  %803 = vmatpush1.msra.mxu0 %v761
  %804 = vmatprep.subr.mxu0 0.0
  %805 = vmatpush1.msra.mxu0 %v760
  %806 = vmatprep.subr.mxu0 0.0
  %807 = vmatpush1.msra.mxu0 %v759
  %808 = vmatprep.subr.mxu0 0.0
  %809 = vmatpush1.msra.mxu0 %v758
  %810 = vmatprep.subr.mxu0 0.0
  %811 = vmatpush1.msra.mxu0 %v757
  %812 = vmatprep.subr.mxu0 0.0
  %813 = vmatpush1.msra.mxu0 %v756
  %814 = vmatprep.subr.mxu0 0.0
  %815 = vmatpush1.msra.mxu0 %v755
  %816 = vmatprep.subr.mxu0 0.0
  %817 = vmatpush1.msra.mxu0 %v754
  %818 = vmatprep.subr.mxu0 0.0
  %819 = vmatpush2.msra.mxu0 0.0
  %820 = vmatprep.subr.mxu0 0.0
  %821 = vmatpush2.msra.mxu0 0.0
  %822 = vmatprep.subr.mxu0 0.0
  %823 = vmatpush2.msra.mxu0 0.0
  %824 = vmatprep.subr.mxu0 0.0
  %825 = vmatpush2.msra.mxu0 0.0
  %826 = vmatprep.subr.mxu0 0.0
  %827 = vmatpush2.msra.mxu0 0.0
  %828 = vmatprep.subr.mxu0 0.0
  %829 = vmatpush2.msra.mxu0 0.0
  %830 = vmatprep.subr.mxu0 0.0
  %831 = vmatpush2.msra.mxu0 0.0
  %832 = vmatprep.subr.mxu0 0.0
  %833 = vmatpush2.msra.mxu0 0.0
  %834 = vmatprep.subr.mxu0 0.0
  %835 = vmatpush2.msra.mxu0 0.0
  %836 = vmatprep.subr.mxu0 0.0
  %837 = vmatpush2.msra.mxu0 0.0
  %838 = vmatprep.subr.mxu0 0.0
  %839 = vmatpush2.msra.mxu0 0.0
  %840 = vmatprep.subr.mxu0 0.0
  %841 = vmatpush2.msra.mxu0 0.0
  %842 = vmatprep.subr.mxu0 0.0
  %843 = vmatpush2.msra.mxu0 0.0
  %844 = vmatprep.subr.mxu0 0.0
  %845 = vmatpush2.msra.mxu0 0.0
  %846 = vmatprep.subr.mxu0 0.0
  %847 = vmatpush2.msra.mxu0 0.0
  %848 = vmatprep.subr.mxu0 0.0
  %849 = vmatpush2.msra.mxu0 0.0
  %850 = vmatprep.mubr.f32.mxu0 0.0
  %851 = vmatmul.mubr.f32.gmra.mxu0 %v763
  %v852 = vpop.f32.mrf.mxu0
  %v853 = vadd.f32 0.0, %v852
  %v854 = vpop.f32.mrf.mxu0
  %855 = vmatprep.mubr.f32.mxu0 0.0
  %856 = vmatmul.mubr.f32.gmra.mxu0 %v766
  %v857 = vpop.f32.mrf.mxu0
  %v858 = vadd.f32 0.0, %v857
  %v859 = vpop.f32.mrf.mxu0
  %860 = vmatprep.mubr.f32.mxu0 0.0
  %861 = vmatmul.mubr.f32.gmra.mxu0 %v769
  %v862 = vpop.f32.mrf.mxu0
  %v863 = vadd.f32 0.0, %v862
  %v864 = vpop.f32.mrf.mxu0
  %865 = vmatprep.mubr.f32.mxu0 0.0
  %866 = vmatmul.mubr.f32.gmra.mxu0 %v772
  %v867 = vpop.f32.mrf.mxu0
  %v868 = vadd.f32 0.0, %v867
  %v869 = vpop.f32.mrf.mxu0
  %870 = vmatprep.mubr.f32.mxu0 0.0
  %871 = vmatmul.mubr.f32.gmra.mxu0 %v775
  %v872 = vpop.f32.mrf.mxu0
  %v873 = vadd.f32 0.0, %v872
  %v874 = vpop.f32.mrf.mxu0
  %875 = vmatprep.mubr.f32.mxu0 0.0
  %876 = vmatmul.mubr.f32.gmra.mxu0 %v778
  %v877 = vpop.f32.mrf.mxu0
  %v878 = vadd.f32 0.0, %v877
  %v879 = vpop.f32.mrf.mxu0
  %880 = vmatprep.mubr.f32.mxu0 0.0
  %881 = vmatmul.mubr.f32.gmra.mxu0 %v781
  %v882 = vpop.f32.mrf.mxu0
  %v883 = vadd.f32 0.0, %v882
  %v884 = vpop.f32.mrf.mxu0
  %885 = vmatprep.mubr.f32.mxu0 0.0
  %886 = vmatmul.mubr.f32.gmra.mxu0 %v784
  %v887 = vpop.f32.mrf.mxu0
  %v888 = vadd.f32 0.0, %v887
  %v889 = vpop.f32.mrf.mxu0
  %890 = vdwg.mxu0
  %v892 = vsel %vm493, %v567, 0
  %v895 = vsel %vm493, %v569, 0
  %v898 = vsel %vm493, %v571, 0
  %v901 = vsel %vm493, %v573, 0
  %v904 = vsel %vm493, %v575, 0
  %v907 = vsel %vm493, %v577, 0
  %v910 = vsel %vm493, %v579, 0
  %v913 = vsel %vm493, %v581, 0
  %915 = vmatprep.subr.mxu0 0.0
  %916 = vmatpush1.msra.mxu0 0.0
  %917 = vmatprep.subr.mxu0 0.0
  %918 = vmatpush1.msra.mxu0 0.0
  %919 = vmatprep.subr.mxu0 0.0
  %920 = vmatpush1.msra.mxu0 0.0
  %921 = vmatprep.subr.mxu0 0.0
  %922 = vmatpush1.msra.mxu0 0.0
  %923 = vmatprep.subr.mxu0 0.0
  %924 = vmatpush1.msra.mxu0 0.0
  %925 = vmatprep.subr.mxu0 0.0
  %926 = vmatpush1.msra.mxu0 0.0
  %927 = vmatprep.subr.mxu0 0.0
  %928 = vmatpush1.msra.mxu0 0.0
  %929 = vmatprep.subr.mxu0 0.0
  %930 = vmatpush1.msra.mxu0 0.0
  %931 = vmatprep.subr.mxu0 0.0
  %932 = vmatpush1.msra.mxu0 %v593
  %933 = vmatprep.subr.mxu0 0.0
  %934 = vmatpush1.msra.mxu0 %v592
  %935 = vmatprep.subr.mxu0 0.0
  %936 = vmatpush1.msra.mxu0 %v591
  %937 = vmatprep.subr.mxu0 0.0
  %938 = vmatpush1.msra.mxu0 %v590
  %939 = vmatprep.subr.mxu0 0.0
  %940 = vmatpush1.msra.mxu0 %v589
  %941 = vmatprep.subr.mxu0 0.0
  %942 = vmatpush1.msra.mxu0 %v588
  %943 = vmatprep.subr.mxu0 0.0
  %944 = vmatpush1.msra.mxu0 %v587
  %945 = vmatprep.subr.mxu0 0.0
  %946 = vmatpush1.msra.mxu0 %v586
  %947 = vmatprep.subr.mxu0 0.0
  %948 = vmatpush2.msra.mxu0 0.0
  %949 = vmatprep.subr.mxu0 0.0
  %950 = vmatpush2.msra.mxu0 0.0
  %951 = vmatprep.subr.mxu0 0.0
  %952 = vmatpush2.msra.mxu0 0.0
  %953 = vmatprep.subr.mxu0 0.0
  %954 = vmatpush2.msra.mxu0 0.0
  %955 = vmatprep.subr.mxu0 0.0
  %956 = vmatpush2.msra.mxu0 0.0
  %957 = vmatprep.subr.mxu0 0.0
  %958 = vmatpush2.msra.mxu0 0.0
  %959 = vmatprep.subr.mxu0 0.0
  %960 = vmatpush2.msra.mxu0 0.0
  %961 = vmatprep.subr.mxu0 0.0
  %962 = vmatpush2.msra.mxu0 0.0
  %963 = vmatprep.subr.mxu0 0.0
  %964 = vmatpush2.msra.mxu0 0.0
  %965 = vmatprep.subr.mxu0 0.0
  %966 = vmatpush2.msra.mxu0 0.0
  %967 = vmatprep.subr.mxu0 0.0
  %968 = vmatpush2.msra.mxu0 0.0
  %969 = vmatprep.subr.mxu0 0.0
  %970 = vmatpush2.msra.mxu0 0.0
  %971 = vmatprep.subr.mxu0 0.0
  %972 = vmatpush2.msra.mxu0 0.0
  %973 = vmatprep.subr.mxu0 0.0
  %974 = vmatpush2.msra.mxu0 0.0
  %975 = vmatprep.subr.mxu0 0.0
  %976 = vmatpush2.msra.mxu0 0.0
  %977 = vmatprep.subr.mxu0 0.0
  %978 = vmatpush2.msra.mxu0 0.0
  %979 = vmatprep.mubr.f32.mxu0 0.0
  %980 = vmatmul.mubr.f32.gmra.mxu0 %v892
  %v981 = vpop.f32.mrf.mxu0
  %v982 = vadd.f32 %v853, %v981
  %v983 = vpop.f32.mrf.mxu0
  %984 = vmatprep.mubr.f32.mxu0 0.0
  %985 = vmatmul.mubr.f32.gmra.mxu0 %v895
  %v986 = vpop.f32.mrf.mxu0
  %v987 = vadd.f32 %v858, %v986
  %v988 = vpop.f32.mrf.mxu0
  %989 = vmatprep.mubr.f32.mxu0 0.0
  %990 = vmatmul.mubr.f32.gmra.mxu0 %v898
  %v991 = vpop.f32.mrf.mxu0
  %v992 = vadd.f32 %v863, %v991
  %v993 = vpop.f32.mrf.mxu0
  %994 = vmatprep.mubr.f32.mxu0 0.0
  %995 = vmatmul.mubr.f32.gmra.mxu0 %v901
  %v996 = vpop.f32.mrf.mxu0
  %v997 = vadd.f32 %v868, %v996
  %v998 = vpop.f32.mrf.mxu0
  %999 = vmatprep.mubr.f32.mxu0 0.0
  %1000 = vmatmul.mubr.f32.gmra.mxu0 %v904
  %v1001 = vpop.f32.mrf.mxu0
  %v1002 = vadd.f32 %v873, %v1001
  %v1003 = vpop.f32.mrf.mxu0
  %1004 = vmatprep.mubr.f32.mxu0 0.0
  %1005 = vmatmul.mubr.f32.gmra.mxu0 %v907
  %v1006 = vpop.f32.mrf.mxu0
  %v1007 = vadd.f32 %v878, %v1006
  %v1008 = vpop.f32.mrf.mxu0
  %1009 = vmatprep.mubr.f32.mxu0 0.0
  %1010 = vmatmul.mubr.f32.gmra.mxu0 %v910
  %v1011 = vpop.f32.mrf.mxu0
  %v1012 = vadd.f32 %v883, %v1011
  %v1013 = vpop.f32.mrf.mxu0
  %1014 = vmatprep.mubr.f32.mxu0 0.0
  %1015 = vmatmul.mubr.f32.gmra.mxu0 %v913
  %v1016 = vpop.f32.mrf.mxu0
  %v1017 = vadd.f32 %v888, %v1016
  %v1018 = vpop.f32.mrf.mxu0
  %1019 = vdwg.mxu0
  %v1020 = vld [vmem:[%s6] sm:$0x1]
  %v1022 = vlaneseq
  %v1023 = vshrl.u32 %v1022, 7
  %v1024 = vsub.s32 0, %v1023
  %v1025 = vrot.slane %v1020, %v1024
  %v1027 = vadd.f32 %v982, %v1025
  %v1028 = vadd.f32 %v987, %v1025
  %v1029 = vadd.f32 %v992, %v1025
  %v1030 = vadd.f32 %v997, %v1025
  %v1031 = vadd.f32 %v1002, %v1025
  %v1032 = vadd.f32 %v1007, %v1025
  %v1033 = vadd.f32 %v1012, %v1025
  %v1034 = vadd.f32 %v1017, %v1025
  %v1035 = vmax.f32 %v1027, 0.0
  %v1036 = vmax.f32 %v1028, 0.0
  %v1037 = vmax.f32 %v1029, 0.0
  %v1038 = vmax.f32 %v1030, 0.0
  %v1039 = vmax.f32 %v1031, 0.0
  %v1040 = vmax.f32 %v1032, 0.0
  %v1041 = vmax.f32 %v1033, 0.0
  %v1042 = vmax.f32 %v1034, 0.0
  %v1043 = vld [vmem:[%s8] sm:$0xff]
  %v1044 = vld [vmem:[%s8 + $0x8] sm:$0xff]
  %v1046 = vsel %vm212, %v1035, 0
  %v1049 = vsel %vm212, %v1036, 0
  %v1052 = vsel %vm212, %v1037, 0
  %v1055 = vsel %vm212, %v1038, 0
  %v1058 = vsel %vm212, %v1039, 0
  %v1061 = vsel %vm212, %v1040, 0
  %v1064 = vsel %vm212, %v1041, 0
  %v1067 = vsel %vm212, %v1042, 0
  %1069 = vmatprep.subr.mxu0 0.0
  %1070 = vmatpush1.msra.mxu0 0.0
  %1071 = vmatprep.subr.mxu0 0.0
  %1072 = vmatpush1.msra.mxu0 0.0
  %1073 = vmatprep.subr.mxu0 0.0
  %1074 = vmatpush1.msra.mxu0 0.0
  %1075 = vmatprep.subr.mxu0 0.0
  %1076 = vmatpush1.msra.mxu0 0.0
  %1077 = vmatprep.subr.mxu0 0.0
  %1078 = vmatpush1.msra.mxu0 0.0
  %1079 = vmatprep.subr.mxu0 0.0
  %1080 = vmatpush1.msra.mxu0 0.0
  %1081 = vmatprep.subr.mxu0 0.0
  %1082 = vmatpush1.msra.mxu0 0.0
  %1083 = vmatprep.subr.mxu0 0.0
  %1084 = vmatpush1.msra.mxu0 0.0
  %1085 = vmatprep.subr.mxu0 0.0
  %1086 = vmatpush1.msra.mxu0 0.0
  %1087 = vmatprep.subr.mxu0 0.0
  %1088 = vmatpush1.msra.mxu0 0.0
  %1089 = vmatprep.subr.mxu0 0.0
  %1090 = vmatpush1.msra.mxu0 0.0
  %1091 = vmatprep.subr.mxu0 0.0
  %1092 = vmatpush1.msra.mxu0 0.0
  %1093 = vmatprep.subr.mxu0 0.0
  %1094 = vmatpush1.msra.mxu0 0.0
  %1095 = vmatprep.subr.mxu0 0.0
  %1096 = vmatpush1.msra.mxu0 0.0
  %1097 = vmatprep.subr.mxu0 0.0
  %1098 = vmatpush1.msra.mxu0 %v1044
  %1099 = vmatprep.subr.mxu0 0.0
  %1100 = vmatpush1.msra.mxu0 %v1043
  %1101 = vmatprep.subr.mxu0 0.0
  %1102 = vmatpush2.msra.mxu0 0.0
  %1103 = vmatprep.subr.mxu0 0.0
  %1104 = vmatpush2.msra.mxu0 0.0
  %1105 = vmatprep.subr.mxu0 0.0
  %1106 = vmatpush2.msra.mxu0 0.0
  %1107 = vmatprep.subr.mxu0 0.0
  %1108 = vmatpush2.msra.mxu0 0.0
  %1109 = vmatprep.subr.mxu0 0.0
  %1110 = vmatpush2.msra.mxu0 0.0
  %1111 = vmatprep.subr.mxu0 0.0
  %1112 = vmatpush2.msra.mxu0 0.0
  %1113 = vmatprep.subr.mxu0 0.0
  %1114 = vmatpush2.msra.mxu0 0.0
  %1115 = vmatprep.subr.mxu0 0.0
  %1116 = vmatpush2.msra.mxu0 0.0
  %1117 = vmatprep.subr.mxu0 0.0
  %1118 = vmatpush2.msra.mxu0 0.0
  %1119 = vmatprep.subr.mxu0 0.0
  %1120 = vmatpush2.msra.mxu0 0.0
  %1121 = vmatprep.subr.mxu0 0.0
  %1122 = vmatpush2.msra.mxu0 0.0
  %1123 = vmatprep.subr.mxu0 0.0
  %1124 = vmatpush2.msra.mxu0 0.0
  %1125 = vmatprep.subr.mxu0 0.0
  %1126 = vmatpush2.msra.mxu0 0.0
  %1127 = vmatprep.subr.mxu0 0.0
  %1128 = vmatpush2.msra.mxu0 0.0
  %1129 = vmatprep.subr.mxu0 0.0
  %1130 = vmatpush2.msra.mxu0 0.0
  %1131 = vmatprep.subr.mxu0 0.0
  %1132 = vmatpush2.msra.mxu0 0.0
  %1133 = vmatprep.mubr.f32.mxu0 0.0
  %1134 = vmatmul.mubr.f32.gmra.mxu0 %v1046
  %v1135 = vpop.f32.mrf.mxu0
  %v1136 = vadd.f32 0.0, %v1135
  %v1137 = vpop.f32.mrf.mxu0
  %1138 = vmatprep.mubr.f32.mxu0 0.0
  %1139 = vmatmul.mubr.f32.gmra.mxu0 %v1049
  %v1140 = vpop.f32.mrf.mxu0
  %v1141 = vadd.f32 0.0, %v1140
  %v1142 = vpop.f32.mrf.mxu0
  %1143 = vmatprep.mubr.f32.mxu0 0.0
  %1144 = vmatmul.mubr.f32.gmra.mxu0 %v1052
  %v1145 = vpop.f32.mrf.mxu0
  %v1146 = vadd.f32 0.0, %v1145
  %v1147 = vpop.f32.mrf.mxu0
  %1148 = vmatprep.mubr.f32.mxu0 0.0
  %1149 = vmatmul.mubr.f32.gmra.mxu0 %v1055
  %v1150 = vpop.f32.mrf.mxu0
  %v1151 = vadd.f32 0.0, %v1150
  %v1152 = vpop.f32.mrf.mxu0
  %1153 = vmatprep.mubr.f32.mxu0 0.0
  %1154 = vmatmul.mubr.f32.gmra.mxu0 %v1058
  %v1155 = vpop.f32.mrf.mxu0
  %v1156 = vadd.f32 0.0, %v1155
  %v1157 = vpop.f32.mrf.mxu0
  %1158 = vmatprep.mubr.f32.mxu0 0.0
  %1159 = vmatmul.mubr.f32.gmra.mxu0 %v1061
  %v1160 = vpop.f32.mrf.mxu0
  %v1161 = vadd.f32 0.0, %v1160
  %v1162 = vpop.f32.mrf.mxu0
  %1163 = vmatprep.mubr.f32.mxu0 0.0
  %1164 = vmatmul.mubr.f32.gmra.mxu0 %v1064
  %v1165 = vpop.f32.mrf.mxu0
  %v1166 = vadd.f32 0.0, %v1165
  %v1167 = vpop.f32.mrf.mxu0
  %1168 = vmatprep.mubr.f32.mxu0 0.0
  %1169 = vmatmul.mubr.f32.gmra.mxu0 %v1067
  %v1170 = vpop.f32.mrf.mxu0
  %v1171 = vadd.f32 0.0, %v1170
  %v1172 = vpop.f32.mrf.mxu0
  %1173 = vdwg.mxu0
  %v1174 = vld [vmem:[%s10] sm:$0xff]
  %v1175 = vld [vmem:[%s10 + $0x8] sm:$0xff]
  %v1177 = vsel %vm212, %v1136, 0
  %v1180 = vsel %vm212, %v1141, 0
  %v1183 = vsel %vm212, %v1146, 0
  %v1186 = vsel %vm212, %v1151, 0
  %v1189 = vsel %vm212, %v1156, 0
  %v1192 = vsel %vm212, %v1161, 0
  %v1195 = vsel %vm212, %v1166, 0
  %v1198 = vsel %vm212, %v1171, 0
  %1200 = vmatprep.subr.mxu0 0.0
  %1201 = vmatpush1.msra.mxu0 0.0
  %1202 = vmatprep.subr.mxu0 0.0
  %1203 = vmatpush1.msra.mxu0 0.0
  %1204 = vmatprep.subr.mxu0 0.0
  %1205 = vmatpush1.msra.mxu0 0.0
  %1206 = vmatprep.subr.mxu0 0.0
  %1207 = vmatpush1.msra.mxu0 0.0
  %1208 = vmatprep.subr.mxu0 0.0
  %1209 = vmatpush1.msra.mxu0 0.0
  %1210 = vmatprep.subr.mxu0 0.0
  %1211 = vmatpush1.msra.mxu0 0.0
  %1212 = vmatprep.subr.mxu0 0.0
  %1213 = vmatpush1.msra.mxu0 0.0
  %1214 = vmatprep.subr.mxu0 0.0
  %1215 = vmatpush1.msra.mxu0 0.0
  %1216 = vmatprep.subr.mxu0 0.0
  %1217 = vmatpush1.msra.mxu0 0.0
  %1218 = vmatprep.subr.mxu0 0.0
  %1219 = vmatpush1.msra.mxu0 0.0
  %1220 = vmatprep.subr.mxu0 0.0
  %1221 = vmatpush1.msra.mxu0 0.0
  %1222 = vmatprep.subr.mxu0 0.0
  %1223 = vmatpush1.msra.mxu0 0.0
  %1224 = vmatprep.subr.mxu0 0.0
  %1225 = vmatpush1.msra.mxu0 0.0
  %1226 = vmatprep.subr.mxu0 0.0
  %1227 = vmatpush1.msra.mxu0 0.0
  %1228 = vmatprep.subr.mxu0 0.0
  %1229 = vmatpush1.msra.mxu0 %v1175
  %1230 = vmatprep.subr.mxu0 0.0
  %1231 = vmatpush1.msra.mxu0 %v1174
  %1232 = vmatprep.subr.mxu0 0.0
  %1233 = vmatpush2.msra.mxu0 0.0
  %1234 = vmatprep.subr.mxu0 0.0
  %1235 = vmatpush2.msra.mxu0 0.0
  %1236 = vmatprep.subr.mxu0 0.0
  %1237 = vmatpush2.msra.mxu0 0.0
  %1238 = vmatprep.subr.mxu0 0.0
  %1239 = vmatpush2.msra.mxu0 0.0
  %1240 = vmatprep.subr.mxu0 0.0
  %1241 = vmatpush2.msra.mxu0 0.0
  %1242 = vmatprep.subr.mxu0 0.0
  %1243 = vmatpush2.msra.mxu0 0.0
  %1244 = vmatprep.subr.mxu0 0.0
  %1245 = vmatpush2.msra.mxu0 0.0
  %1246 = vmatprep.subr.mxu0 0.0
  %1247 = vmatpush2.msra.mxu0 0.0
  %1248 = vmatprep.subr.mxu0 0.0
  %1249 = vmatpush2.msra.mxu0 0.0
  %1250 = vmatprep.subr.mxu0 0.0
  %1251 = vmatpush2.msra.mxu0 0.0
  %1252 = vmatprep.subr.mxu0 0.0
  %1253 = vmatpush2.msra.mxu0 0.0
  %1254 = vmatprep.subr.mxu0 0.0
  %1255 = vmatpush2.msra.mxu0 0.0
  %1256 = vmatprep.subr.mxu0 0.0
  %1257 = vmatpush2.msra.mxu0 0.0
  %1258 = vmatprep.subr.mxu0 0.0
  %1259 = vmatpush2.msra.mxu0 0.0
  %1260 = vmatprep.subr.mxu0 0.0
  %1261 = vmatpush2.msra.mxu0 0.0
  %1262 = vmatprep.subr.mxu0 0.0
  %1263 = vmatpush2.msra.mxu0 0.0
  %1264 = vmatprep.mubr.f32.mxu0 0.0
  %1265 = vmatmul.mubr.f32.gmra.mxu0 %v1177
  %v1266 = vpop.f32.mrf.mxu0
  %v1267 = vadd.f32 0.0, %v1266
  %v1268 = vpop.f32.mrf.mxu0
  %1269 = vmatprep.mubr.f32.mxu0 0.0
  %1270 = vmatmul.mubr.f32.gmra.mxu0 %v1180
  %v1271 = vpop.f32.mrf.mxu0
  %v1272 = vadd.f32 0.0, %v1271
  %v1273 = vpop.f32.mrf.mxu0
  %1274 = vmatprep.mubr.f32.mxu0 0.0
  %1275 = vmatmul.mubr.f32.gmra.mxu0 %v1183
  %v1276 = vpop.f32.mrf.mxu0
  %v1277 = vadd.f32 0.0, %v1276
  %v1278 = vpop.f32.mrf.mxu0
  %1279 = vmatprep.mubr.f32.mxu0 0.0
  %1280 = vmatmul.mubr.f32.gmra.mxu0 %v1186
  %v1281 = vpop.f32.mrf.mxu0
  %v1282 = vadd.f32 0.0, %v1281
  %v1283 = vpop.f32.mrf.mxu0
  %1284 = vmatprep.mubr.f32.mxu0 0.0
  %1285 = vmatmul.mubr.f32.gmra.mxu0 %v1189
  %v1286 = vpop.f32.mrf.mxu0
  %v1287 = vadd.f32 0.0, %v1286
  %v1288 = vpop.f32.mrf.mxu0
  %1289 = vmatprep.mubr.f32.mxu0 0.0
  %1290 = vmatmul.mubr.f32.gmra.mxu0 %v1192
  %v1291 = vpop.f32.mrf.mxu0
  %v1292 = vadd.f32 0.0, %v1291
  %v1293 = vpop.f32.mrf.mxu0
  %1294 = vmatprep.mubr.f32.mxu0 0.0
  %1295 = vmatmul.mubr.f32.gmra.mxu0 %v1195
  %v1296 = vpop.f32.mrf.mxu0
  %v1297 = vadd.f32 0.0, %v1296
  %v1298 = vpop.f32.mrf.mxu0
  %1299 = vmatprep.mubr.f32.mxu0 0.0
  %1300 = vmatmul.mubr.f32.gmra.mxu0 %v1198
  %v1301 = vpop.f32.mrf.mxu0
  %v1302 = vadd.f32 0.0, %v1301
  %v1303 = vpop.f32.mrf.mxu0
  %1304 = vdwg.mxu0
  %v1305 = vld [vmem:[%s9] sm:$0x3]
  %v1307 = vsel %vm212, %v1305, 0
  %1309 = vmatprep.subr.mxu0 0.0
  %1310 = vmatpush1.xpose.msra.mxu0 0.0
  %1311 = vmatprep.subr.mxu0 0.0
  %1312 = vmatpush1.xpose.msra.mxu0 0.0
  %1313 = vmatprep.subr.mxu0 0.0
  %1314 = vmatpush1.xpose.msra.mxu0 0.0
  %1315 = vmatprep.subr.mxu0 0.0
  %1316 = vmatpush1.xpose.msra.mxu0 0.0
  %1317 = vmatprep.subr.mxu0 0.0
  %1318 = vmatpush1.xpose.msra.mxu0 0.0
  %1319 = vmatprep.subr.mxu0 0.0
  %1320 = vmatpush1.xpose.msra.mxu0 0.0
  %1321 = vmatprep.subr.mxu0 0.0
  %1322 = vmatpush1.xpose.msra.mxu0 0.0
  %1323 = vmatprep.subr.mxu0 0.0
  %1324 = vmatpush1.xpose.msra.mxu0 0.0
  %1325 = vmatprep.subr.mxu0 0.0
  %1326 = vmatpush1.xpose.msra.mxu0 %v1198
  %1327 = vmatprep.subr.mxu0 0.0
  %1328 = vmatpush1.xpose.msra.mxu0 %v1195
  %1329 = vmatprep.subr.mxu0 0.0
  %1330 = vmatpush1.xpose.msra.mxu0 %v1192
  %1331 = vmatprep.subr.mxu0 0.0
  %1332 = vmatpush1.xpose.msra.mxu0 %v1189
  %1333 = vmatprep.subr.mxu0 0.0
  %1334 = vmatpush1.xpose.msra.mxu0 %v1186
  %1335 = vmatprep.subr.mxu0 0.0
  %1336 = vmatpush1.xpose.msra.mxu0 %v1183
  %1337 = vmatprep.subr.mxu0 0.0
  %1338 = vmatpush1.xpose.msra.mxu0 %v1180
  %1339 = vmatprep.subr.mxu0 0.0
  %1340 = vmatpush1.xpose.msra.mxu0 %v1177
  %1341 = vmatprep.subr.mxu0 0.0
  %1342 = vmatpush2.xpose.msra.mxu0 0.0
  %1343 = vmatprep.subr.mxu0 0.0
  %1344 = vmatpush2.xpose.msra.mxu0 0.0
  %1345 = vmatprep.subr.mxu0 0.0
  %1346 = vmatpush2.xpose.msra.mxu0 0.0
  %1347 = vmatprep.subr.mxu0 0.0
  %1348 = vmatpush2.xpose.msra.mxu0 0.0
  %1349 = vmatprep.subr.mxu0 0.0
  %1350 = vmatpush2.xpose.msra.mxu0 0.0
  %1351 = vmatprep.subr.mxu0 0.0
  %1352 = vmatpush2.xpose.msra.mxu0 0.0
  %1353 = vmatprep.subr.mxu0 0.0
  %1354 = vmatpush2.xpose.msra.mxu0 0.0
  %1355 = vmatprep.subr.mxu0 0.0
  %1356 = vmatpush2.xpose.msra.mxu0 0.0
  %1357 = vmatprep.subr.mxu0 0.0
  %1358 = vmatpush2.xpose.msra.mxu0 0.0
  %1359 = vmatprep.subr.mxu0 0.0
  %1360 = vmatpush2.xpose.msra.mxu0 0.0
  %1361 = vmatprep.subr.mxu0 0.0
  %1362 = vmatpush2.xpose.msra.mxu0 0.0
  %1363 = vmatprep.subr.mxu0 0.0
  %1364 = vmatpush2.xpose.msra.mxu0 0.0
  %1365 = vmatprep.subr.mxu0 0.0
  %1366 = vmatpush2.xpose.msra.mxu0 0.0
  %1367 = vmatprep.subr.mxu0 0.0
  %1368 = vmatpush2.xpose.msra.mxu0 0.0
  %1369 = vmatprep.subr.mxu0 0.0
  %1370 = vmatpush2.xpose.msra.mxu0 0.0
  %1371 = vmatprep.subr.mxu0 0.0
  %1372 = vmatpush2.xpose.msra.mxu0 0.0
  %1373 = vmatprep.mubr.f32.mxu0 0.0
  %1374 = vmatmul.mubr.f32.gmra.mxu0 %v1307
  %v1375 = vpop.f32.mrf.mxu0
  %v1376 = vadd.f32 0.0, %v1375
  %v1377 = vpop.f32.mrf.mxu0
  %1378 = vdwg.mxu0
  %v1379 = vld [vmem:[%s12] sm:$0x3]
  %1381 = vset.pattern.permute.xlu0 0
  %1382 = vperm.xlu0 %1381, %v1267
  %v1383 = vpop.permute.xlu0 %1382
  %1386 = vset.pattern.permute.xlu0 0
  %1387 = vperm.xlu0 %1386, %v1272
  %v1388 = vpop.permute.xlu0 %1387
  %1391 = vset.pattern.permute.xlu0 0
  %1392 = vperm.xlu0 %1391, %v1277
  %v1393 = vpop.permute.xlu0 %1392
  %1396 = vset.pattern.permute.xlu0 0
  %1397 = vperm.xlu0 %1396, %v1282
  %v1398 = vpop.permute.xlu0 %1397
  %1401 = vset.pattern.permute.xlu0 0
  %1402 = vperm.xlu0 %1401, %v1287
  %v1403 = vpop.permute.xlu0 %1402
  %1406 = vset.pattern.permute.xlu0 0
  %1407 = vperm.xlu0 %1406, %v1292
  %v1408 = vpop.permute.xlu0 %1407
  %1411 = vset.pattern.permute.xlu0 0
  %1412 = vperm.xlu0 %1411, %v1297
  %v1413 = vpop.permute.xlu0 %1412
  %1416 = vset.pattern.permute.xlu0 0
  %1417 = vperm.xlu0 %1416, %v1302
  %v1418 = vpop.permute.xlu0 %1417
  %v1420 = vlaneseq
  %v1421 = vshrl.u32 %v1420, 7
  %v1422 = vsub.s32 0, %v1421
  %v1423 = vrot.slane %v1376, %v1422
  %v1424 = vadd.f32 %v1383, %v1423
  %v1425 = vadd.f32 %v1388, %v1423
  %v1426 = vadd.f32 %v1393, %v1423
  %v1427 = vadd.f32 %v1398, %v1423
  %v1428 = vadd.f32 %v1403, %v1423
  %v1429 = vadd.f32 %v1408, %v1423
  %v1430 = vadd.f32 %v1413, %v1423
  %v1431 = vadd.f32 %v1418, %v1423
  %v1432 = vmul.f32 %v1424, 0.2
  %v1433 = vmul.f32 %v1425, 0.2
  %v1434 = vmul.f32 %v1426, 0.2
  %v1435 = vmul.f32 %v1427, 0.2
  %v1436 = vmul.f32 %v1428, 0.2
  %v1437 = vmul.f32 %v1429, 0.2
  %v1438 = vmul.f32 %v1430, 0.2
  %v1439 = vmul.f32 %v1431, 0.2
  %v1440 = vmax.f32 %v1424, %v1432
  %v1441 = vmax.f32 %v1425, %v1433
  %v1442 = vmax.f32 %v1426, %v1434
  %v1443 = vmax.f32 %v1427, %v1435
  %v1444 = vmax.f32 %v1428, %v1436
  %v1445 = vmax.f32 %v1429, %v1437
  %v1446 = vmax.f32 %v1430, %v1438
  %v1447 = vmax.f32 %v1431, %v1439
  %v1448 = vadd.f32 %v1440, %v67
  %v1449 = vadd.f32 %v1441, %v68
  %v1450 = vadd.f32 %v1442, %v69
  %v1451 = vadd.f32 %v1443, %v70
  %v1452 = vadd.f32 %v1444, %v71
  %v1453 = vadd.f32 %v1445, %v72
  %v1454 = vadd.f32 %v1446, %v73
  %v1455 = vadd.f32 %v1447, %v74
  %v1456 = vsel %vm493, %v1448, -inf
  %1457 = vmax.xlane.f32.xlu0 %v1456
  %v1458 = vpop.xlane.xlu0 %1457
  %v1459 = vsel %vm493, %v1449, -inf
  %1460 = vmax.xlane.f32.xlu0 %v1459
  %v1461 = vpop.xlane.xlu0 %1460
  %v1462 = vsel %vm493, %v1450, -inf
  %1463 = vmax.xlane.f32.xlu0 %v1462
  %v1464 = vpop.xlane.xlu0 %1463
  %v1465 = vsel %vm493, %v1451, -inf
  %1466 = vmax.xlane.f32.xlu0 %v1465
  %v1467 = vpop.xlane.xlu0 %1466
  %v1468 = vsel %vm493, %v1452, -inf
  %1469 = vmax.xlane.f32.xlu0 %v1468
  %v1470 = vpop.xlane.xlu0 %1469
  %v1471 = vsel %vm493, %v1453, -inf
  %1472 = vmax.xlane.f32.xlu0 %v1471
  %v1473 = vpop.xlane.xlu0 %1472
  %v1474 = vsel %vm493, %v1454, -inf
  %1475 = vmax.xlane.f32.xlu0 %v1474
  %v1476 = vpop.xlane.xlu0 %1475
  %v1477 = vsel %vm493, %v1455, -inf
  %1478 = vmax.xlane.f32.xlu0 %v1477
  %v1479 = vpop.xlane.xlu0 %1478
  %v1480 = vsub.f32 %v1448, %v1458
  %v1481 = vsub.f32 %v1449, %v1461
  %v1482 = vsub.f32 %v1450, %v1464
  %v1483 = vsub.f32 %v1451, %v1467
  %v1484 = vsub.f32 %v1452, %v1470
  %v1485 = vsub.f32 %v1453, %v1473
  %v1486 = vsub.f32 %v1454, %v1476
  %v1487 = vsub.f32 %v1455, %v1479
  %v1488 = vmul.f32 %v1480, 1.442695
  %v1489 = vpow.pop %v1488
  %v1490 = vmul.f32 %v1481, 1.442695
  %v1491 = vpow.pop %v1490
  %v1492 = vmul.f32 %v1482, 1.442695
  %v1493 = vpow.pop %v1492
  %v1494 = vmul.f32 %v1483, 1.442695
  %v1495 = vpow.pop %v1494
  %v1496 = vmul.f32 %v1484, 1.442695
  %v1497 = vpow.pop %v1496
  %v1498 = vmul.f32 %v1485, 1.442695
  %v1499 = vpow.pop %v1498
  %v1500 = vmul.f32 %v1486, 1.442695
  %v1501 = vpow.pop %v1500
  %v1502 = vmul.f32 %v1487, 1.442695
  %v1503 = vpow.pop %v1502
  %v1504 = vsel %vm493, %v1489, 0.0
  %1505 = vadd.xlane.f32.xlu0 %v1504
  %v1506 = vpop.xlane.xlu0 %1505
  %v1507 = vsel %vm493, %v1491, 0.0
  %1508 = vadd.xlane.f32.xlu0 %v1507
  %v1509 = vpop.xlane.xlu0 %1508
  %v1510 = vsel %vm493, %v1493, 0.0
  %1511 = vadd.xlane.f32.xlu0 %v1510
  %v1512 = vpop.xlane.xlu0 %1511
  %v1513 = vsel %vm493, %v1495, 0.0
  %1514 = vadd.xlane.f32.xlu0 %v1513
  %v1515 = vpop.xlane.xlu0 %1514
  %v1516 = vsel %vm493, %v1497, 0.0
  %1517 = vadd.xlane.f32.xlu0 %v1516
  %v1518 = vpop.xlane.xlu0 %1517
  %v1519 = vsel %vm493, %v1499, 0.0
  %1520 = vadd.xlane.f32.xlu0 %v1519
  %v1521 = vpop.xlane.xlu0 %1520
  %v1522 = vsel %vm493, %v1501, 0.0
  %1523 = vadd.xlane.f32.xlu0 %v1522
  %v1524 = vpop.xlane.xlu0 %1523
  %v1525 = vsel %vm493, %v1503, 0.0
  %1526 = vadd.xlane.f32.xlu0 %v1525
  %v1527 = vpop.xlane.xlu0 %1526
  %v1528 = vrcp.pop %v1506
  %v1529 = vmul.f32 %v1489, %v1528
  %v1530 = vrcp.pop %v1509
  %v1531 = vmul.f32 %v1491, %v1530
  %v1532 = vrcp.pop %v1512
  %v1533 = vmul.f32 %v1493, %v1532
  %v1534 = vrcp.pop %v1515
  %v1535 = vmul.f32 %v1495, %v1534
  %v1536 = vrcp.pop %v1518
  %v1537 = vmul.f32 %v1497, %v1536
  %v1538 = vrcp.pop %v1521
  %v1539 = vmul.f32 %v1499, %v1538
  %v1540 = vrcp.pop %v1524
  %v1541 = vmul.f32 %v1501, %v1540
  %v1542 = vrcp.pop %v1527
  %v1543 = vmul.f32 %v1503, %v1542
  %v1544 = vlaneseq
  %v1545 = vshrl.u32 %v1544, 7
  %v1546 = vsub.s32 0, %v1545
  %v1547 = vrot.slane %v1379, %v1546
  %v1548 = vmul.f32 %v1136, %v1547
  %v1549 = vmul.f32 %v1141, %v1547
  %v1550 = vmul.f32 %v1146, %v1547
  %v1551 = vmul.f32 %v1151, %v1547
  %v1552 = vmul.f32 %v1156, %v1547
  %v1553 = vmul.f32 %v1161, %v1547
  %v1554 = vmul.f32 %v1166, %v1547
  %v1555 = vmul.f32 %v1171, %v1547
  %1556 = vset.pattern.permute.xlu0 1
  %1557 = vperm.xlu0 %1556, %v1267
  %v1558 = vpop.permute.xlu0 %1557
  %1560 = vset.pattern.permute.xlu0 1
  %1561 = vperm.xlu0 %1560, %v1272
  %v1562 = vpop.permute.xlu0 %1561
  %1564 = vset.pattern.permute.xlu0 1
  %1565 = vperm.xlu0 %1564, %v1277
  %v1566 = vpop.permute.xlu0 %1565
  %1568 = vset.pattern.permute.xlu0 1
  %1569 = vperm.xlu0 %1568, %v1282
  %v1570 = vpop.permute.xlu0 %1569
  %1572 = vset.pattern.permute.xlu0 1
  %1573 = vperm.xlu0 %1572, %v1287
  %v1574 = vpop.permute.xlu0 %1573
  %1576 = vset.pattern.permute.xlu0 1
  %1577 = vperm.xlu0 %1576, %v1292
  %v1578 = vpop.permute.xlu0 %1577
  %1580 = vset.pattern.permute.xlu0 1
  %1581 = vperm.xlu0 %1580, %v1297
  %v1582 = vpop.permute.xlu0 %1581
  %1584 = vset.pattern.permute.xlu0 1
  %1585 = vperm.xlu0 %1584, %v1302
  %v1586 = vpop.permute.xlu0 %1585
  %v1588 = vlaneseq
  %v1589 = vshrl.u32 %v1588, 7
  %v1590 = vsub.s32 1, %v1589
  %v1591 = vrot.slane %v1376, %v1590
  %v1592 = vadd.f32 %v1558, %v1591
  %v1593 = vadd.f32 %v1562, %v1591
  %v1594 = vadd.f32 %v1566, %v1591
  %v1595 = vadd.f32 %v1570, %v1591
  %v1596 = vadd.f32 %v1574, %v1591
  %v1597 = vadd.f32 %v1578, %v1591
  %v1598 = vadd.f32 %v1582, %v1591
  %v1599 = vadd.f32 %v1586, %v1591
  %v1600 = vmul.f32 %v1592, 0.2
  %v1601 = vmul.f32 %v1593, 0.2
  %v1602 = vmul.f32 %v1594, 0.2
  %v1603 = vmul.f32 %v1595, 0.2
  %v1604 = vmul.f32 %v1596, 0.2
  %v1605 = vmul.f32 %v1597, 0.2
  %v1606 = vmul.f32 %v1598, 0.2
  %v1607 = vmul.f32 %v1599, 0.2
  %v1608 = vmax.f32 %v1592, %v1600
  %v1609 = vmax.f32 %v1593, %v1601
  %v1610 = vmax.f32 %v1594, %v1602
  %v1611 = vmax.f32 %v1595, %v1603
  %v1612 = vmax.f32 %v1596, %v1604
  %v1613 = vmax.f32 %v1597, %v1605
  %v1614 = vmax.f32 %v1598, %v1606
  %v1615 = vmax.f32 %v1599, %v1607
  %v1616 = vadd.f32 %v1608, %v67
  %v1617 = vadd.f32 %v1609, %v68
  %v1618 = vadd.f32 %v1610, %v69
  %v1619 = vadd.f32 %v1611, %v70
  %v1620 = vadd.f32 %v1612, %v71
  %v1621 = vadd.f32 %v1613, %v72
  %v1622 = vadd.f32 %v1614, %v73
  %v1623 = vadd.f32 %v1615, %v74
  %v1624 = vsel %vm493, %v1616, -inf
  %1625 = vmax.xlane.f32.xlu0 %v1624
  %v1626 = vpop.xlane.xlu0 %1625
  %v1627 = vsel %vm493, %v1617, -inf
  %1628 = vmax.xlane.f32.xlu0 %v1627
  %v1629 = vpop.xlane.xlu0 %1628
  %v1630 = vsel %vm493, %v1618, -inf
  %1631 = vmax.xlane.f32.xlu0 %v1630
  %v1632 = vpop.xlane.xlu0 %1631
  %v1633 = vsel %vm493, %v1619, -inf
  %1634 = vmax.xlane.f32.xlu0 %v1633
  %v1635 = vpop.xlane.xlu0 %1634
  %v1636 = vsel %vm493, %v1620, -inf
  %1637 = vmax.xlane.f32.xlu0 %v1636
  %v1638 = vpop.xlane.xlu0 %1637
  %v1639 = vsel %vm493, %v1621, -inf
  %1640 = vmax.xlane.f32.xlu0 %v1639
  %v1641 = vpop.xlane.xlu0 %1640
  %v1642 = vsel %vm493, %v1622, -inf
  %1643 = vmax.xlane.f32.xlu0 %v1642
  %v1644 = vpop.xlane.xlu0 %1643
  %v1645 = vsel %vm493, %v1623, -inf
  %1646 = vmax.xlane.f32.xlu0 %v1645
  %v1647 = vpop.xlane.xlu0 %1646
  %v1648 = vsub.f32 %v1616, %v1626
  %v1649 = vsub.f32 %v1617, %v1629
  %v1650 = vsub.f32 %v1618, %v1632
  %v1651 = vsub.f32 %v1619, %v1635
  %v1652 = vsub.f32 %v1620, %v1638
  %v1653 = vsub.f32 %v1621, %v1641
  %v1654 = vsub.f32 %v1622, %v1644
  %v1655 = vsub.f32 %v1623, %v1647
  %v1656 = vmul.f32 %v1648, 1.442695
  %v1657 = vpow.pop %v1656
  %v1658 = vmul.f32 %v1649, 1.442695
  %v1659 = vpow.pop %v1658
  %v1660 = vmul.f32 %v1650, 1.442695
  %v1661 = vpow.pop %v1660
  %v1662 = vmul.f32 %v1651, 1.442695
  %v1663 = vpow.pop %v1662
  %v1664 = vmul.f32 %v1652, 1.442695
  %v1665 = vpow.pop %v1664
  %v1666 = vmul.f32 %v1653, 1.442695
  %v1667 = vpow.pop %v1666
  %v1668 = vmul.f32 %v1654, 1.442695
  %v1669 = vpow.pop %v1668
  %v1670 = vmul.f32 %v1655, 1.442695
  %v1671 = vpow.pop %v1670
  %v1672 = vsel %vm493, %v1657, 0.0
  %1673 = vadd.xlane.f32.xlu0 %v1672
  %v1674 = vpop.xlane.xlu0 %1673
  %v1675 = vsel %vm493, %v1659, 0.0
  %1676 = vadd.xlane.f32.xlu0 %v1675
  %v1677 = vpop.xlane.xlu0 %1676
  %v1678 = vsel %vm493, %v1661, 0.0
  %1679 = vadd.xlane.f32.xlu0 %v1678
  %v1680 = vpop.xlane.xlu0 %1679
  %v1681 = vsel %vm493, %v1663, 0.0
  %1682 = vadd.xlane.f32.xlu0 %v1681
  %v1683 = vpop.xlane.xlu0 %1682
  %v1684 = vsel %vm493, %v1665, 0.0
  %1685 = vadd.xlane.f32.xlu0 %v1684
  %v1686 = vpop.xlane.xlu0 %1685
  %v1687 = vsel %vm493, %v1667, 0.0
  %1688 = vadd.xlane.f32.xlu0 %v1687
  %v1689 = vpop.xlane.xlu0 %1688
  %v1690 = vsel %vm493, %v1669, 0.0
  %1691 = vadd.xlane.f32.xlu0 %v1690
  %v1692 = vpop.xlane.xlu0 %1691
  %v1693 = vsel %vm493, %v1671, 0.0
  %1694 = vadd.xlane.f32.xlu0 %v1693
  %v1695 = vpop.xlane.xlu0 %1694
  %v1696 = vrcp.pop %v1674
  %v1697 = vmul.f32 %v1657, %v1696
  %v1698 = vrcp.pop %v1677
  %v1699 = vmul.f32 %v1659, %v1698
  %v1700 = vrcp.pop %v1680
  %v1701 = vmul.f32 %v1661, %v1700
  %v1702 = vrcp.pop %v1683
  %v1703 = vmul.f32 %v1663, %v1702
  %v1704 = vrcp.pop %v1686
  %v1705 = vmul.f32 %v1665, %v1704
  %v1706 = vrcp.pop %v1689
  %v1707 = vmul.f32 %v1667, %v1706
  %v1708 = vrcp.pop %v1692
  %v1709 = vmul.f32 %v1669, %v1708
  %v1710 = vrcp.pop %v1695
  %v1711 = vmul.f32 %v1671, %v1710
  %v1712 = vlaneseq
  %v1713 = vshrl.u32 %v1712, 7
  %v1714 = vsub.s32 1, %v1713
  %v1715 = vrot.slane %v1379, %v1714
  %v1716 = vmul.f32 %v1136, %v1715
  %v1717 = vmul.f32 %v1141, %v1715
  %v1718 = vmul.f32 %v1146, %v1715
  %v1719 = vmul.f32 %v1151, %v1715
  %v1720 = vmul.f32 %v1156, %v1715
  %v1721 = vmul.f32 %v1161, %v1715
  %v1722 = vmul.f32 %v1166, %v1715
  %v1723 = vmul.f32 %v1171, %v1715
  %v1725 = vsel %vm493, %v1697, 0
  %v1728 = vsel %vm493, %v1699, 0
  %v1731 = vsel %vm493, %v1701, 0
  %v1734 = vsel %vm493, %v1703, 0
  %v1737 = vsel %vm493, %v1705, 0
  %v1740 = vsel %vm493, %v1707, 0
  %v1743 = vsel %vm493, %v1709, 0
  %v1746 = vsel %vm493, %v1711, 0
  %1748 = vmatprep.subr.mxu0 0.0
  %1749 = vmatpush1.msra.mxu0 0.0
  %1750 = vmatprep.subr.mxu0 0.0
  %1751 = vmatpush1.msra.mxu0 0.0
  %1752 = vmatprep.subr.mxu0 0.0
  %1753 = vmatpush1.msra.mxu0 0.0
  %1754 = vmatprep.subr.mxu0 0.0
  %1755 = vmatpush1.msra.mxu0 0.0
  %1756 = vmatprep.subr.mxu0 0.0
  %1757 = vmatpush1.msra.mxu0 0.0
  %1758 = vmatprep.subr.mxu0 0.0
  %1759 = vmatpush1.msra.mxu0 0.0
  %1760 = vmatprep.subr.mxu0 0.0
  %1761 = vmatpush1.msra.mxu0 0.0
  %1762 = vmatprep.subr.mxu0 0.0
  %1763 = vmatpush1.msra.mxu0 0.0
  %1764 = vmatprep.subr.mxu0 0.0
  %1765 = vmatpush1.msra.mxu0 %v1723
  %1766 = vmatprep.subr.mxu0 0.0
  %1767 = vmatpush1.msra.mxu0 %v1722
  %1768 = vmatprep.subr.mxu0 0.0
  %1769 = vmatpush1.msra.mxu0 %v1721
  %1770 = vmatprep.subr.mxu0 0.0
  %1771 = vmatpush1.msra.mxu0 %v1720
  %1772 = vmatprep.subr.mxu0 0.0
  %1773 = vmatpush1.msra.mxu0 %v1719
  %1774 = vmatprep.subr.mxu0 0.0
  %1775 = vmatpush1.msra.mxu0 %v1718
  %1776 = vmatprep.subr.mxu0 0.0
  %1777 = vmatpush1.msra.mxu0 %v1717
  %1778 = vmatprep.subr.mxu0 0.0
  %1779 = vmatpush1.msra.mxu0 %v1716
  %1780 = vmatprep.subr.mxu0 0.0
  %1781 = vmatpush2.msra.mxu0 0.0
  %1782 = vmatprep.subr.mxu0 0.0
  %1783 = vmatpush2.msra.mxu0 0.0
  %1784 = vmatprep.subr.mxu0 0.0
  %1785 = vmatpush2.msra.mxu0 0.0
  %1786 = vmatprep.subr.mxu0 0.0
  %1787 = vmatpush2.msra.mxu0 0.0
  %1788 = vmatprep.subr.mxu0 0.0
  %1789 = vmatpush2.msra.mxu0 0.0
  %1790 = vmatprep.subr.mxu0 0.0
  %1791 = vmatpush2.msra.mxu0 0.0
  %1792 = vmatprep.subr.mxu0 0.0
  %1793 = vmatpush2.msra.mxu0 0.0
  %1794 = vmatprep.subr.mxu0 0.0
  %1795 = vmatpush2.msra.mxu0 0.0
  %1796 = vmatprep.subr.mxu0 0.0
  %1797 = vmatpush2.msra.mxu0 0.0
  %1798 = vmatprep.subr.mxu0 0.0
  %1799 = vmatpush2.msra.mxu0 0.0
  %1800 = vmatprep.subr.mxu0 0.0
  %1801 = vmatpush2.msra.mxu0 0.0
  %1802 = vmatprep.subr.mxu0 0.0
  %1803 = vmatpush2.msra.mxu0 0.0
  %1804 = vmatprep.subr.mxu0 0.0
  %1805 = vmatpush2.msra.mxu0 0.0
  %1806 = vmatprep.subr.mxu0 0.0
  %1807 = vmatpush2.msra.mxu0 0.0
  %1808 = vmatprep.subr.mxu0 0.0
  %1809 = vmatpush2.msra.mxu0 0.0
  %1810 = vmatprep.subr.mxu0 0.0
  %1811 = vmatpush2.msra.mxu0 0.0
  %1812 = vmatprep.mubr.f32.mxu0 0.0
  %1813 = vmatmul.mubr.f32.gmra.mxu0 %v1725
  %v1814 = vpop.f32.mrf.mxu0
  %v1815 = vadd.f32 0.0, %v1814
  %v1816 = vpop.f32.mrf.mxu0
  %1817 = vmatprep.mubr.f32.mxu0 0.0
  %1818 = vmatmul.mubr.f32.gmra.mxu0 %v1728
  %v1819 = vpop.f32.mrf.mxu0
  %v1820 = vadd.f32 0.0, %v1819
  %v1821 = vpop.f32.mrf.mxu0
  %1822 = vmatprep.mubr.f32.mxu0 0.0
  %1823 = vmatmul.mubr.f32.gmra.mxu0 %v1731
  %v1824 = vpop.f32.mrf.mxu0
  %v1825 = vadd.f32 0.0, %v1824
  %v1826 = vpop.f32.mrf.mxu0
  %1827 = vmatprep.mubr.f32.mxu0 0.0
  %1828 = vmatmul.mubr.f32.gmra.mxu0 %v1734
  %v1829 = vpop.f32.mrf.mxu0
  %v1830 = vadd.f32 0.0, %v1829
  %v1831 = vpop.f32.mrf.mxu0
  %1832 = vmatprep.mubr.f32.mxu0 0.0
  %1833 = vmatmul.mubr.f32.gmra.mxu0 %v1737
  %v1834 = vpop.f32.mrf.mxu0
  %v1835 = vadd.f32 0.0, %v1834
  %v1836 = vpop.f32.mrf.mxu0
  %1837 = vmatprep.mubr.f32.mxu0 0.0
  %1838 = vmatmul.mubr.f32.gmra.mxu0 %v1740
  %v1839 = vpop.f32.mrf.mxu0
  %v1840 = vadd.f32 0.0, %v1839
  %v1841 = vpop.f32.mrf.mxu0
  %1842 = vmatprep.mubr.f32.mxu0 0.0
  %1843 = vmatmul.mubr.f32.gmra.mxu0 %v1743
  %v1844 = vpop.f32.mrf.mxu0
  %v1845 = vadd.f32 0.0, %v1844
  %v1846 = vpop.f32.mrf.mxu0
  %1847 = vmatprep.mubr.f32.mxu0 0.0
  %1848 = vmatmul.mubr.f32.gmra.mxu0 %v1746
  %v1849 = vpop.f32.mrf.mxu0
  %v1850 = vadd.f32 0.0, %v1849
  %v1851 = vpop.f32.mrf.mxu0
  %1852 = vdwg.mxu0
  %v1854 = vsel %vm493, %v1529, 0
  %v1857 = vsel %vm493, %v1531, 0
  %v1860 = vsel %vm493, %v1533, 0
  %v1863 = vsel %vm493, %v1535, 0
  %v1866 = vsel %vm493, %v1537, 0
  %v1869 = vsel %vm493, %v1539, 0
  %v1872 = vsel %vm493, %v1541, 0
  %v1875 = vsel %vm493, %v1543, 0
  %1877 = vmatprep.subr.mxu0 0.0
  %1878 = vmatpush1.msra.mxu0 0.0
  %1879 = vmatprep.subr.mxu0 0.0
  %1880 = vmatpush1.msra.mxu0 0.0
  %1881 = vmatprep.subr.mxu0 0.0
  %1882 = vmatpush1.msra.mxu0 0.0
  %1883 = vmatprep.subr.mxu0 0.0
  %1884 = vmatpush1.msra.mxu0 0.0
  %1885 = vmatprep.subr.mxu0 0.0
  %1886 = vmatpush1.msra.mxu0 0.0
  %1887 = vmatprep.subr.mxu0 0.0
  %1888 = vmatpush1.msra.mxu0 0.0
  %1889 = vmatprep.subr.mxu0 0.0
  %1890 = vmatpush1.msra.mxu0 0.0
  %1891 = vmatprep.subr.mxu0 0.0
  %1892 = vmatpush1.msra.mxu0 0.0
  %1893 = vmatprep.subr.mxu0 0.0
  %1894 = vmatpush1.msra.mxu0 %v1555
  %1895 = vmatprep.subr.mxu0 0.0
  %1896 = vmatpush1.msra.mxu0 %v1554
  %1897 = vmatprep.subr.mxu0 0.0
  %1898 = vmatpush1.msra.mxu0 %v1553
  %1899 = vmatprep.subr.mxu0 0.0
  %1900 = vmatpush1.msra.mxu0 %v1552
  %1901 = vmatprep.subr.mxu0 0.0
  %1902 = vmatpush1.msra.mxu0 %v1551
  %1903 = vmatprep.subr.mxu0 0.0
  %1904 = vmatpush1.msra.mxu0 %v1550
  %1905 = vmatprep.subr.mxu0 0.0
  %1906 = vmatpush1.msra.mxu0 %v1549
  %1907 = vmatprep.subr.mxu0 0.0
  %1908 = vmatpush1.msra.mxu0 %v1548
  %1909 = vmatprep.subr.mxu0 0.0
  %1910 = vmatpush2.msra.mxu0 0.0
  %1911 = vmatprep.subr.mxu0 0.0
  %1912 = vmatpush2.msra.mxu0 0.0
  %1913 = vmatprep.subr.mxu0 0.0
  %1914 = vmatpush2.msra.mxu0 0.0
  %1915 = vmatprep.subr.mxu0 0.0
  %1916 = vmatpush2.msra.mxu0 0.0
  %1917 = vmatprep.subr.mxu0 0.0
  %1918 = vmatpush2.msra.mxu0 0.0
  %1919 = vmatprep.subr.mxu0 0.0
  %1920 = vmatpush2.msra.mxu0 0.0
  %1921 = vmatprep.subr.mxu0 0.0
  %1922 = vmatpush2.msra.mxu0 0.0
  %1923 = vmatprep.subr.mxu0 0.0
  %1924 = vmatpush2.msra.mxu0 0.0
  %1925 = vmatprep.subr.mxu0 0.0
  %1926 = vmatpush2.msra.mxu0 0.0
  %1927 = vmatprep.subr.mxu0 0.0
  %1928 = vmatpush2.msra.mxu0 0.0
  %1929 = vmatprep.subr.mxu0 0.0
  %1930 = vmatpush2.msra.mxu0 0.0
  %1931 = vmatprep.subr.mxu0 0.0
  %1932 = vmatpush2.msra.mxu0 0.0
  %1933 = vmatprep.subr.mxu0 0.0
  %1934 = vmatpush2.msra.mxu0 0.0
  %1935 = vmatprep.subr.mxu0 0.0
  %1936 = vmatpush2.msra.mxu0 0.0
  %1937 = vmatprep.subr.mxu0 0.0
  %1938 = vmatpush2.msra.mxu0 0.0
  %1939 = vmatprep.subr.mxu0 0.0
  %1940 = vmatpush2.msra.mxu0 0.0
  %1941 = vmatprep.mubr.f32.mxu0 0.0
  %1942 = vmatmul.mubr.f32.gmra.mxu0 %v1854
  %v1943 = vpop.f32.mrf.mxu0
  %v1944 = vadd.f32 %v1815, %v1943
  %v1945 = vpop.f32.mrf.mxu0
  %1946 = vmatprep.mubr.f32.mxu0 0.0
  %1947 = vmatmul.mubr.f32.gmra.mxu0 %v1857
  %v1948 = vpop.f32.mrf.mxu0
  %v1949 = vadd.f32 %v1820, %v1948
  %v1950 = vpop.f32.mrf.mxu0
  %1951 = vmatprep.mubr.f32.mxu0 0.0
  %1952 = vmatmul.mubr.f32.gmra.mxu0 %v1860
  %v1953 = vpop.f32.mrf.mxu0
  %v1954 = vadd.f32 %v1825, %v1953
  %v1955 = vpop.f32.mrf.mxu0
  %1956 = vmatprep.mubr.f32.mxu0 0.0
  %1957 = vmatmul.mubr.f32.gmra.mxu0 %v1863
  %v1958 = vpop.f32.mrf.mxu0
  %v1959 = vadd.f32 %v1830, %v1958
  %v1960 = vpop.f32.mrf.mxu0
  %1961 = vmatprep.mubr.f32.mxu0 0.0
  %1962 = vmatmul.mubr.f32.gmra.mxu0 %v1866
  %v1963 = vpop.f32.mrf.mxu0
  %v1964 = vadd.f32 %v1835, %v1963
  %v1965 = vpop.f32.mrf.mxu0
  %1966 = vmatprep.mubr.f32.mxu0 0.0
  %1967 = vmatmul.mubr.f32.gmra.mxu0 %v1869
  %v1968 = vpop.f32.mrf.mxu0
  %v1969 = vadd.f32 %v1840, %v1968
  %v1970 = vpop.f32.mrf.mxu0
  %1971 = vmatprep.mubr.f32.mxu0 0.0
  %1972 = vmatmul.mubr.f32.gmra.mxu0 %v1872
  %v1973 = vpop.f32.mrf.mxu0
  %v1974 = vadd.f32 %v1845, %v1973
  %v1975 = vpop.f32.mrf.mxu0
  %1976 = vmatprep.mubr.f32.mxu0 0.0
  %1977 = vmatmul.mubr.f32.gmra.mxu0 %v1875
  %v1978 = vpop.f32.mrf.mxu0
  %v1979 = vadd.f32 %v1850, %v1978
  %v1980 = vpop.f32.mrf.mxu0
  %1981 = vdwg.mxu0
  %v1982 = vld [vmem:[%s11] sm:$0x1]
  %v1984 = vlaneseq
  %v1985 = vshrl.u32 %v1984, 7
  %v1986 = vsub.s32 0, %v1985
  %v1987 = vrot.slane %v1982, %v1986
  %v1989 = vadd.f32 %v1944, %v1987
  %v1990 = vadd.f32 %v1949, %v1987
  %v1991 = vadd.f32 %v1954, %v1987
  %v1992 = vadd.f32 %v1959, %v1987
  %v1993 = vadd.f32 %v1964, %v1987
  %v1994 = vadd.f32 %v1969, %v1987
  %v1995 = vadd.f32 %v1974, %v1987
  %v1996 = vadd.f32 %v1979, %v1987
  %v1997 = vmax.f32 %v1989, 0.0
  %v1998 = vmax.f32 %v1990, 0.0
  %v1999 = vmax.f32 %v1991, 0.0
  %v2000 = vmax.f32 %v1992, 0.0
  %v2001 = vmax.f32 %v1993, 0.0
  %v2002 = vmax.f32 %v1994, 0.0
  %v2003 = vmax.f32 %v1995, 0.0
  %v2004 = vmax.f32 %v1996, 0.0
  %v2005 = vld [vmem:[%s13] sm:$0xff]
  %v2006 = vld [vmem:[%s13 + $0x8] sm:$0xff]
  %v2008 = vsel %vm212, %v1997, 0
  %v2011 = vsel %vm212, %v1998, 0
  %v2014 = vsel %vm212, %v1999, 0
  %v2017 = vsel %vm212, %v2000, 0
  %v2020 = vsel %vm212, %v2001, 0
  %v2023 = vsel %vm212, %v2002, 0
  %v2026 = vsel %vm212, %v2003, 0
  %v2029 = vsel %vm212, %v2004, 0
  %2031 = vmatprep.subr.mxu0 0.0
  %2032 = vmatpush1.msra.mxu0 0.0
  %2033 = vmatprep.subr.mxu0 0.0
  %2034 = vmatpush1.msra.mxu0 0.0
  %2035 = vmatprep.subr.mxu0 0.0
  %2036 = vmatpush1.msra.mxu0 0.0
  %2037 = vmatprep.subr.mxu0 0.0
  %2038 = vmatpush1.msra.mxu0 0.0
  %2039 = vmatprep.subr.mxu0 0.0
  %2040 = vmatpush1.msra.mxu0 0.0
  %2041 = vmatprep.subr.mxu0 0.0
  %2042 = vmatpush1.msra.mxu0 0.0
  %2043 = vmatprep.subr.mxu0 0.0
  %2044 = vmatpush1.msra.mxu0 0.0
  %2045 = vmatprep.subr.mxu0 0.0
  %2046 = vmatpush1.msra.mxu0 0.0
  %2047 = vmatprep.subr.mxu0 0.0
  %2048 = vmatpush1.msra.mxu0 0.0
  %2049 = vmatprep.subr.mxu0 0.0
  %2050 = vmatpush1.msra.mxu0 0.0
  %2051 = vmatprep.subr.mxu0 0.0
  %2052 = vmatpush1.msra.mxu0 0.0
  %2053 = vmatprep.subr.mxu0 0.0
  %2054 = vmatpush1.msra.mxu0 0.0
  %2055 = vmatprep.subr.mxu0 0.0
  %2056 = vmatpush1.msra.mxu0 0.0
  %2057 = vmatprep.subr.mxu0 0.0
  %2058 = vmatpush1.msra.mxu0 0.0
  %2059 = vmatprep.subr.mxu0 0.0
  %2060 = vmatpush1.msra.mxu0 %v2006
  %2061 = vmatprep.subr.mxu0 0.0
  %2062 = vmatpush1.msra.mxu0 %v2005
  %2063 = vmatprep.subr.mxu0 0.0
  %2064 = vmatpush2.msra.mxu0 0.0
  %2065 = vmatprep.subr.mxu0 0.0
  %2066 = vmatpush2.msra.mxu0 0.0
  %2067 = vmatprep.subr.mxu0 0.0
  %2068 = vmatpush2.msra.mxu0 0.0
  %2069 = vmatprep.subr.mxu0 0.0
  %2070 = vmatpush2.msra.mxu0 0.0
  %2071 = vmatprep.subr.mxu0 0.0
  %2072 = vmatpush2.msra.mxu0 0.0
  %2073 = vmatprep.subr.mxu0 0.0
  %2074 = vmatpush2.msra.mxu0 0.0
  %2075 = vmatprep.subr.mxu0 0.0
  %2076 = vmatpush2.msra.mxu0 0.0
  %2077 = vmatprep.subr.mxu0 0.0
  %2078 = vmatpush2.msra.mxu0 0.0
  %2079 = vmatprep.subr.mxu0 0.0
  %2080 = vmatpush2.msra.mxu0 0.0
  %2081 = vmatprep.subr.mxu0 0.0
  %2082 = vmatpush2.msra.mxu0 0.0
  %2083 = vmatprep.subr.mxu0 0.0
  %2084 = vmatpush2.msra.mxu0 0.0
  %2085 = vmatprep.subr.mxu0 0.0
  %2086 = vmatpush2.msra.mxu0 0.0
  %2087 = vmatprep.subr.mxu0 0.0
  %2088 = vmatpush2.msra.mxu0 0.0
  %2089 = vmatprep.subr.mxu0 0.0
  %2090 = vmatpush2.msra.mxu0 0.0
  %2091 = vmatprep.subr.mxu0 0.0
  %2092 = vmatpush2.msra.mxu0 0.0
  %2093 = vmatprep.subr.mxu0 0.0
  %2094 = vmatpush2.msra.mxu0 0.0
  %2095 = vmatprep.mubr.f32.mxu0 0.0
  %2096 = vmatmul.mubr.f32.gmra.mxu0 %v2008
  %v2097 = vpop.f32.mrf.mxu0
  %v2098 = vadd.f32 0.0, %v2097
  %v2099 = vpop.f32.mrf.mxu0
  %2100 = vmatprep.mubr.f32.mxu0 0.0
  %2101 = vmatmul.mubr.f32.gmra.mxu0 %v2011
  %v2102 = vpop.f32.mrf.mxu0
  %v2103 = vadd.f32 0.0, %v2102
  %v2104 = vpop.f32.mrf.mxu0
  %2105 = vmatprep.mubr.f32.mxu0 0.0
  %2106 = vmatmul.mubr.f32.gmra.mxu0 %v2014
  %v2107 = vpop.f32.mrf.mxu0
  %v2108 = vadd.f32 0.0, %v2107
  %v2109 = vpop.f32.mrf.mxu0
  %2110 = vmatprep.mubr.f32.mxu0 0.0
  %2111 = vmatmul.mubr.f32.gmra.mxu0 %v2017
  %v2112 = vpop.f32.mrf.mxu0
  %v2113 = vadd.f32 0.0, %v2112
  %v2114 = vpop.f32.mrf.mxu0
  %2115 = vmatprep.mubr.f32.mxu0 0.0
  %2116 = vmatmul.mubr.f32.gmra.mxu0 %v2020
  %v2117 = vpop.f32.mrf.mxu0
  %v2118 = vadd.f32 0.0, %v2117
  %v2119 = vpop.f32.mrf.mxu0
  %2120 = vmatprep.mubr.f32.mxu0 0.0
  %2121 = vmatmul.mubr.f32.gmra.mxu0 %v2023
  %v2122 = vpop.f32.mrf.mxu0
  %v2123 = vadd.f32 0.0, %v2122
  %v2124 = vpop.f32.mrf.mxu0
  %2125 = vmatprep.mubr.f32.mxu0 0.0
  %2126 = vmatmul.mubr.f32.gmra.mxu0 %v2026
  %v2127 = vpop.f32.mrf.mxu0
  %v2128 = vadd.f32 0.0, %v2127
  %v2129 = vpop.f32.mrf.mxu0
  %2130 = vmatprep.mubr.f32.mxu0 0.0
  %2131 = vmatmul.mubr.f32.gmra.mxu0 %v2029
  %v2132 = vpop.f32.mrf.mxu0
  %v2133 = vadd.f32 0.0, %v2132
  %v2134 = vpop.f32.mrf.mxu0
  %2135 = vdwg.mxu0
  %v2136 = vld [vmem:[%s15] sm:$0x3]
  %vm2137 = vcmask 15360
  %v2139 = vsel %vm2137, %v2098, 0
  %v2142 = vsel %vm2137, %v2103, 0
  %v2145 = vsel %vm2137, %v2108, 0
  %v2148 = vsel %vm2137, %v2113, 0
  %v2151 = vsel %vm2137, %v2118, 0
  %v2154 = vsel %vm2137, %v2123, 0
  %v2157 = vsel %vm2137, %v2128, 0
  %v2160 = vsel %vm2137, %v2133, 0
  %vm2162 = vcmask 1041408
  %v2164 = vsel %vm2162, %v2136, 0
  %2166 = vmatprep.subr.mxu0 0.0
  %2167 = vmatpush1.msra.mxu0 0.0
  %2168 = vmatprep.subr.mxu0 0.0
  %2169 = vmatpush1.msra.mxu0 0.0
  %2170 = vmatprep.subr.mxu0 0.0
  %2171 = vmatpush1.msra.mxu0 0.0
  %2172 = vmatprep.subr.mxu0 0.0
  %2173 = vmatpush1.msra.mxu0 0.0
  %2174 = vmatprep.subr.mxu0 0.0
  %2175 = vmatpush1.msra.mxu0 0.0
  %2176 = vmatprep.subr.mxu0 0.0
  %2177 = vmatpush1.msra.mxu0 0.0
  %2178 = vmatprep.subr.mxu0 0.0
  %2179 = vmatpush1.msra.mxu0 0.0
  %2180 = vmatprep.subr.mxu0 0.0
  %2181 = vmatpush1.msra.mxu0 0.0
  %2182 = vmatprep.subr.mxu0 0.0
  %2183 = vmatpush1.msra.mxu0 0.0
  %2184 = vmatprep.subr.mxu0 0.0
  %2185 = vmatpush1.msra.mxu0 0.0
  %2186 = vmatprep.subr.mxu0 0.0
  %2187 = vmatpush1.msra.mxu0 0.0
  %2188 = vmatprep.subr.mxu0 0.0
  %2189 = vmatpush1.msra.mxu0 0.0
  %2190 = vmatprep.subr.mxu0 0.0
  %2191 = vmatpush1.msra.mxu0 0.0
  %2192 = vmatprep.subr.mxu0 0.0
  %2193 = vmatpush1.msra.mxu0 0.0
  %2194 = vmatprep.subr.mxu0 0.0
  %2195 = vmatpush1.msra.mxu0 0.0
  %2196 = vmatprep.subr.mxu0 0.0
  %2197 = vmatpush1.msra.mxu0 %v2164
  %2198 = vmatprep.subr.mxu0 0.0
  %2199 = vmatpush2.msra.mxu0 0.0
  %2200 = vmatprep.subr.mxu0 0.0
  %2201 = vmatpush2.msra.mxu0 0.0
  %2202 = vmatprep.subr.mxu0 0.0
  %2203 = vmatpush2.msra.mxu0 0.0
  %2204 = vmatprep.subr.mxu0 0.0
  %2205 = vmatpush2.msra.mxu0 0.0
  %2206 = vmatprep.subr.mxu0 0.0
  %2207 = vmatpush2.msra.mxu0 0.0
  %2208 = vmatprep.subr.mxu0 0.0
  %2209 = vmatpush2.msra.mxu0 0.0
  %2210 = vmatprep.subr.mxu0 0.0
  %2211 = vmatpush2.msra.mxu0 0.0
  %2212 = vmatprep.subr.mxu0 0.0
  %2213 = vmatpush2.msra.mxu0 0.0
  %2214 = vmatprep.subr.mxu0 0.0
  %2215 = vmatpush2.msra.mxu0 0.0
  %2216 = vmatprep.subr.mxu0 0.0
  %2217 = vmatpush2.msra.mxu0 0.0
  %2218 = vmatprep.subr.mxu0 0.0
  %2219 = vmatpush2.msra.mxu0 0.0
  %2220 = vmatprep.subr.mxu0 0.0
  %2221 = vmatpush2.msra.mxu0 0.0
  %2222 = vmatprep.subr.mxu0 0.0
  %2223 = vmatpush2.msra.mxu0 0.0
  %2224 = vmatprep.subr.mxu0 0.0
  %2225 = vmatpush2.msra.mxu0 0.0
  %2226 = vmatprep.subr.mxu0 0.0
  %2227 = vmatpush2.msra.mxu0 0.0
  %2228 = vmatprep.subr.mxu0 0.0
  %2229 = vmatpush2.msra.mxu0 0.0
  %2230 = vmatprep.mubr.f32.mxu0 0.0
  %2231 = vmatmul.mubr.f32.gmra.mxu0 %v2139
  %v2232 = vpop.f32.mrf.mxu0
  %v2233 = vadd.f32 0.0, %v2232
  %v2234 = vpop.f32.mrf.mxu0
  %2235 = vmatprep.mubr.f32.mxu0 0.0
  %2236 = vmatmul.mubr.f32.gmra.mxu0 %v2142
  %v2237 = vpop.f32.mrf.mxu0
  %v2238 = vadd.f32 0.0, %v2237
  %v2239 = vpop.f32.mrf.mxu0
  %2240 = vmatprep.mubr.f32.mxu0 0.0
  %2241 = vmatmul.mubr.f32.gmra.mxu0 %v2145
  %v2242 = vpop.f32.mrf.mxu0
  %v2243 = vadd.f32 0.0, %v2242
  %v2244 = vpop.f32.mrf.mxu0
  %2245 = vmatprep.mubr.f32.mxu0 0.0
  %2246 = vmatmul.mubr.f32.gmra.mxu0 %v2148
  %v2247 = vpop.f32.mrf.mxu0
  %v2248 = vadd.f32 0.0, %v2247
  %v2249 = vpop.f32.mrf.mxu0
  %2250 = vmatprep.mubr.f32.mxu0 0.0
  %2251 = vmatmul.mubr.f32.gmra.mxu0 %v2151
  %v2252 = vpop.f32.mrf.mxu0
  %v2253 = vadd.f32 0.0, %v2252
  %v2254 = vpop.f32.mrf.mxu0
  %2255 = vmatprep.mubr.f32.mxu0 0.0
  %2256 = vmatmul.mubr.f32.gmra.mxu0 %v2154
  %v2257 = vpop.f32.mrf.mxu0
  %v2258 = vadd.f32 0.0, %v2257
  %v2259 = vpop.f32.mrf.mxu0
  %2260 = vmatprep.mubr.f32.mxu0 0.0
  %2261 = vmatmul.mubr.f32.gmra.mxu0 %v2157
  %v2262 = vpop.f32.mrf.mxu0
  %v2263 = vadd.f32 0.0, %v2262
  %v2264 = vpop.f32.mrf.mxu0
  %2265 = vmatprep.mubr.f32.mxu0 0.0
  %2266 = vmatmul.mubr.f32.gmra.mxu0 %v2160
  %v2267 = vpop.f32.mrf.mxu0
  %v2268 = vadd.f32 0.0, %v2267
  %v2269 = vpop.f32.mrf.mxu0
  %2270 = vdwg.mxu0
  %v2271 = vld [vmem:[%s14] sm:$0x3]
  %v2273 = vsel %vm2137, %v2271, 0
  %2275 = vmatprep.subr.mxu0 0.0
  %2276 = vmatpush1.xpose.msra.mxu0 0.0
  %2277 = vmatprep.subr.mxu0 0.0
  %2278 = vmatpush1.xpose.msra.mxu0 0.0
  %2279 = vmatprep.subr.mxu0 0.0
  %2280 = vmatpush1.xpose.msra.mxu0 0.0
  %2281 = vmatprep.subr.mxu0 0.0
  %2282 = vmatpush1.xpose.msra.mxu0 0.0
  %2283 = vmatprep.subr.mxu0 0.0
  %2284 = vmatpush1.xpose.msra.mxu0 0.0
  %2285 = vmatprep.subr.mxu0 0.0
  %2286 = vmatpush1.xpose.msra.mxu0 0.0
  %2287 = vmatprep.subr.mxu0 0.0
  %2288 = vmatpush1.xpose.msra.mxu0 0.0
  %2289 = vmatprep.subr.mxu0 0.0
  %2290 = vmatpush1.xpose.msra.mxu0 0.0
  %2291 = vmatprep.subr.mxu0 0.0
  %2292 = vmatpush1.xpose.msra.mxu0 %v2160
  %2293 = vmatprep.subr.mxu0 0.0
  %2294 = vmatpush1.xpose.msra.mxu0 %v2157
  %2295 = vmatprep.subr.mxu0 0.0
  %2296 = vmatpush1.xpose.msra.mxu0 %v2154
  %2297 = vmatprep.subr.mxu0 0.0
  %2298 = vmatpush1.xpose.msra.mxu0 %v2151
  %2299 = vmatprep.subr.mxu0 0.0
  %2300 = vmatpush1.xpose.msra.mxu0 %v2148
  %2301 = vmatprep.subr.mxu0 0.0
  %2302 = vmatpush1.xpose.msra.mxu0 %v2145
  %2303 = vmatprep.subr.mxu0 0.0
  %2304 = vmatpush1.xpose.msra.mxu0 %v2142
  %2305 = vmatprep.subr.mxu0 0.0
  %2306 = vmatpush1.xpose.msra.mxu0 %v2139
  %2307 = vmatprep.subr.mxu0 0.0
  %2308 = vmatpush2.xpose.msra.mxu0 0.0
  %2309 = vmatprep.subr.mxu0 0.0
  %2310 = vmatpush2.xpose.msra.mxu0 0.0
  %2311 = vmatprep.subr.mxu0 0.0
  %2312 = vmatpush2.xpose.msra.mxu0 0.0
  %2313 = vmatprep.subr.mxu0 0.0
  %2314 = vmatpush2.xpose.msra.mxu0 0.0
  %2315 = vmatprep.subr.mxu0 0.0
  %2316 = vmatpush2.xpose.msra.mxu0 0.0
  %2317 = vmatprep.subr.mxu0 0.0
  %2318 = vmatpush2.xpose.msra.mxu0 0.0
  %2319 = vmatprep.subr.mxu0 0.0
  %2320 = vmatpush2.xpose.msra.mxu0 0.0
  %2321 = vmatprep.subr.mxu0 0.0
  %2322 = vmatpush2.xpose.msra.mxu0 0.0
  %2323 = vmatprep.subr.mxu0 0.0
  %2324 = vmatpush2.xpose.msra.mxu0 0.0
  %2325 = vmatprep.subr.mxu0 0.0
  %2326 = vmatpush2.xpose.msra.mxu0 0.0
  %2327 = vmatprep.subr.mxu0 0.0
  %2328 = vmatpush2.xpose.msra.mxu0 0.0
  %2329 = vmatprep.subr.mxu0 0.0
  %2330 = vmatpush2.xpose.msra.mxu0 0.0
  %2331 = vmatprep.subr.mxu0 0.0
  %2332 = vmatpush2.xpose.msra.mxu0 0.0
  %2333 = vmatprep.subr.mxu0 0.0
  %2334 = vmatpush2.xpose.msra.mxu0 0.0
  %2335 = vmatprep.subr.mxu0 0.0
  %2336 = vmatpush2.xpose.msra.mxu0 0.0
  %2337 = vmatprep.subr.mxu0 0.0
  %2338 = vmatpush2.xpose.msra.mxu0 0.0
  %2339 = vmatprep.mubr.f32.mxu0 0.0
  %2340 = vmatmul.mubr.f32.gmra.mxu0 %v2273
  %v2341 = vpop.f32.mrf.mxu0
  %v2342 = vadd.f32 0.0, %v2341
  %v2343 = vpop.f32.mrf.mxu0
  %2344 = vdwg.mxu0
  %v2345 = vld [vmem:[%s17] sm:$0x3]
  %2347 = vset.pattern.permute.xlu0 0
  %2348 = vperm.xlu0 %2347, %v2233
  %v2349 = vpop.permute.xlu0 %2348
  %2352 = vset.pattern.permute.xlu0 0
  %2353 = vperm.xlu0 %2352, %v2238
  %v2354 = vpop.permute.xlu0 %2353
  %2357 = vset.pattern.permute.xlu0 0
  %2358 = vperm.xlu0 %2357, %v2243
  %v2359 = vpop.permute.xlu0 %2358
  %2362 = vset.pattern.permute.xlu0 0
  %2363 = vperm.xlu0 %2362, %v2248
  %v2364 = vpop.permute.xlu0 %2363
  %2367 = vset.pattern.permute.xlu0 0
  %2368 = vperm.xlu0 %2367, %v2253
  %v2369 = vpop.permute.xlu0 %2368
  %2372 = vset.pattern.permute.xlu0 0
  %2373 = vperm.xlu0 %2372, %v2258
  %v2374 = vpop.permute.xlu0 %2373
  %2377 = vset.pattern.permute.xlu0 0
  %2378 = vperm.xlu0 %2377, %v2263
  %v2379 = vpop.permute.xlu0 %2378
  %2382 = vset.pattern.permute.xlu0 0
  %2383 = vperm.xlu0 %2382, %v2268
  %v2384 = vpop.permute.xlu0 %2383
  %v2386 = vlaneseq
  %v2387 = vshrl.u32 %v2386, 7
  %v2388 = vsub.s32 0, %v2387
  %v2389 = vrot.slane %v2342, %v2388
  %v2390 = vadd.f32 %v2349, %v2389
  %v2391 = vadd.f32 %v2354, %v2389
  %v2392 = vadd.f32 %v2359, %v2389
  %v2393 = vadd.f32 %v2364, %v2389
  %v2394 = vadd.f32 %v2369, %v2389
  %v2395 = vadd.f32 %v2374, %v2389
  %v2396 = vadd.f32 %v2379, %v2389
  %v2397 = vadd.f32 %v2384, %v2389
  %v2398 = vmul.f32 %v2390, 0.2
  %v2399 = vmul.f32 %v2391, 0.2
  %v2400 = vmul.f32 %v2392, 0.2
  %v2401 = vmul.f32 %v2393, 0.2
  %v2402 = vmul.f32 %v2394, 0.2
  %v2403 = vmul.f32 %v2395, 0.2
  %v2404 = vmul.f32 %v2396, 0.2
  %v2405 = vmul.f32 %v2397, 0.2
  %v2406 = vmax.f32 %v2390, %v2398
  %v2407 = vmax.f32 %v2391, %v2399
  %v2408 = vmax.f32 %v2392, %v2400
  %v2409 = vmax.f32 %v2393, %v2401
  %v2410 = vmax.f32 %v2394, %v2402
  %v2411 = vmax.f32 %v2395, %v2403
  %v2412 = vmax.f32 %v2396, %v2404
  %v2413 = vmax.f32 %v2397, %v2405
  %v2414 = vadd.f32 %v2406, %v67
  %v2415 = vadd.f32 %v2407, %v68
  %v2416 = vadd.f32 %v2408, %v69
  %v2417 = vadd.f32 %v2409, %v70
  %v2418 = vadd.f32 %v2410, %v71
  %v2419 = vadd.f32 %v2411, %v72
  %v2420 = vadd.f32 %v2412, %v73
  %v2421 = vadd.f32 %v2413, %v74
  %v2422 = vsel %vm493, %v2414, -inf
  %2423 = vmax.xlane.f32.xlu0 %v2422
  %v2424 = vpop.xlane.xlu0 %2423
  %v2425 = vsel %vm493, %v2415, -inf
  %2426 = vmax.xlane.f32.xlu0 %v2425
  %v2427 = vpop.xlane.xlu0 %2426
  %v2428 = vsel %vm493, %v2416, -inf
  %2429 = vmax.xlane.f32.xlu0 %v2428
  %v2430 = vpop.xlane.xlu0 %2429
  %v2431 = vsel %vm493, %v2417, -inf
  %2432 = vmax.xlane.f32.xlu0 %v2431
  %v2433 = vpop.xlane.xlu0 %2432
  %v2434 = vsel %vm493, %v2418, -inf
  %2435 = vmax.xlane.f32.xlu0 %v2434
  %v2436 = vpop.xlane.xlu0 %2435
  %v2437 = vsel %vm493, %v2419, -inf
  %2438 = vmax.xlane.f32.xlu0 %v2437
  %v2439 = vpop.xlane.xlu0 %2438
  %v2440 = vsel %vm493, %v2420, -inf
  %2441 = vmax.xlane.f32.xlu0 %v2440
  %v2442 = vpop.xlane.xlu0 %2441
  %v2443 = vsel %vm493, %v2421, -inf
  %2444 = vmax.xlane.f32.xlu0 %v2443
  %v2445 = vpop.xlane.xlu0 %2444
  %v2446 = vsub.f32 %v2414, %v2424
  %v2447 = vsub.f32 %v2415, %v2427
  %v2448 = vsub.f32 %v2416, %v2430
  %v2449 = vsub.f32 %v2417, %v2433
  %v2450 = vsub.f32 %v2418, %v2436
  %v2451 = vsub.f32 %v2419, %v2439
  %v2452 = vsub.f32 %v2420, %v2442
  %v2453 = vsub.f32 %v2421, %v2445
  %v2454 = vmul.f32 %v2446, 1.442695
  %v2455 = vpow.pop %v2454
  %v2456 = vmul.f32 %v2447, 1.442695
  %v2457 = vpow.pop %v2456
  %v2458 = vmul.f32 %v2448, 1.442695
  %v2459 = vpow.pop %v2458
  %v2460 = vmul.f32 %v2449, 1.442695
  %v2461 = vpow.pop %v2460
  %v2462 = vmul.f32 %v2450, 1.442695
  %v2463 = vpow.pop %v2462
  %v2464 = vmul.f32 %v2451, 1.442695
  %v2465 = vpow.pop %v2464
  %v2466 = vmul.f32 %v2452, 1.442695
  %v2467 = vpow.pop %v2466
  %v2468 = vmul.f32 %v2453, 1.442695
  %v2469 = vpow.pop %v2468
  %v2470 = vsel %vm493, %v2455, 0.0
  %2471 = vadd.xlane.f32.xlu0 %v2470
  %v2472 = vpop.xlane.xlu0 %2471
  %v2473 = vsel %vm493, %v2457, 0.0
  %2474 = vadd.xlane.f32.xlu0 %v2473
  %v2475 = vpop.xlane.xlu0 %2474
  %v2476 = vsel %vm493, %v2459, 0.0
  %2477 = vadd.xlane.f32.xlu0 %v2476
  %v2478 = vpop.xlane.xlu0 %2477
  %v2479 = vsel %vm493, %v2461, 0.0
  %2480 = vadd.xlane.f32.xlu0 %v2479
  %v2481 = vpop.xlane.xlu0 %2480
  %v2482 = vsel %vm493, %v2463, 0.0
  %2483 = vadd.xlane.f32.xlu0 %v2482
  %v2484 = vpop.xlane.xlu0 %2483
  %v2485 = vsel %vm493, %v2465, 0.0
  %2486 = vadd.xlane.f32.xlu0 %v2485
  %v2487 = vpop.xlane.xlu0 %2486
  %v2488 = vsel %vm493, %v2467, 0.0
  %2489 = vadd.xlane.f32.xlu0 %v2488
  %v2490 = vpop.xlane.xlu0 %2489
  %v2491 = vsel %vm493, %v2469, 0.0
  %2492 = vadd.xlane.f32.xlu0 %v2491
  %v2493 = vpop.xlane.xlu0 %2492
  %v2494 = vrcp.pop %v2472
  %v2495 = vmul.f32 %v2455, %v2494
  %v2496 = vrcp.pop %v2475
  %v2497 = vmul.f32 %v2457, %v2496
  %v2498 = vrcp.pop %v2478
  %v2499 = vmul.f32 %v2459, %v2498
  %v2500 = vrcp.pop %v2481
  %v2501 = vmul.f32 %v2461, %v2500
  %v2502 = vrcp.pop %v2484
  %v2503 = vmul.f32 %v2463, %v2502
  %v2504 = vrcp.pop %v2487
  %v2505 = vmul.f32 %v2465, %v2504
  %v2506 = vrcp.pop %v2490
  %v2507 = vmul.f32 %v2467, %v2506
  %v2508 = vrcp.pop %v2493
  %v2509 = vmul.f32 %v2469, %v2508
  %v2510 = vlaneseq
  %v2511 = vshrl.u32 %v2510, 7
  %v2512 = vsub.s32 0, %v2511
  %v2513 = vrot.slane %v2345, %v2512
  %v2514 = vmul.f32 %v2098, %v2513
  %v2515 = vmul.f32 %v2103, %v2513
  %v2516 = vmul.f32 %v2108, %v2513
  %v2517 = vmul.f32 %v2113, %v2513
  %v2518 = vmul.f32 %v2118, %v2513
  %v2519 = vmul.f32 %v2123, %v2513
  %v2520 = vmul.f32 %v2128, %v2513
  %v2521 = vmul.f32 %v2133, %v2513
  %2522 = vset.pattern.permute.xlu0 1
  %2523 = vperm.xlu0 %2522, %v2233
  %v2524 = vpop.permute.xlu0 %2523
  %2526 = vset.pattern.permute.xlu0 1
  %2527 = vperm.xlu0 %2526, %v2238
  %v2528 = vpop.permute.xlu0 %2527
  %2530 = vset.pattern.permute.xlu0 1
  %2531 = vperm.xlu0 %2530, %v2243
  %v2532 = vpop.permute.xlu0 %2531
  %2534 = vset.pattern.permute.xlu0 1
  %2535 = vperm.xlu0 %2534, %v2248
  %v2536 = vpop.permute.xlu0 %2535
  %2538 = vset.pattern.permute.xlu0 1
  %2539 = vperm.xlu0 %2538, %v2253
  %v2540 = vpop.permute.xlu0 %2539
  %2542 = vset.pattern.permute.xlu0 1
  %2543 = vperm.xlu0 %2542, %v2258
  %v2544 = vpop.permute.xlu0 %2543
  %2546 = vset.pattern.permute.xlu0 1
  %2547 = vperm.xlu0 %2546, %v2263
  %v2548 = vpop.permute.xlu0 %2547
  %2550 = vset.pattern.permute.xlu0 1
  %2551 = vperm.xlu0 %2550, %v2268
  %v2552 = vpop.permute.xlu0 %2551
  %v2554 = vlaneseq
  %v2555 = vshrl.u32 %v2554, 7
  %v2556 = vsub.s32 1, %v2555
  %v2557 = vrot.slane %v2342, %v2556
  %v2558 = vadd.f32 %v2524, %v2557
  %v2559 = vadd.f32 %v2528, %v2557
  %v2560 = vadd.f32 %v2532, %v2557
  %v2561 = vadd.f32 %v2536, %v2557
  %v2562 = vadd.f32 %v2540, %v2557
  %v2563 = vadd.f32 %v2544, %v2557
  %v2564 = vadd.f32 %v2548, %v2557
  %v2565 = vadd.f32 %v2552, %v2557
  %v2566 = vmul.f32 %v2558, 0.2
  %v2567 = vmul.f32 %v2559, 0.2
  %v2568 = vmul.f32 %v2560, 0.2
  %v2569 = vmul.f32 %v2561, 0.2
  %v2570 = vmul.f32 %v2562, 0.2
  %v2571 = vmul.f32 %v2563, 0.2
  %v2572 = vmul.f32 %v2564, 0.2
  %v2573 = vmul.f32 %v2565, 0.2
  %v2574 = vmax.f32 %v2558, %v2566
  %v2575 = vmax.f32 %v2559, %v2567
  %v2576 = vmax.f32 %v2560, %v2568
  %v2577 = vmax.f32 %v2561, %v2569
  %v2578 = vmax.f32 %v2562, %v2570
  %v2579 = vmax.f32 %v2563, %v2571
  %v2580 = vmax.f32 %v2564, %v2572
  %v2581 = vmax.f32 %v2565, %v2573
  %v2582 = vadd.f32 %v2574, %v67
  %v2583 = vadd.f32 %v2575, %v68
  %v2584 = vadd.f32 %v2576, %v69
  %v2585 = vadd.f32 %v2577, %v70
  %v2586 = vadd.f32 %v2578, %v71
  %v2587 = vadd.f32 %v2579, %v72
  %v2588 = vadd.f32 %v2580, %v73
  %v2589 = vadd.f32 %v2581, %v74
  %v2590 = vsel %vm493, %v2582, -inf
  %2591 = vmax.xlane.f32.xlu0 %v2590
  %v2592 = vpop.xlane.xlu0 %2591
  %v2593 = vsel %vm493, %v2583, -inf
  %2594 = vmax.xlane.f32.xlu0 %v2593
  %v2595 = vpop.xlane.xlu0 %2594
  %v2596 = vsel %vm493, %v2584, -inf
  %2597 = vmax.xlane.f32.xlu0 %v2596
  %v2598 = vpop.xlane.xlu0 %2597
  %v2599 = vsel %vm493, %v2585, -inf
  %2600 = vmax.xlane.f32.xlu0 %v2599
  %v2601 = vpop.xlane.xlu0 %2600
  %v2602 = vsel %vm493, %v2586, -inf
  %2603 = vmax.xlane.f32.xlu0 %v2602
  %v2604 = vpop.xlane.xlu0 %2603
  %v2605 = vsel %vm493, %v2587, -inf
  %2606 = vmax.xlane.f32.xlu0 %v2605
  %v2607 = vpop.xlane.xlu0 %2606
  %v2608 = vsel %vm493, %v2588, -inf
  %2609 = vmax.xlane.f32.xlu0 %v2608
  %v2610 = vpop.xlane.xlu0 %2609
  %v2611 = vsel %vm493, %v2589, -inf
  %2612 = vmax.xlane.f32.xlu0 %v2611
  %v2613 = vpop.xlane.xlu0 %2612
  %v2614 = vsub.f32 %v2582, %v2592
  %v2615 = vsub.f32 %v2583, %v2595
  %v2616 = vsub.f32 %v2584, %v2598
  %v2617 = vsub.f32 %v2585, %v2601
  %v2618 = vsub.f32 %v2586, %v2604
  %v2619 = vsub.f32 %v2587, %v2607
  %v2620 = vsub.f32 %v2588, %v2610
  %v2621 = vsub.f32 %v2589, %v2613
  %v2622 = vmul.f32 %v2614, 1.442695
  %v2623 = vpow.pop %v2622
  %v2624 = vmul.f32 %v2615, 1.442695
  %v2625 = vpow.pop %v2624
  %v2626 = vmul.f32 %v2616, 1.442695
  %v2627 = vpow.pop %v2626
  %v2628 = vmul.f32 %v2617, 1.442695
  %v2629 = vpow.pop %v2628
  %v2630 = vmul.f32 %v2618, 1.442695
  %v2631 = vpow.pop %v2630
  %v2632 = vmul.f32 %v2619, 1.442695
  %v2633 = vpow.pop %v2632
  %v2634 = vmul.f32 %v2620, 1.442695
  %v2635 = vpow.pop %v2634
  %v2636 = vmul.f32 %v2621, 1.442695
  %v2637 = vpow.pop %v2636
  %v2638 = vsel %vm493, %v2623, 0.0
  %2639 = vadd.xlane.f32.xlu0 %v2638
  %v2640 = vpop.xlane.xlu0 %2639
  %v2641 = vsel %vm493, %v2625, 0.0
  %2642 = vadd.xlane.f32.xlu0 %v2641
  %v2643 = vpop.xlane.xlu0 %2642
  %v2644 = vsel %vm493, %v2627, 0.0
  %2645 = vadd.xlane.f32.xlu0 %v2644
  %v2646 = vpop.xlane.xlu0 %2645
  %v2647 = vsel %vm493, %v2629, 0.0
  %2648 = vadd.xlane.f32.xlu0 %v2647
  %v2649 = vpop.xlane.xlu0 %2648
  %v2650 = vsel %vm493, %v2631, 0.0
  %2651 = vadd.xlane.f32.xlu0 %v2650
  %v2652 = vpop.xlane.xlu0 %2651
  %v2653 = vsel %vm493, %v2633, 0.0
  %2654 = vadd.xlane.f32.xlu0 %v2653
  %v2655 = vpop.xlane.xlu0 %2654
  %v2656 = vsel %vm493, %v2635, 0.0
  %2657 = vadd.xlane.f32.xlu0 %v2656
  %v2658 = vpop.xlane.xlu0 %2657
  %v2659 = vsel %vm493, %v2637, 0.0
  %2660 = vadd.xlane.f32.xlu0 %v2659
  %v2661 = vpop.xlane.xlu0 %2660
  %v2662 = vrcp.pop %v2640
  %v2663 = vmul.f32 %v2623, %v2662
  %v2664 = vrcp.pop %v2643
  %v2665 = vmul.f32 %v2625, %v2664
  %v2666 = vrcp.pop %v2646
  %v2667 = vmul.f32 %v2627, %v2666
  %v2668 = vrcp.pop %v2649
  %v2669 = vmul.f32 %v2629, %v2668
  %v2670 = vrcp.pop %v2652
  %v2671 = vmul.f32 %v2631, %v2670
  %v2672 = vrcp.pop %v2655
  %v2673 = vmul.f32 %v2633, %v2672
  %v2674 = vrcp.pop %v2658
  %v2675 = vmul.f32 %v2635, %v2674
  %v2676 = vrcp.pop %v2661
  %v2677 = vmul.f32 %v2637, %v2676
  %v2678 = vlaneseq
  %v2679 = vshrl.u32 %v2678, 7
  %v2680 = vsub.s32 1, %v2679
  %v2681 = vrot.slane %v2345, %v2680
  %v2682 = vmul.f32 %v2098, %v2681
  %v2683 = vmul.f32 %v2103, %v2681
  %v2684 = vmul.f32 %v2108, %v2681
  %v2685 = vmul.f32 %v2113, %v2681
  %v2686 = vmul.f32 %v2118, %v2681
  %v2687 = vmul.f32 %v2123, %v2681
  %v2688 = vmul.f32 %v2128, %v2681
  %v2689 = vmul.f32 %v2133, %v2681
  %v2691 = vsel %vm493, %v2663, 0
  %v2694 = vsel %vm493, %v2665, 0
  %v2697 = vsel %vm493, %v2667, 0
  %v2700 = vsel %vm493, %v2669, 0
  %v2703 = vsel %vm493, %v2671, 0
  %v2706 = vsel %vm493, %v2673, 0
  %v2709 = vsel %vm493, %v2675, 0
  %v2712 = vsel %vm493, %v2677, 0
  %2714 = vmatprep.subr.mxu0 0.0
  %2715 = vmatpush1.msra.mxu0 0.0
  %2716 = vmatprep.subr.mxu0 0.0
  %2717 = vmatpush1.msra.mxu0 0.0
  %2718 = vmatprep.subr.mxu0 0.0
  %2719 = vmatpush1.msra.mxu0 0.0
  %2720 = vmatprep.subr.mxu0 0.0
  %2721 = vmatpush1.msra.mxu0 0.0
  %2722 = vmatprep.subr.mxu0 0.0
  %2723 = vmatpush1.msra.mxu0 0.0
  %2724 = vmatprep.subr.mxu0 0.0
  %2725 = vmatpush1.msra.mxu0 0.0
  %2726 = vmatprep.subr.mxu0 0.0
  %2727 = vmatpush1.msra.mxu0 0.0
  %2728 = vmatprep.subr.mxu0 0.0
  %2729 = vmatpush1.msra.mxu0 0.0
  %2730 = vmatprep.subr.mxu0 0.0
  %2731 = vmatpush1.msra.mxu0 %v2689
  %2732 = vmatprep.subr.mxu0 0.0
  %2733 = vmatpush1.msra.mxu0 %v2688
  %2734 = vmatprep.subr.mxu0 0.0
  %2735 = vmatpush1.msra.mxu0 %v2687
  %2736 = vmatprep.subr.mxu0 0.0
  %2737 = vmatpush1.msra.mxu0 %v2686
  %2738 = vmatprep.subr.mxu0 0.0
  %2739 = vmatpush1.msra.mxu0 %v2685
  %2740 = vmatprep.subr.mxu0 0.0
  %2741 = vmatpush1.msra.mxu0 %v2684
  %2742 = vmatprep.subr.mxu0 0.0
  %2743 = vmatpush1.msra.mxu0 %v2683
  %2744 = vmatprep.subr.mxu0 0.0
  %2745 = vmatpush1.msra.mxu0 %v2682
  %2746 = vmatprep.subr.mxu0 0.0
  %2747 = vmatpush2.msra.mxu0 0.0
  %2748 = vmatprep.subr.mxu0 0.0
  %2749 = vmatpush2.msra.mxu0 0.0
  %2750 = vmatprep.subr.mxu0 0.0
  %2751 = vmatpush2.msra.mxu0 0.0
  %2752 = vmatprep.subr.mxu0 0.0
  %2753 = vmatpush2.msra.mxu0 0.0
  %2754 = vmatprep.subr.mxu0 0.0
  %2755 = vmatpush2.msra.mxu0 0.0
  %2756 = vmatprep.subr.mxu0 0.0
  %2757 = vmatpush2.msra.mxu0 0.0
  %2758 = vmatprep.subr.mxu0 0.0
  %2759 = vmatpush2.msra.mxu0 0.0
  %2760 = vmatprep.subr.mxu0 0.0
  %2761 = vmatpush2.msra.mxu0 0.0
  %2762 = vmatprep.subr.mxu0 0.0
  %2763 = vmatpush2.msra.mxu0 0.0
  %2764 = vmatprep.subr.mxu0 0.0
  %2765 = vmatpush2.msra.mxu0 0.0
  %2766 = vmatprep.subr.mxu0 0.0
  %2767 = vmatpush2.msra.mxu0 0.0
  %2768 = vmatprep.subr.mxu0 0.0
  %2769 = vmatpush2.msra.mxu0 0.0
  %2770 = vmatprep.subr.mxu0 0.0
  %2771 = vmatpush2.msra.mxu0 0.0
  %2772 = vmatprep.subr.mxu0 0.0
  %2773 = vmatpush2.msra.mxu0 0.0
  %2774 = vmatprep.subr.mxu0 0.0
  %2775 = vmatpush2.msra.mxu0 0.0
  %2776 = vmatprep.subr.mxu0 0.0
  %2777 = vmatpush2.msra.mxu0 0.0
  %2778 = vmatprep.mubr.f32.mxu0 0.0
  %2779 = vmatmul.mubr.f32.gmra.mxu0 %v2691
  %v2780 = vpop.f32.mrf.mxu0
  %v2781 = vadd.f32 0.0, %v2780
  %v2782 = vpop.f32.mrf.mxu0
  %2783 = vmatprep.mubr.f32.mxu0 0.0
  %2784 = vmatmul.mubr.f32.gmra.mxu0 %v2694
  %v2785 = vpop.f32.mrf.mxu0
  %v2786 = vadd.f32 0.0, %v2785
  %v2787 = vpop.f32.mrf.mxu0
  %2788 = vmatprep.mubr.f32.mxu0 0.0
  %2789 = vmatmul.mubr.f32.gmra.mxu0 %v2697
  %v2790 = vpop.f32.mrf.mxu0
  %v2791 = vadd.f32 0.0, %v2790
  %v2792 = vpop.f32.mrf.mxu0
  %2793 = vmatprep.mubr.f32.mxu0 0.0
  %2794 = vmatmul.mubr.f32.gmra.mxu0 %v2700
  %v2795 = vpop.f32.mrf.mxu0
  %v2796 = vadd.f32 0.0, %v2795
  %v2797 = vpop.f32.mrf.mxu0
  %2798 = vmatprep.mubr.f32.mxu0 0.0
  %2799 = vmatmul.mubr.f32.gmra.mxu0 %v2703
  %v2800 = vpop.f32.mrf.mxu0
  %v2801 = vadd.f32 0.0, %v2800
  %v2802 = vpop.f32.mrf.mxu0
  %2803 = vmatprep.mubr.f32.mxu0 0.0
  %2804 = vmatmul.mubr.f32.gmra.mxu0 %v2706
  %v2805 = vpop.f32.mrf.mxu0
  %v2806 = vadd.f32 0.0, %v2805
  %v2807 = vpop.f32.mrf.mxu0
  %2808 = vmatprep.mubr.f32.mxu0 0.0
  %2809 = vmatmul.mubr.f32.gmra.mxu0 %v2709
  %v2810 = vpop.f32.mrf.mxu0
  %v2811 = vadd.f32 0.0, %v2810
  %v2812 = vpop.f32.mrf.mxu0
  %2813 = vmatprep.mubr.f32.mxu0 0.0
  %2814 = vmatmul.mubr.f32.gmra.mxu0 %v2712
  %v2815 = vpop.f32.mrf.mxu0
  %v2816 = vadd.f32 0.0, %v2815
  %v2817 = vpop.f32.mrf.mxu0
  %2818 = vdwg.mxu0
  %v2820 = vsel %vm493, %v2495, 0
  %v2823 = vsel %vm493, %v2497, 0
  %v2826 = vsel %vm493, %v2499, 0
  %v2829 = vsel %vm493, %v2501, 0
  %v2832 = vsel %vm493, %v2503, 0
  %v2835 = vsel %vm493, %v2505, 0
  %v2838 = vsel %vm493, %v2507, 0
  %v2841 = vsel %vm493, %v2509, 0
  %2843 = vmatprep.subr.mxu0 0.0
  %2844 = vmatpush1.msra.mxu0 0.0
  %2845 = vmatprep.subr.mxu0 0.0
  %2846 = vmatpush1.msra.mxu0 0.0
  %2847 = vmatprep.subr.mxu0 0.0
  %2848 = vmatpush1.msra.mxu0 0.0
  %2849 = vmatprep.subr.mxu0 0.0
  %2850 = vmatpush1.msra.mxu0 0.0
  %2851 = vmatprep.subr.mxu0 0.0
  %2852 = vmatpush1.msra.mxu0 0.0
  %2853 = vmatprep.subr.mxu0 0.0
  %2854 = vmatpush1.msra.mxu0 0.0
  %2855 = vmatprep.subr.mxu0 0.0
  %2856 = vmatpush1.msra.mxu0 0.0
  %2857 = vmatprep.subr.mxu0 0.0
  %2858 = vmatpush1.msra.mxu0 0.0
  %2859 = vmatprep.subr.mxu0 0.0
  %2860 = vmatpush1.msra.mxu0 %v2521
  %2861 = vmatprep.subr.mxu0 0.0
  %2862 = vmatpush1.msra.mxu0 %v2520
  %2863 = vmatprep.subr.mxu0 0.0
  %2864 = vmatpush1.msra.mxu0 %v2519
  %2865 = vmatprep.subr.mxu0 0.0
  %2866 = vmatpush1.msra.mxu0 %v2518
  %2867 = vmatprep.subr.mxu0 0.0
  %2868 = vmatpush1.msra.mxu0 %v2517
  %2869 = vmatprep.subr.mxu0 0.0
  %2870 = vmatpush1.msra.mxu0 %v2516
  %2871 = vmatprep.subr.mxu0 0.0
  %2872 = vmatpush1.msra.mxu0 %v2515
  %2873 = vmatprep.subr.mxu0 0.0
  %2874 = vmatpush1.msra.mxu0 %v2514
  %2875 = vmatprep.subr.mxu0 0.0
  %2876 = vmatpush2.msra.mxu0 0.0
  %2877 = vmatprep.subr.mxu0 0.0
  %2878 = vmatpush2.msra.mxu0 0.0
  %2879 = vmatprep.subr.mxu0 0.0
  %2880 = vmatpush2.msra.mxu0 0.0
  %2881 = vmatprep.subr.mxu0 0.0
  %2882 = vmatpush2.msra.mxu0 0.0
  %2883 = vmatprep.subr.mxu0 0.0
  %2884 = vmatpush2.msra.mxu0 0.0
  %2885 = vmatprep.subr.mxu0 0.0
  %2886 = vmatpush2.msra.mxu0 0.0
  %2887 = vmatprep.subr.mxu0 0.0
  %2888 = vmatpush2.msra.mxu0 0.0
  %2889 = vmatprep.subr.mxu0 0.0
  %2890 = vmatpush2.msra.mxu0 0.0
  %2891 = vmatprep.subr.mxu0 0.0
  %2892 = vmatpush2.msra.mxu0 0.0
  %2893 = vmatprep.subr.mxu0 0.0
  %2894 = vmatpush2.msra.mxu0 0.0
  %2895 = vmatprep.subr.mxu0 0.0
  %2896 = vmatpush2.msra.mxu0 0.0
  %2897 = vmatprep.subr.mxu0 0.0
  %2898 = vmatpush2.msra.mxu0 0.0
  %2899 = vmatprep.subr.mxu0 0.0
  %2900 = vmatpush2.msra.mxu0 0.0
  %2901 = vmatprep.subr.mxu0 0.0
  %2902 = vmatpush2.msra.mxu0 0.0
  %2903 = vmatprep.subr.mxu0 0.0
  %2904 = vmatpush2.msra.mxu0 0.0
  %2905 = vmatprep.subr.mxu0 0.0
  %2906 = vmatpush2.msra.mxu0 0.0
  %2907 = vmatprep.mubr.f32.mxu0 0.0
  %2908 = vmatmul.mubr.f32.gmra.mxu0 %v2820
  %v2909 = vpop.f32.mrf.mxu0
  %v2910 = vadd.f32 %v2781, %v2909
  %v2911 = vpop.f32.mrf.mxu0
  %2912 = vmatprep.mubr.f32.mxu0 0.0
  %2913 = vmatmul.mubr.f32.gmra.mxu0 %v2823
  %v2914 = vpop.f32.mrf.mxu0
  %v2915 = vadd.f32 %v2786, %v2914
  %v2916 = vpop.f32.mrf.mxu0
  %2917 = vmatprep.mubr.f32.mxu0 0.0
  %2918 = vmatmul.mubr.f32.gmra.mxu0 %v2826
  %v2919 = vpop.f32.mrf.mxu0
  %v2920 = vadd.f32 %v2791, %v2919
  %v2921 = vpop.f32.mrf.mxu0
  %2922 = vmatprep.mubr.f32.mxu0 0.0
  %2923 = vmatmul.mubr.f32.gmra.mxu0 %v2829
  %v2924 = vpop.f32.mrf.mxu0
  %v2925 = vadd.f32 %v2796, %v2924
  %v2926 = vpop.f32.mrf.mxu0
  %2927 = vmatprep.mubr.f32.mxu0 0.0
  %2928 = vmatmul.mubr.f32.gmra.mxu0 %v2832
  %v2929 = vpop.f32.mrf.mxu0
  %v2930 = vadd.f32 %v2801, %v2929
  %v2931 = vpop.f32.mrf.mxu0
  %2932 = vmatprep.mubr.f32.mxu0 0.0
  %2933 = vmatmul.mubr.f32.gmra.mxu0 %v2835
  %v2934 = vpop.f32.mrf.mxu0
  %v2935 = vadd.f32 %v2806, %v2934
  %v2936 = vpop.f32.mrf.mxu0
  %2937 = vmatprep.mubr.f32.mxu0 0.0
  %2938 = vmatmul.mubr.f32.gmra.mxu0 %v2838
  %v2939 = vpop.f32.mrf.mxu0
  %v2940 = vadd.f32 %v2811, %v2939
  %v2941 = vpop.f32.mrf.mxu0
  %2942 = vmatprep.mubr.f32.mxu0 0.0
  %2943 = vmatmul.mubr.f32.gmra.mxu0 %v2841
  %v2944 = vpop.f32.mrf.mxu0
  %v2945 = vadd.f32 %v2816, %v2944
  %v2946 = vpop.f32.mrf.mxu0
  %2947 = vdwg.mxu0
  %v2948 = vld [vmem:[%s16] sm:$0x1]
  %v2950 = vlaneseq
  %v2951 = vshrl.u32 %v2950, 7
  %v2952 = vsub.s32 0, %v2951
  %v2953 = vrot.slane %v2948, %v2952
  %v2955 = vadd.f32 %v2910, %v2953
  %v2956 = vadd.f32 %v2915, %v2953
  %v2957 = vadd.f32 %v2920, %v2953
  %v2958 = vadd.f32 %v2925, %v2953
  %v2959 = vadd.f32 %v2930, %v2953
  %v2960 = vadd.f32 %v2935, %v2953
  %v2961 = vadd.f32 %v2940, %v2953
  %v2962 = vadd.f32 %v2945, %v2953
  %v2963 = vmax.f32 %v2955, 0.0
  %v2964 = vmax.f32 %v2956, 0.0
  %v2965 = vmax.f32 %v2957, 0.0
  %v2966 = vmax.f32 %v2958, 0.0
  %v2967 = vmax.f32 %v2959, 0.0
  %v2968 = vmax.f32 %v2960, 0.0
  %v2969 = vmax.f32 %v2961, 0.0
  %v2970 = vmax.f32 %v2962, 0.0
  %v2971 = vld [vmem:[%s2] sm:$0xff]
  %v2972 = vld [vmem:[%s2 + $0x8] sm:$0xff]
  %v2973 = vld [vmem:[%s2 + $0x10] sm:$0xff]
  %v2974 = vld [vmem:[%s2 + $0x18] sm:$0xff]
  %v2975 = vld [vmem:[%s2 + $0x20] sm:$0xff]
  %v2976 = vld [vmem:[%s2 + $0x28] sm:$0xff]
  %v2977 = vld [vmem:[%s2 + $0x30] sm:$0xff]
  %v2978 = vld [vmem:[%s2 + $0x38] sm:$0xff]
  %2979 = vxpose.xlu0.b32.start [1/16] %v2963, 128
  %2980 = vxpose.xlu0.b32.cont [2/16] %v2964, 128
  %2981 = vxpose.xlu0.b32.cont [3/16] %v2965, 128
  %2982 = vxpose.xlu0.b32.cont [4/16] %v2966, 128
  %2983 = vxpose.xlu0.b32.cont [5/16] %v2967, 128
  %2984 = vxpose.xlu0.b32.cont [6/16] %v2968, 128
  %2985 = vxpose.xlu0.b32.cont [7/16] %v2969, 128
  %2986 = vxpose.xlu0.b32.cont [8/16] %v2970, 128
  %2987 = vxpose.xlu0.b32.cont [9/16] 0.0, 128
  %2988 = vxpose.xlu0.b32.cont [10/16] 0.0, 128
  %2989 = vxpose.xlu0.b32.cont [11/16] 0.0, 128
  %2990 = vxpose.xlu0.b32.cont [12/16] 0.0, 128
  %2991 = vxpose.xlu0.b32.cont [13/16] 0.0, 128
  %2992 = vxpose.xlu0.b32.cont [14/16] 0.0, 128
  %2993 = vxpose.xlu0.b32.cont [15/16] 0.0, 128
  %2994 = vxpose.xlu0.b32.end [16/16] 0.0, 128
  %v2995 = vpop.trf.xlu0
  %v2996 = vpop.trf.xlu0
  %v2997 = vpop.trf.xlu0
  %v2998 = vpop.trf.xlu0
  %v2999 = vpop.trf.xlu0
  %v3000 = vpop.trf.xlu0
  %v3001 = vpop.trf.xlu0
  %v3002 = vpop.trf.xlu0
  %v3003 = vpop.trf.xlu0
  %v3004 = vpop.trf.xlu0
  %v3005 = vpop.trf.xlu0
  %v3006 = vpop.trf.xlu0
  %v3007 = vpop.trf.xlu0
  %v3008 = vpop.trf.xlu0
  %v3009 = vpop.trf.xlu0
  %v3010 = vpop.trf.xlu0
  %v3012 = vsel %vm493, %v2995, 0
  %3014 = vmatprep.subr.mxu0 0.0
  %3015 = vmatpush1.msra.mxu0 0.0
  %3016 = vmatprep.subr.mxu0 0.0
  %3017 = vmatpush1.msra.mxu0 0.0
  %3018 = vmatprep.subr.mxu0 0.0
  %3019 = vmatpush1.msra.mxu0 0.0
  %3020 = vmatprep.subr.mxu0 0.0
  %3021 = vmatpush1.msra.mxu0 0.0
  %3022 = vmatprep.subr.mxu0 0.0
  %3023 = vmatpush1.msra.mxu0 0.0
  %3024 = vmatprep.subr.mxu0 0.0
  %3025 = vmatpush1.msra.mxu0 0.0
  %3026 = vmatprep.subr.mxu0 0.0
  %3027 = vmatpush1.msra.mxu0 0.0
  %3028 = vmatprep.subr.mxu0 0.0
  %3029 = vmatpush1.msra.mxu0 0.0
  %3030 = vmatprep.subr.mxu0 0.0
  %3031 = vmatpush1.msra.mxu0 %v2978
  %3032 = vmatprep.subr.mxu0 0.0
  %3033 = vmatpush1.msra.mxu0 %v2977
  %3034 = vmatprep.subr.mxu0 0.0
  %3035 = vmatpush1.msra.mxu0 %v2976
  %3036 = vmatprep.subr.mxu0 0.0
  %3037 = vmatpush1.msra.mxu0 %v2975
  %3038 = vmatprep.subr.mxu0 0.0
  %3039 = vmatpush1.msra.mxu0 %v2974
  %3040 = vmatprep.subr.mxu0 0.0
  %3041 = vmatpush1.msra.mxu0 %v2973
  %3042 = vmatprep.subr.mxu0 0.0
  %3043 = vmatpush1.msra.mxu0 %v2972
  %3044 = vmatprep.subr.mxu0 0.0
  %3045 = vmatpush1.msra.mxu0 %v2971
  %3046 = vmatprep.subr.mxu0 0.0
  %3047 = vmatpush2.msra.mxu0 0.0
  %3048 = vmatprep.subr.mxu0 0.0
  %3049 = vmatpush2.msra.mxu0 0.0
  %3050 = vmatprep.subr.mxu0 0.0
  %3051 = vmatpush2.msra.mxu0 0.0
  %3052 = vmatprep.subr.mxu0 0.0
  %3053 = vmatpush2.msra.mxu0 0.0
  %3054 = vmatprep.subr.mxu0 0.0
  %3055 = vmatpush2.msra.mxu0 0.0
  %3056 = vmatprep.subr.mxu0 0.0
  %3057 = vmatpush2.msra.mxu0 0.0
  %3058 = vmatprep.subr.mxu0 0.0
  %3059 = vmatpush2.msra.mxu0 0.0
  %3060 = vmatprep.subr.mxu0 0.0
  %3061 = vmatpush2.msra.mxu0 0.0
  %3062 = vmatprep.subr.mxu0 0.0
  %3063 = vmatpush2.msra.mxu0 0.0
  %3064 = vmatprep.subr.mxu0 0.0
  %3065 = vmatpush2.msra.mxu0 0.0
  %3066 = vmatprep.subr.mxu0 0.0
  %3067 = vmatpush2.msra.mxu0 0.0
  %3068 = vmatprep.subr.mxu0 0.0
  %3069 = vmatpush2.msra.mxu0 0.0
  %3070 = vmatprep.subr.mxu0 0.0
  %3071 = vmatpush2.msra.mxu0 0.0
  %3072 = vmatprep.subr.mxu0 0.0
  %3073 = vmatpush2.msra.mxu0 0.0
  %3074 = vmatprep.subr.mxu0 0.0
  %3075 = vmatpush2.msra.mxu0 0.0
  %3076 = vmatprep.subr.mxu0 0.0
  %3077 = vmatpush2.msra.mxu0 0.0
  %3078 = vmatprep.mubr.f32.mxu0 0.0
  %3079 = vmatmul.mubr.f32.gmra.mxu0 %v3012
  %v3080 = vpop.f32.mrf.mxu0
  %v3081 = vadd.f32 0.0, %v3080
  %v3082 = vpop.f32.mrf.mxu0
  %3083 = vdwg.mxu0
  %vm3084 = vcmask 123904
  %v3085 = vsel %vm3084, %v3081, 0.0
  %v3086 = vrot.slane %v3085, 4
  %v3087 = vadd.f32 %v3085, %v3086
  %v3088 = vrot.slane %v3087, 2
  %v3089 = vadd.f32 %v3087, %v3088
  %v3090 = vrot.slane %v3089, 1
  %v3091 = vadd.f32 %v3089, %v3090
  %v3092 = vrcp.pop 2.0
  %v3093 = vmul.f32 %v3091, %v3092
  %vm3094 = vcmask 122880
  %3095 = vst.msk [vmem:[%s18] sm:$0x1] %vm3094, %v3093
  // Predicated region
  $region74: #{run.1} parent=0 // pred_check
    _
  $region75: #{run.1} parent=0 // pred_check_branch
    %3097 = sbr.rel (0) target = $region77
  $region76: #{run.1} parent=0 // pred_region
    _
  $region77: #{run.1} parent=0 // pred_fallthru
    _
  // Predicated region
  $region78: #{run.1} parent=0 // pred_check
    _
  $region79: #{run.1} parent=0 // pred_check_branch
    %3099 = sbr.rel (0) target = $region81
  $region80: #{run.1} parent=0 // pred_region
    _
  $region81: #{run.1} parent=0 // pred_fallthru
    _

</llo_original>
